<compile_context>
chip_gen: v5e
topology: v5e:2x2
jax: 0.10.0
libtpu: 0.0.40
codegen_flags: <defaults>
</compile_context>

<pallas_src>
import functools

import jax
import jax.numpy as jnp
from jax.experimental import pallas as pl
from jax.experimental.pallas import tpu as pltpu

FEATURE_SIZE = 768
H1 = 512
H2 = 256
OUT = 1
LANE = 128
OUT_PAD = LANE  # lane-dense padded width of the final matmul


def _round_up(n, m):
    return ((n + m - 1) // m) * m


def mlp_kernel(x_ref, w1_ref, b1_ref, w2_ref, b2_ref, w3_ref, b3_ref, o_ref):
    # bf16 cast of x on the VPU (in-kernel; hidden under MXU work).
    x = x_ref[...].astype(jnp.bfloat16)                               # (TM, 768)
    h1 = jnp.dot(x, w1_ref[...], preferred_element_type=jnp.float32) + b1_ref[...]
    h1 = jnp.maximum(h1, 0.0).astype(jnp.bfloat16)                    # (TM, 512)
    h2 = jnp.dot(h1, w2_ref[...], preferred_element_type=jnp.float32) + b2_ref[...]
    h2 = jnp.maximum(h2, 0.0).astype(jnp.bfloat16)                    # (TM, 256)
    y = jnp.dot(h2, w3_ref[...], preferred_element_type=jnp.float32) + b3_ref[...]
    # y is (TM, 128) f32; only column 0 is real. Repack column 0 lane-dense:
    # for each 128-row tile, an XLU transpose puts that tile's 128 outputs
    # into the lane dim of one sublane row -> unmasked 128-wide stores.
    n_blocks = o_ref.shape[0]                                         # TM // 128
    for r in range(n_blocks):
        blk = y[r * LANE:(r + 1) * LANE, :]                           # (128, 128)
        o_ref[r, :] = blk.T[0, :]                                     # (128,)


def prepare_params(params):
    """One-time (outside the forward) weight conversion: bf16 operands, padded final layer."""
    w1, b1, w2, b2, w3, b3 = params
    w3p = jnp.zeros((H2, OUT_PAD), jnp.float32).at[:, :OUT].set(w3)
    b3p = jnp.zeros((1, OUT_PAD), jnp.float32).at[:, :OUT].set(b3)
    return (
        w1.astype(jnp.bfloat16), b1.astype(jnp.float32),
        w2.astype(jnp.bfloat16), b2.astype(jnp.float32),
        w3p.astype(jnp.bfloat16), b3p.astype(jnp.float32),
    )


@functools.partial(jax.jit, static_argnames=("tm",))
def regression_model_forward(x, prepared_params, *, tm=512):
    """x: (B, 768) float32, prepared_params from prepare_params() -> (B, 1) float32."""
    w1, b1, w2, b2, w3p, b3p = prepared_params
    B = x.shape[0]
    assert tm % LANE == 0, "tm must be a multiple of 128 (lane-packed output)"

    # Batch tile: at most `tm`, at least a 128-aligned batch (for lane packing).
    TM = min(tm, _round_up(B, LANE))
    Bp = _round_up(B, TM)
    if Bp != B:
        # TODO(synk): for very large unaligned B, replace this pad with a
        # ragged last tile + in-kernel row masking to avoid copying x.
        x = jnp.pad(x, ((0, Bp - B), (0, 0)))

    grid = (Bp // TM,)

    # Weights/biases: constant index_map -> VMEM-resident across grid steps;
    # single-buffered since the block never changes.
    def const_spec(shape):
        return pl.BlockSpec(shape, lambda i: (0, 0), pipeline_mode=pl.Buffered(1))

    flops = 2 * Bp * (FEATURE_SIZE * H1 + H1 * H2 + H2 * OUT_PAD)
    bytes_accessed = (
        Bp * FEATURE_SIZE * 4                                   # x (f32)
        + (FEATURE_SIZE * H1 + H1 * H2 + H2 * OUT_PAD) * 2      # weights (bf16)
        + (H1 + H2 + OUT_PAD) * 4                               # biases (f32)
        + Bp * 4                                                # packed output (f32)
    )

    # TODO(synk): on v7x, if profiling shows only one TensorCore busy, switch
    # dimension_semantics to (pltpu.CORE_PARALLEL,) for the batch axis.
    compiler_params = pltpu.CompilerParams(
        dimension_semantics=("parallel",),
        vmem_limit_bytes=(48 * 1024 * 1024) if TM > 512 else None,
    )

    out = pl.pallas_call(
        mlp_kernel,
        out_shape=jax.ShapeDtypeStruct((Bp // LANE, LANE), jnp.float32),
        grid=grid,
        in_specs=[
            pl.BlockSpec((TM, FEATURE_SIZE), lambda i: (i, 0)),
            const_spec((FEATURE_SIZE, H1)), const_spec((1, H1)),
            const_spec((H1, H2)), const_spec((1, H2)),
            const_spec((H2, OUT_PAD)), const_spec((1, OUT_PAD)),
        ],
        out_specs=pl.BlockSpec((TM // LANE, LANE), lambda i: (i, 0)),
        compiler_params=compiler_params,
        cost_estimate=pl.CostEstimate(
            flops=flops, transcendentals=0, bytes_accessed=bytes_accessed),
    )(x, w1, b1, w2, b2, w3p, b3p)

    # Row i of the batch sits at packed position (i // 128, i % 128).
    return out.reshape(Bp, 1)[:B]


def init_params(key):
    """Deterministic init mimicking PyTorch nn.Linear defaults (uniform +/-1/sqrt(fan_in))."""
    ks = jax.random.split(key, 6)

    def linear(kw, kb, fan_in, fan_out):
        bound = 1.0 / jnp.sqrt(jnp.float32(fan_in))
        # PyTorch stores W as (out, in); we keep (in, out) for the kernel.
        w = jax.random.uniform(kw, (fan_in, fan_out), jnp.float32, -bound, bound)
        b = jax.random.uniform(kb, (1, fan_out), jnp.float32, -bound, bound)
        return w, b

    w1, b1 = linear(ks[0], ks[1], FEATURE_SIZE, H1)
    w2, b2 = linear(ks[2], ks[3], H1, H2)
    w3, b3 = linear(ks[4], ks[5], H2, OUT)
    return (w1, b1, w2, b2, w3, b3)


def reference_forward_bf16(x, params):
    """Pure-JAX reference matching the kernel's bf16-operand / f32-accum math."""
    w1, b1, w2, b2, w3, b3 = params
    bf = jnp.bfloat16
    h1 = jnp.dot(x.astype(bf), w1.astype(bf),
                 preferred_element_type=jnp.float32) + b1
    h1 = jnp.maximum(h1, 0.0).astype(bf)
    h2 = jnp.dot(h1, w2.astype(bf),
                 preferred_element_type=jnp.float32) + b2
    h2 = jnp.maximum(h2, 0.0).astype(bf)
    return jnp.dot(h2, w3.astype(bf),
                   preferred_element_type=jnp.float32) + b3


def reference_forward_f32(x, params):
    w1, b1, w2, b2, w3, b3 = params
    h1 = jnp.maximum(x @ w1 + b1, 0.0)
    h2 = jnp.maximum(h1 @ w2 + b2, 0.0)
    return h2 @ w3 + b3


if __name__ == "__main__":
    key = jax.random.PRNGKey(0)
    k_x, k_p = jax.random.split(key)
    B = 8  # small batch for the smoke test (production should batch >= 512 rows)
    x = jax.random.normal(k_x, (B, FEATURE_SIZE), jnp.float32)
    raw_params = init_params(k_p)
    params = prepare_params(raw_params)   # one-time weight conversion / padding

    out = regression_model_forward(x, params)
    out = jax.block_until_ready(out)
    assert out.shape == (B, OUT)

    ref_bf16 = reference_forward_bf16(x, raw_params)
    ref_f32 = reference_forward_f32(x, raw_params)
    assert jnp.allclose(out, ref_bf16, atol=2e-2, rtol=2e-2)
    # Sanity vs. full-f32 math (bf16 operand rounding only).
    assert jnp.allclose(out, ref_f32, atol=1e-1, rtol=1e-1)
    print("KERNEL_OK")
</pallas_src>

<mosaic_0001>
module attributes {stable_mosaic.version = 11 : i64} {
  func.func @mlp_kernel(%arg0: i32, %arg1: memref<128x768xf32, #tpu.memory_space<vmem>>, %arg2: memref<768x512xbf16, #tpu.memory_space<vmem>>, %arg3: memref<1x512xf32, #tpu.memory_space<vmem>>, %arg4: memref<512x256xbf16, #tpu.memory_space<vmem>>, %arg5: memref<1x256xf32, #tpu.memory_space<vmem>>, %arg6: memref<256x128xbf16, #tpu.memory_space<vmem>>, %arg7: memref<1x128xf32, #tpu.memory_space<vmem>>, %arg8: memref<1x128xf32, #tpu.memory_space<vmem>>) attributes {dimension_semantics = [#tpu.dimension_semantics<parallel>], iteration_bounds = array<i64: 1>, scalar_prefetch = 0 : i64, scratch_operands = 0 : i64, tpu.core_type = #tpu.core_type<tc>, window_params = [{transform_indices = @transform_0, window_bounds = array<i64: 128, 768>}, {pipeline_mode = #tpu.pipeline_mode<synchronous>, transform_indices = @transform_1, window_bounds = array<i64: 768, 512>}, {pipeline_mode = #tpu.pipeline_mode<synchronous>, transform_indices = @transform_2, window_bounds = array<i64: 1, 512>}, {pipeline_mode = #tpu.pipeline_mode<synchronous>, transform_indices = @transform_3, window_bounds = array<i64: 512, 256>}, {pipeline_mode = #tpu.pipeline_mode<synchronous>, transform_indices = @transform_4, window_bounds = array<i64: 1, 256>}, {pipeline_mode = #tpu.pipeline_mode<synchronous>, transform_indices = @transform_5, window_bounds = array<i64: 256, 128>}, {pipeline_mode = #tpu.pipeline_mode<synchronous>, transform_indices = @transform_6, window_bounds = array<i64: 1, 128>}, {transform_indices = @transform_7, window_bounds = array<i64: 1, 128>}]} {
    %c0 = arith.constant 0 : index
    %c0_0 = arith.constant 0 : index
    %0 = vector.load %arg1[%c0, %c0_0] : memref<128x768xf32, #tpu.memory_space<vmem>>, vector<128x768xf32>
    %1 = arith.truncf %0 : vector<128x768xf32> to vector<128x768xbf16>
    %c0_1 = arith.constant 0 : index
    %c0_2 = arith.constant 0 : index
    %2 = vector.load %arg2[%c0_1, %c0_2] : memref<768x512xbf16, #tpu.memory_space<vmem>>, vector<768x512xbf16>
    %cst = arith.constant dense<0.000000e+00> : vector<128x512xf32>
    %3 = tpu.matmul %1, %2, %cst {dimension_numbers = #tpu.dot_dimension_numbers<[1], [0], [0], [1], [0, 0, 1, 1], [], []>} : vector<128x768xbf16>, vector<768x512xbf16>, vector<128x512xf32> -> vector<128x512xf32>
    %c0_3 = arith.constant 0 : index
    %c0_4 = arith.constant 0 : index
    %4 = vector.load %arg3[%c0_3, %c0_4] : memref<1x512xf32, #tpu.memory_space<vmem>>, vector<1x512xf32>
    %5 = vector.broadcast %4 : vector<1x512xf32> to vector<128x512xf32>
    %6 = arith.addf %3, %5 : vector<128x512xf32>
    %cst_5 = arith.constant 0.000000e+00 : f32
    %7 = vector.broadcast %cst_5 : f32 to vector<128x512xf32>
    %8 = arith.maximumf %6, %7 : vector<128x512xf32>
    %9 = arith.truncf %8 : vector<128x512xf32> to vector<128x512xbf16>
    %c0_6 = arith.constant 0 : index
    %c0_7 = arith.constant 0 : index
    %10 = vector.load %arg4[%c0_6, %c0_7] : memref<512x256xbf16, #tpu.memory_space<vmem>>, vector<512x256xbf16>
    %cst_8 = arith.constant dense<0.000000e+00> : vector<128x256xf32>
    %11 = tpu.matmul %9, %10, %cst_8 {dimension_numbers = #tpu.dot_dimension_numbers<[1], [0], [0], [1], [0, 0, 1, 1], [], []>} : vector<128x512xbf16>, vector<512x256xbf16>, vector<128x256xf32> -> vector<128x256xf32>
    %c0_9 = arith.constant 0 : index
    %c0_10 = arith.constant 0 : index
    %12 = vector.load %arg5[%c0_9, %c0_10] : memref<1x256xf32, #tpu.memory_space<vmem>>, vector<1x256xf32>
    %13 = vector.broadcast %12 : vector<1x256xf32> to vector<128x256xf32>
    %14 = arith.addf %11, %13 : vector<128x256xf32>
    %cst_11 = arith.constant 0.000000e+00 : f32
    %15 = vector.broadcast %cst_11 : f32 to vector<128x256xf32>
    %16 = arith.maximumf %14, %15 : vector<128x256xf32>
    %17 = arith.truncf %16 : vector<128x256xf32> to vector<128x256xbf16>
    %c0_12 = arith.constant 0 : index
    %c0_13 = arith.constant 0 : index
    %18 = vector.load %arg6[%c0_12, %c0_13] : memref<256x128xbf16, #tpu.memory_space<vmem>>, vector<256x128xbf16>
    %cst_14 = arith.constant dense<0.000000e+00> : vector<128x128xf32>
    %19 = tpu.matmul %17, %18, %cst_14 {dimension_numbers = #tpu.dot_dimension_numbers<[1], [0], [0], [1], [0, 0, 1, 1], [], []>} : vector<128x256xbf16>, vector<256x128xbf16>, vector<128x128xf32> -> vector<128x128xf32>
    %c0_15 = arith.constant 0 : index
    %c0_16 = arith.constant 0 : index
    %20 = vector.load %arg7[%c0_15, %c0_16] : memref<1x128xf32, #tpu.memory_space<vmem>>, vector<1x128xf32>
    %21 = vector.broadcast %20 : vector<1x128xf32> to vector<128x128xf32>
    %22 = arith.addf %19, %21 : vector<128x128xf32>
    %23 = tpu.transpose %22, [1, 0] : vector<128x128xf32> -> vector<128x128xf32>
    %24 = vector.extract_strided_slice %23 {offsets = [0, 0], sizes = [1, 128], strides = [1, 1]} : vector<128x128xf32> to vector<1x128xf32>
    %25 = vector.shape_cast %24 : vector<1x128xf32> to vector<128xf32>
    %c0_17 = arith.constant 0 : index
    %c0_18 = arith.constant 0 : index
    %26 = vector.load %arg8[%c0_17, %c0_18] : memref<1x128xf32, #tpu.memory_space<vmem>>, vector<1x128xf32>
    %27 = vector.shape_cast %26 : vector<1x128xf32> to vector<128xf32>
    %28 = vector.shape_cast %25 : vector<128xf32> to vector<1x128xf32>
    tpu.vector_store %arg8[%c0_17, %c0_18], %28 {strides = array<i32>} : memref<1x128xf32, #tpu.memory_space<vmem>>, vector<1x128xf32>,
    return
  }
  func.func @transform_0(%arg0: i32) -> (i32, i32) {
    %c0_i32 = arith.constant 0 : i32
    %c0_i32_0 = arith.constant 0 : i32
    return %arg0, %c0_i32 : i32, i32
  }
  func.func @transform_1(%arg0: i32) -> (i32, i32) {
    %c0_i32 = arith.constant 0 : i32
    %c0_i32_0 = arith.constant 0 : i32
    %c0_i32_1 = arith.constant 0 : i32
    return %c0_i32, %c0_i32_0 : i32, i32
  }
  func.func @transform_2(%arg0: i32) -> (i32, i32) {
    %c0_i32 = arith.constant 0 : i32
    %c0_i32_0 = arith.constant 0 : i32
    %c0_i32_1 = arith.constant 0 : i32
    return %c0_i32, %c0_i32_0 : i32, i32
  }
  func.func @transform_3(%arg0: i32) -> (i32, i32) {
    %c0_i32 = arith.constant 0 : i32
    %c0_i32_0 = arith.constant 0 : i32
    %c0_i32_1 = arith.constant 0 : i32
    return %c0_i32, %c0_i32_0 : i32, i32
  }
  func.func @transform_4(%arg0: i32) -> (i32, i32) {
    %c0_i32 = arith.constant 0 : i32
    %c0_i32_0 = arith.constant 0 : i32
    %c0_i32_1 = arith.constant 0 : i32
    return %c0_i32, %c0_i32_0 : i32, i32
  }
  func.func @transform_5(%arg0: i32) -> (i32, i32) {
    %c0_i32 = arith.constant 0 : i32
    %c0_i32_0 = arith.constant 0 : i32
    %c0_i32_1 = arith.constant 0 : i32
    return %c0_i32, %c0_i32_0 : i32, i32
  }
  func.func @transform_6(%arg0: i32) -> (i32, i32) {
    %c0_i32 = arith.constant 0 : i32
    %c0_i32_0 = arith.constant 0 : i32
    %c0_i32_1 = arith.constant 0 : i32
    return %c0_i32, %c0_i32_0 : i32, i32
  }
  func.func @transform_7(%arg0: i32) -> (i32, i32) {
    %c0_i32 = arith.constant 0 : i32
    %c0_i32_0 = arith.constant 0 : i32
    return %arg0, %c0_i32 : i32, i32
  }
}

</mosaic_0001>

<llo_original>
// kernel: regression_model_forward.1
$region0: #{regression_model_forward.1}
  #allocation0 [shape = 'u32[]', space=smem, size = 0x4, offset = 0x4, fixed_abs, tag = 'smem constant byte address 0x4 - core index']
  #allocation1 [shape = 'u32[72,128]{1,0:T(1,128)}', space=vmem, size = 0x9000, scoped, tag = 'internal scratch']
  %s0 = inlined_call_operand.vmem [shape: f32[128,768], index: 0, kind: input, shape index: {}]
  %s1 = inlined_call_operand.hbm [shape: bf16[768,512], index: 1, kind: input, shape index: {}]
  %s2 = inlined_call_operand.vmem [shape: f32[1,512], index: 2, kind: input, shape index: {}]
  %s3 = inlined_call_operand.vmem [shape: bf16[512,256], index: 3, kind: input, shape index: {}]
  %s4 = inlined_call_operand.vmem [shape: f32[1,256], index: 4, kind: input, shape index: {}]
  %s5 = inlined_call_operand.vmem [shape: bf16[256,128], index: 5, kind: input, shape index: {}]
  %s6 = inlined_call_operand.vmem [shape: f32[1,128], index: 6, kind: input, shape index: {}]
  %s7 = inlined_call_operand.vmem [shape: f32[1,128], index: 7, kind: output, shape index: {}]
  %s8 = sld [smem:[#allocation0]]
  $region42: #{regression_model_forward.1} parent=0
    _
  %s10 = ssub.s32 1, %s8
  %s11 = scalar_select 0, %s10, %s8
  $region1: #{regression_model_forward.1} parent=0
    #allocation2 [shape = 'u8[786432]{0}', space=vmem, size = 0xc0000, scoped, tag = 'input window, operand 1, single buffered']
    #allocation3 [shape = 's32[1]{0}', space=sflag, size = 0x4, scoped, tag = 'scoped memory for regression_model_forward.1']
    %12 = vsyncpa [#allocation3], 0
    // Predicated region
    $region2: #{regression_model_forward.1} parent=1 // pred_check
      _
    $region3: #{regression_model_forward.1} parent=1 // pred_check_branch
      %14 = sbr.rel (0) target = $region5
    $region4: #{regression_model_forward.1} parent=1 // pred_region
      _
    $region5: #{regression_model_forward.1} parent=1 // pred_fallthru
      _
    // Predicated region
    $region6: #{regression_model_forward.1} parent=1 // pred_check
      _
    $region7: #{regression_model_forward.1} parent=1 // pred_check_branch
      %16 = sbr.rel (0) target = $region9
    $region8: #{regression_model_forward.1} parent=1 // pred_region
      %18 = vsyncadd [#allocation3], 0
      %s19 = sshll.u32 %s1, 4
      %s20 = int_to_ptr.hbm [resolvable:$true] %s19
      %s21 = sshll.u32 [#allocation2], 4
      %s22 = int_to_ptr.vmem [resolvable:$true] %s21
      %27 = dma.hbm_to_vmem [thread:$0]  %s20, 24576, %s22, [#allocation3], 256, 256, 16
    $region9: #{regression_model_forward.1} parent=1 // pred_fallthru
      _
    // Predicated region
    $region10: #{regression_model_forward.1} parent=1 // pred_check
      _
    $region11: #{regression_model_forward.1} parent=1 // pred_check_branch
      %29 = sbr.rel (0) target = $region13
    $region12: #{regression_model_forward.1} parent=1 // pred_region
      _
    $region13: #{regression_model_forward.1} parent=1 // pred_fallthru
      _
    // Predicated region
    $region14: #{regression_model_forward.1} parent=1 // pred_check
      _
    $region15: #{regression_model_forward.1} parent=1 // pred_check_branch
      %31 = sbr.rel (0) target = $region17
    $region16: #{regression_model_forward.1} parent=1 // pred_region
      _
    $region17: #{regression_model_forward.1} parent=1 // pred_fallthru
      _
    // Predicated region
    $region18: #{regression_model_forward.1} parent=1 // pred_check
      _
    $region19: #{regression_model_forward.1} parent=1 // pred_check_branch
      %33 = sbr.rel (0) target = $region21
    $region20: #{regression_model_forward.1} parent=1 // pred_region
      _
    $region21: #{regression_model_forward.1} parent=1 // pred_fallthru
      _
    // Predicated region
    $region22: #{regression_model_forward.1} parent=1 // pred_check
      _
    $region23: #{regression_model_forward.1} parent=1 // pred_check_branch
      %35 = sbr.rel (0) target = $region25
    $region24: #{regression_model_forward.1} parent=1 // pred_region
      _
    $region25: #{regression_model_forward.1} parent=1 // pred_fallthru
      _
    // Predicated region
    $region26: #{regression_model_forward.1} parent=1 // pred_check
      _
    $region27: #{regression_model_forward.1} parent=1 // pred_check_branch
      %37 = sbr.rel (0) target = $region29
    $region28: #{regression_model_forward.1} parent=1 // pred_region
      _
    $region29: #{regression_model_forward.1} parent=1 // pred_fallthru
      _
    // Predicated region
    $region30: #{regression_model_forward.1} parent=1 // pred_check
      _
    $region31: #{regression_model_forward.1} parent=1 // pred_check_branch
      %39 = sbr.rel (0) target = $region33
    $region32: #{regression_model_forward.1} parent=1 // pred_region
      %41 = dma.done [#allocation3], 24576
    $region33: #{regression_model_forward.1} parent=1 // pred_fallthru
      _
    %v42 = vld [vmem:[%s0] sm:$0xff]
    %v43 = vld [vmem:[%s0 + $0x8] sm:$0xff]
    %v44 = vld [vmem:[%s0 + $0x10] sm:$0xff]
    %v45 = vld [vmem:[%s0 + $0x18] sm:$0xff]
    %v46 = vld [vmem:[%s0 + $0x20] sm:$0xff]
    %v47 = vld [vmem:[%s0 + $0x28] sm:$0xff]
    %v48 = vld [vmem:[%s0 + $0x30] sm:$0xff]
    %v49 = vld [vmem:[%s0 + $0x38] sm:$0xff]
    %v50 = vld [vmem:[%s0 + $0x40] sm:$0xff]
    %v51 = vld [vmem:[%s0 + $0x48] sm:$0xff]
    %v52 = vld [vmem:[%s0 + $0x50] sm:$0xff]
    %v53 = vld [vmem:[%s0 + $0x58] sm:$0xff]
    %v54 = vld [vmem:[%s0 + $0x60] sm:$0xff]
    %v55 = vld [vmem:[%s0 + $0x68] sm:$0xff]
    %v56 = vld [vmem:[%s0 + $0x70] sm:$0xff]
    %v57 = vld [vmem:[%s0 + $0x78] sm:$0xff]
    %v58 = vld [vmem:[%s0 + $0x80] sm:$0xff]
    %v59 = vld [vmem:[%s0 + $0x88] sm:$0xff]
    %v60 = vld [vmem:[%s0 + $0x90] sm:$0xff]
    %v61 = vld [vmem:[%s0 + $0x98] sm:$0xff]
    %v62 = vld [vmem:[%s0 + $0xa0] sm:$0xff]
    %v63 = vld [vmem:[%s0 + $0xa8] sm:$0xff]
    %v64 = vld [vmem:[%s0 + $0xb0] sm:$0xff]
    %v65 = vld [vmem:[%s0 + $0xb8] sm:$0xff]
    %v66 = vld [vmem:[%s0 + $0xc0] sm:$0xff]
    %v67 = vld [vmem:[%s0 + $0xc8] sm:$0xff]
    %v68 = vld [vmem:[%s0 + $0xd0] sm:$0xff]
    %v69 = vld [vmem:[%s0 + $0xd8] sm:$0xff]
    %v70 = vld [vmem:[%s0 + $0xe0] sm:$0xff]
    %v71 = vld [vmem:[%s0 + $0xe8] sm:$0xff]
    %v72 = vld [vmem:[%s0 + $0xf0] sm:$0xff]
    %v73 = vld [vmem:[%s0 + $0xf8] sm:$0xff]
    %v74 = vld [vmem:[%s0 + $0x100] sm:$0xff]
    %v75 = vld [vmem:[%s0 + $0x108] sm:$0xff]
    %v76 = vld [vmem:[%s0 + $0x110] sm:$0xff]
    %v77 = vld [vmem:[%s0 + $0x118] sm:$0xff]
    %v78 = vld [vmem:[%s0 + $0x120] sm:$0xff]
    %v79 = vld [vmem:[%s0 + $0x128] sm:$0xff]
    %v80 = vld [vmem:[%s0 + $0x130] sm:$0xff]
    %v81 = vld [vmem:[%s0 + $0x138] sm:$0xff]
    %v82 = vld [vmem:[%s0 + $0x140] sm:$0xff]
    %v83 = vld [vmem:[%s0 + $0x148] sm:$0xff]
    %v84 = vld [vmem:[%s0 + $0x150] sm:$0xff]
    %v85 = vld [vmem:[%s0 + $0x158] sm:$0xff]
    %v86 = vld [vmem:[%s0 + $0x160] sm:$0xff]
    %v87 = vld [vmem:[%s0 + $0x168] sm:$0xff]
    %v88 = vld [vmem:[%s0 + $0x170] sm:$0xff]
    %v89 = vld [vmem:[%s0 + $0x178] sm:$0xff]
    %v90 = vld [vmem:[%s0 + $0x180] sm:$0xff]
    %v91 = vld [vmem:[%s0 + $0x188] sm:$0xff]
    %v92 = vld [vmem:[%s0 + $0x190] sm:$0xff]
    %v93 = vld [vmem:[%s0 + $0x198] sm:$0xff]
    %v94 = vld [vmem:[%s0 + $0x1a0] sm:$0xff]
    %v95 = vld [vmem:[%s0 + $0x1a8] sm:$0xff]
    %v96 = vld [vmem:[%s0 + $0x1b0] sm:$0xff]
    %v97 = vld [vmem:[%s0 + $0x1b8] sm:$0xff]
    %v98 = vld [vmem:[%s0 + $0x1c0] sm:$0xff]
    %v99 = vld [vmem:[%s0 + $0x1c8] sm:$0xff]
    %v100 = vld [vmem:[%s0 + $0x1d0] sm:$0xff]
    %v101 = vld [vmem:[%s0 + $0x1d8] sm:$0xff]
    %v102 = vld [vmem:[%s0 + $0x1e0] sm:$0xff]
    %v103 = vld [vmem:[%s0 + $0x1e8] sm:$0xff]
    %v104 = vld [vmem:[%s0 + $0x1f0] sm:$0xff]
    %v105 = vld [vmem:[%s0 + $0x1f8] sm:$0xff]
    %v106 = vld [vmem:[%s0 + $0x200] sm:$0xff]
    %v107 = vld [vmem:[%s0 + $0x208] sm:$0xff]
    %v108 = vld [vmem:[%s0 + $0x210] sm:$0xff]
    %v109 = vld [vmem:[%s0 + $0x218] sm:$0xff]
    %v110 = vld [vmem:[%s0 + $0x220] sm:$0xff]
    %v111 = vld [vmem:[%s0 + $0x228] sm:$0xff]
    %v112 = vld [vmem:[%s0 + $0x230] sm:$0xff]
    %v113 = vld [vmem:[%s0 + $0x238] sm:$0xff]
    %v114 = vld [vmem:[%s0 + $0x240] sm:$0xff]
    %v115 = vld [vmem:[%s0 + $0x248] sm:$0xff]
    %v116 = vld [vmem:[%s0 + $0x250] sm:$0xff]
    %v117 = vld [vmem:[%s0 + $0x258] sm:$0xff]
    %v118 = vld [vmem:[%s0 + $0x260] sm:$0xff]
    %v119 = vld [vmem:[%s0 + $0x268] sm:$0xff]
    %v120 = vld [vmem:[%s0 + $0x270] sm:$0xff]
    %v121 = vld [vmem:[%s0 + $0x278] sm:$0xff]
    %v122 = vld [vmem:[%s0 + $0x280] sm:$0xff]
    %v123 = vld [vmem:[%s0 + $0x288] sm:$0xff]
    %v124 = vld [vmem:[%s0 + $0x290] sm:$0xff]
    %v125 = vld [vmem:[%s0 + $0x298] sm:$0xff]
    %v126 = vld [vmem:[%s0 + $0x2a0] sm:$0xff]
    %v127 = vld [vmem:[%s0 + $0x2a8] sm:$0xff]
    %v128 = vld [vmem:[%s0 + $0x2b0] sm:$0xff]
    %v129 = vld [vmem:[%s0 + $0x2b8] sm:$0xff]
    %v130 = vld [vmem:[%s0 + $0x2c0] sm:$0xff]
    %v131 = vld [vmem:[%s0 + $0x2c8] sm:$0xff]
    %v132 = vld [vmem:[%s0 + $0x2d0] sm:$0xff]
    %v133 = vld [vmem:[%s0 + $0x2d8] sm:$0xff]
    %v134 = vld [vmem:[%s0 + $0x2e0] sm:$0xff]
    %v135 = vld [vmem:[%s0 + $0x2e8] sm:$0xff]
    %v136 = vld [vmem:[%s0 + $0x2f0] sm:$0xff]
    %v137 = vld [vmem:[%s0 + $0x2f8] sm:$0xff]
    %v138 = vpack.c.bf16 %v48, %v42
    %v139 = vpack.c.bf16 %v49, %v43
    %v140 = vpack.c.bf16 %v50, %v44
    %v141 = vpack.c.bf16 %v51, %v45
    %v142 = vpack.c.bf16 %v52, %v46
    %v143 = vpack.c.bf16 %v53, %v47
    %v144 = vpack.c.bf16 %v60, %v54
    %v145 = vpack.c.bf16 %v61, %v55
    %v146 = vpack.c.bf16 %v62, %v56
    %v147 = vpack.c.bf16 %v63, %v57
    %v148 = vpack.c.bf16 %v64, %v58
    %v149 = vpack.c.bf16 %v65, %v59
    %v150 = vpack.c.bf16 %v72, %v66
    %v151 = vpack.c.bf16 %v73, %v67
    %v152 = vpack.c.bf16 %v74, %v68
    %v153 = vpack.c.bf16 %v75, %v69
    %v154 = vpack.c.bf16 %v76, %v70
    %v155 = vpack.c.bf16 %v77, %v71
    %v156 = vpack.c.bf16 %v84, %v78
    %v157 = vpack.c.bf16 %v85, %v79
    %v158 = vpack.c.bf16 %v86, %v80
    %v159 = vpack.c.bf16 %v87, %v81
    %v160 = vpack.c.bf16 %v88, %v82
    %v161 = vpack.c.bf16 %v89, %v83
    %v162 = vpack.c.bf16 %v96, %v90
    %v163 = vpack.c.bf16 %v97, %v91
    %v164 = vpack.c.bf16 %v98, %v92
    %v165 = vpack.c.bf16 %v99, %v93
    %v166 = vpack.c.bf16 %v100, %v94
    %v167 = vpack.c.bf16 %v101, %v95
    %v168 = vpack.c.bf16 %v108, %v102
    %v169 = vpack.c.bf16 %v109, %v103
    %v170 = vpack.c.bf16 %v110, %v104
    %v171 = vpack.c.bf16 %v111, %v105
    %v172 = vpack.c.bf16 %v112, %v106
    %v173 = vpack.c.bf16 %v113, %v107
    %v174 = vpack.c.bf16 %v120, %v114
    %v175 = vpack.c.bf16 %v121, %v115
    %v176 = vpack.c.bf16 %v122, %v116
    %v177 = vpack.c.bf16 %v123, %v117
    %v178 = vpack.c.bf16 %v124, %v118
    %v179 = vpack.c.bf16 %v125, %v119
    %v180 = vpack.c.bf16 %v132, %v126
    %v181 = vpack.c.bf16 %v133, %v127
    %v182 = vpack.c.bf16 %v134, %v128
    %v183 = vpack.c.bf16 %v135, %v129
    %v184 = vpack.c.bf16 %v136, %v130
    %v185 = vpack.c.bf16 %v137, %v131
    %v186 = vld [vmem:[#allocation2] sm:$0xff]
    %v187 = vld [vmem:[#allocation2 + $0x8] sm:$0xff]
    %v188 = vld [vmem:[#allocation2 + $0x10] sm:$0xff]
    %v189 = vld [vmem:[#allocation2 + $0x18] sm:$0xff]
    %v190 = vld [vmem:[#allocation2 + $0x20] sm:$0xff]
    %v191 = vld [vmem:[#allocation2 + $0x28] sm:$0xff]
    %v192 = vld [vmem:[#allocation2 + $0x30] sm:$0xff]
    %v193 = vld [vmem:[#allocation2 + $0x38] sm:$0xff]
    %v194 = vld [vmem:[#allocation2 + $0x40] sm:$0xff]
    %v195 = vld [vmem:[#allocation2 + $0x48] sm:$0xff]
    %v196 = vld [vmem:[#allocation2 + $0x50] sm:$0xff]
    %v197 = vld [vmem:[#allocation2 + $0x58] sm:$0xff]
    %v198 = vld [vmem:[#allocation2 + $0x60] sm:$0xff]
    %v199 = vld [vmem:[#allocation2 + $0x68] sm:$0xff]
    %v200 = vld [vmem:[#allocation2 + $0x70] sm:$0xff]
    %v201 = vld [vmem:[#allocation2 + $0x78] sm:$0xff]
    %v202 = vld [vmem:[#allocation2 + $0x80] sm:$0xff]
    %v203 = vld [vmem:[#allocation2 + $0x88] sm:$0xff]
    %v204 = vld [vmem:[#allocation2 + $0x90] sm:$0xff]
    %v205 = vld [vmem:[#allocation2 + $0x98] sm:$0xff]
    %v206 = vld [vmem:[#allocation2 + $0xa0] sm:$0xff]
    %v207 = vld [vmem:[#allocation2 + $0xa8] sm:$0xff]
    %v208 = vld [vmem:[#allocation2 + $0xb0] sm:$0xff]
    %v209 = vld [vmem:[#allocation2 + $0xb8] sm:$0xff]
    %v210 = vld [vmem:[#allocation2 + $0xc0] sm:$0xff]
    %v211 = vld [vmem:[#allocation2 + $0xc8] sm:$0xff]
    %v212 = vld [vmem:[#allocation2 + $0xd0] sm:$0xff]
    %v213 = vld [vmem:[#allocation2 + $0xd8] sm:$0xff]
    %v214 = vld [vmem:[#allocation2 + $0xe0] sm:$0xff]
    %v215 = vld [vmem:[#allocation2 + $0xe8] sm:$0xff]
    %v216 = vld [vmem:[#allocation2 + $0xf0] sm:$0xff]
    %v217 = vld [vmem:[#allocation2 + $0xf8] sm:$0xff]
    %v218 = vld [vmem:[#allocation2 + $0x100] sm:$0xff]
    %v219 = vld [vmem:[#allocation2 + $0x108] sm:$0xff]
    %v220 = vld [vmem:[#allocation2 + $0x110] sm:$0xff]
    %v221 = vld [vmem:[#allocation2 + $0x118] sm:$0xff]
    %v222 = vld [vmem:[#allocation2 + $0x120] sm:$0xff]
    %v223 = vld [vmem:[#allocation2 + $0x128] sm:$0xff]
    %v224 = vld [vmem:[#allocation2 + $0x130] sm:$0xff]
    %v225 = vld [vmem:[#allocation2 + $0x138] sm:$0xff]
    %v226 = vld [vmem:[#allocation2 + $0x140] sm:$0xff]
    %v227 = vld [vmem:[#allocation2 + $0x148] sm:$0xff]
    %v228 = vld [vmem:[#allocation2 + $0x150] sm:$0xff]
    %v229 = vld [vmem:[#allocation2 + $0x158] sm:$0xff]
    %v230 = vld [vmem:[#allocation2 + $0x160] sm:$0xff]
    %v231 = vld [vmem:[#allocation2 + $0x168] sm:$0xff]
    %v232 = vld [vmem:[#allocation2 + $0x170] sm:$0xff]
    %v233 = vld [vmem:[#allocation2 + $0x178] sm:$0xff]
    %v234 = vld [vmem:[#allocation2 + $0x180] sm:$0xff]
    %v235 = vld [vmem:[#allocation2 + $0x188] sm:$0xff]
    %v236 = vld [vmem:[#allocation2 + $0x190] sm:$0xff]
    %v237 = vld [vmem:[#allocation2 + $0x198] sm:$0xff]
    %v238 = vld [vmem:[#allocation2 + $0x1a0] sm:$0xff]
    %v239 = vld [vmem:[#allocation2 + $0x1a8] sm:$0xff]
    %v240 = vld [vmem:[#allocation2 + $0x1b0] sm:$0xff]
    %v241 = vld [vmem:[#allocation2 + $0x1b8] sm:$0xff]
    %v242 = vld [vmem:[#allocation2 + $0x1c0] sm:$0xff]
    %v243 = vld [vmem:[#allocation2 + $0x1c8] sm:$0xff]
    %v244 = vld [vmem:[#allocation2 + $0x1d0] sm:$0xff]
    %v245 = vld [vmem:[#allocation2 + $0x1d8] sm:$0xff]
    %v246 = vld [vmem:[#allocation2 + $0x1e0] sm:$0xff]
    %v247 = vld [vmem:[#allocation2 + $0x1e8] sm:$0xff]
    %v248 = vld [vmem:[#allocation2 + $0x1f0] sm:$0xff]
    %v249 = vld [vmem:[#allocation2 + $0x1f8] sm:$0xff]
    %v250 = vld [vmem:[#allocation2 + $0x200] sm:$0xff]
    %v251 = vld [vmem:[#allocation2 + $0x208] sm:$0xff]
    %v252 = vld [vmem:[#allocation2 + $0x210] sm:$0xff]
    %v253 = vld [vmem:[#allocation2 + $0x218] sm:$0xff]
    %v254 = vld [vmem:[#allocation2 + $0x220] sm:$0xff]
    %v255 = vld [vmem:[#allocation2 + $0x228] sm:$0xff]
    %v256 = vld [vmem:[#allocation2 + $0x230] sm:$0xff]
    %v257 = vld [vmem:[#allocation2 + $0x238] sm:$0xff]
    %v258 = vld [vmem:[#allocation2 + $0x240] sm:$0xff]
    %v259 = vld [vmem:[#allocation2 + $0x248] sm:$0xff]
    %v260 = vld [vmem:[#allocation2 + $0x250] sm:$0xff]
    %v261 = vld [vmem:[#allocation2 + $0x258] sm:$0xff]
    %v262 = vld [vmem:[#allocation2 + $0x260] sm:$0xff]
    %v263 = vld [vmem:[#allocation2 + $0x268] sm:$0xff]
    %v264 = vld [vmem:[#allocation2 + $0x270] sm:$0xff]
    %v265 = vld [vmem:[#allocation2 + $0x278] sm:$0xff]
    %v266 = vld [vmem:[#allocation2 + $0x280] sm:$0xff]
    %v267 = vld [vmem:[#allocation2 + $0x288] sm:$0xff]
    %v268 = vld [vmem:[#allocation2 + $0x290] sm:$0xff]
    %v269 = vld [vmem:[#allocation2 + $0x298] sm:$0xff]
    %v270 = vld [vmem:[#allocation2 + $0x2a0] sm:$0xff]
    %v271 = vld [vmem:[#allocation2 + $0x2a8] sm:$0xff]
    %v272 = vld [vmem:[#allocation2 + $0x2b0] sm:$0xff]
    %v273 = vld [vmem:[#allocation2 + $0x2b8] sm:$0xff]
    %v274 = vld [vmem:[#allocation2 + $0x2c0] sm:$0xff]
    %v275 = vld [vmem:[#allocation2 + $0x2c8] sm:$0xff]
    %v276 = vld [vmem:[#allocation2 + $0x2d0] sm:$0xff]
    %v277 = vld [vmem:[#allocation2 + $0x2d8] sm:$0xff]
    %v278 = vld [vmem:[#allocation2 + $0x2e0] sm:$0xff]
    %v279 = vld [vmem:[#allocation2 + $0x2e8] sm:$0xff]
    %v280 = vld [vmem:[#allocation2 + $0x2f0] sm:$0xff]
    %v281 = vld [vmem:[#allocation2 + $0x2f8] sm:$0xff]
    %v282 = vld [vmem:[#allocation2 + $0x300] sm:$0xff]
    %v283 = vld [vmem:[#allocation2 + $0x308] sm:$0xff]
    %v284 = vld [vmem:[#allocation2 + $0x310] sm:$0xff]
    %v285 = vld [vmem:[#allocation2 + $0x318] sm:$0xff]
    %v286 = vld [vmem:[#allocation2 + $0x320] sm:$0xff]
    %v287 = vld [vmem:[#allocation2 + $0x328] sm:$0xff]
    %v288 = vld [vmem:[#allocation2 + $0x330] sm:$0xff]
    %v289 = vld [vmem:[#allocation2 + $0x338] sm:$0xff]
    %v290 = vld [vmem:[#allocation2 + $0x340] sm:$0xff]
    %v291 = vld [vmem:[#allocation2 + $0x348] sm:$0xff]
    %v292 = vld [vmem:[#allocation2 + $0x350] sm:$0xff]
    %v293 = vld [vmem:[#allocation2 + $0x358] sm:$0xff]
    %v294 = vld [vmem:[#allocation2 + $0x360] sm:$0xff]
    %v295 = vld [vmem:[#allocation2 + $0x368] sm:$0xff]
    %v296 = vld [vmem:[#allocation2 + $0x370] sm:$0xff]
    %v297 = vld [vmem:[#allocation2 + $0x378] sm:$0xff]
    %v298 = vld [vmem:[#allocation2 + $0x380] sm:$0xff]
    %v299 = vld [vmem:[#allocation2 + $0x388] sm:$0xff]
    %v300 = vld [vmem:[#allocation2 + $0x390] sm:$0xff]
    %v301 = vld [vmem:[#allocation2 + $0x398] sm:$0xff]
    %v302 = vld [vmem:[#allocation2 + $0x3a0] sm:$0xff]
    %v303 = vld [vmem:[#allocation2 + $0x3a8] sm:$0xff]
    %v304 = vld [vmem:[#allocation2 + $0x3b0] sm:$0xff]
    %v305 = vld [vmem:[#allocation2 + $0x3b8] sm:$0xff]
    %v306 = vld [vmem:[#allocation2 + $0x3c0] sm:$0xff]
    %v307 = vld [vmem:[#allocation2 + $0x3c8] sm:$0xff]
    %v308 = vld [vmem:[#allocation2 + $0x3d0] sm:$0xff]
    %v309 = vld [vmem:[#allocation2 + $0x3d8] sm:$0xff]
    %v310 = vld [vmem:[#allocation2 + $0x3e0] sm:$0xff]
    %v311 = vld [vmem:[#allocation2 + $0x3e8] sm:$0xff]
    %v312 = vld [vmem:[#allocation2 + $0x3f0] sm:$0xff]
    %v313 = vld [vmem:[#allocation2 + $0x3f8] sm:$0xff]
    %v314 = vld [vmem:[#allocation2 + $0x400] sm:$0xff]
    %v315 = vld [vmem:[#allocation2 + $0x408] sm:$0xff]
    %v316 = vld [vmem:[#allocation2 + $0x410] sm:$0xff]
    %v317 = vld [vmem:[#allocation2 + $0x418] sm:$0xff]
    %v318 = vld [vmem:[#allocation2 + $0x420] sm:$0xff]
    %v319 = vld [vmem:[#allocation2 + $0x428] sm:$0xff]
    %v320 = vld [vmem:[#allocation2 + $0x430] sm:$0xff]
    %v321 = vld [vmem:[#allocation2 + $0x438] sm:$0xff]
    %v322 = vld [vmem:[#allocation2 + $0x440] sm:$0xff]
    %v323 = vld [vmem:[#allocation2 + $0x448] sm:$0xff]
    %v324 = vld [vmem:[#allocation2 + $0x450] sm:$0xff]
    %v325 = vld [vmem:[#allocation2 + $0x458] sm:$0xff]
    %v326 = vld [vmem:[#allocation2 + $0x460] sm:$0xff]
    %v327 = vld [vmem:[#allocation2 + $0x468] sm:$0xff]
    %v328 = vld [vmem:[#allocation2 + $0x470] sm:$0xff]
    %v329 = vld [vmem:[#allocation2 + $0x478] sm:$0xff]
    %v330 = vld [vmem:[#allocation2 + $0x480] sm:$0xff]
    %v331 = vld [vmem:[#allocation2 + $0x488] sm:$0xff]
    %v332 = vld [vmem:[#allocation2 + $0x490] sm:$0xff]
    %v333 = vld [vmem:[#allocation2 + $0x498] sm:$0xff]
    %v334 = vld [vmem:[#allocation2 + $0x4a0] sm:$0xff]
    %v335 = vld [vmem:[#allocation2 + $0x4a8] sm:$0xff]
    %v336 = vld [vmem:[#allocation2 + $0x4b0] sm:$0xff]
    %v337 = vld [vmem:[#allocation2 + $0x4b8] sm:$0xff]
    %v338 = vld [vmem:[#allocation2 + $0x4c0] sm:$0xff]
    %v339 = vld [vmem:[#allocation2 + $0x4c8] sm:$0xff]
    %v340 = vld [vmem:[#allocation2 + $0x4d0] sm:$0xff]
    %v341 = vld [vmem:[#allocation2 + $0x4d8] sm:$0xff]
    %v342 = vld [vmem:[#allocation2 + $0x4e0] sm:$0xff]
    %v343 = vld [vmem:[#allocation2 + $0x4e8] sm:$0xff]
    %v344 = vld [vmem:[#allocation2 + $0x4f0] sm:$0xff]
    %v345 = vld [vmem:[#allocation2 + $0x4f8] sm:$0xff]
    %v346 = vld [vmem:[#allocation2 + $0x500] sm:$0xff]
    %v347 = vld [vmem:[#allocation2 + $0x508] sm:$0xff]
    %v348 = vld [vmem:[#allocation2 + $0x510] sm:$0xff]
    %v349 = vld [vmem:[#allocation2 + $0x518] sm:$0xff]
    %v350 = vld [vmem:[#allocation2 + $0x520] sm:$0xff]
    %v351 = vld [vmem:[#allocation2 + $0x528] sm:$0xff]
    %v352 = vld [vmem:[#allocation2 + $0x530] sm:$0xff]
    %v353 = vld [vmem:[#allocation2 + $0x538] sm:$0xff]
    %v354 = vld [vmem:[#allocation2 + $0x540] sm:$0xff]
    %v355 = vld [vmem:[#allocation2 + $0x548] sm:$0xff]
    %v356 = vld [vmem:[#allocation2 + $0x550] sm:$0xff]
    %v357 = vld [vmem:[#allocation2 + $0x558] sm:$0xff]
    %v358 = vld [vmem:[#allocation2 + $0x560] sm:$0xff]
    %v359 = vld [vmem:[#allocation2 + $0x568] sm:$0xff]
    %v360 = vld [vmem:[#allocation2 + $0x570] sm:$0xff]
    %v361 = vld [vmem:[#allocation2 + $0x578] sm:$0xff]
    %v362 = vld [vmem:[#allocation2 + $0x580] sm:$0xff]
    %v363 = vld [vmem:[#allocation2 + $0x588] sm:$0xff]
    %v364 = vld [vmem:[#allocation2 + $0x590] sm:$0xff]
    %v365 = vld [vmem:[#allocation2 + $0x598] sm:$0xff]
    %v366 = vld [vmem:[#allocation2 + $0x5a0] sm:$0xff]
    %v367 = vld [vmem:[#allocation2 + $0x5a8] sm:$0xff]
    %v368 = vld [vmem:[#allocation2 + $0x5b0] sm:$0xff]
    %v369 = vld [vmem:[#allocation2 + $0x5b8] sm:$0xff]
    %v370 = vld [vmem:[#allocation2 + $0x5c0] sm:$0xff]
    %v371 = vld [vmem:[#allocation2 + $0x5c8] sm:$0xff]
    %v372 = vld [vmem:[#allocation2 + $0x5d0] sm:$0xff]
    %v373 = vld [vmem:[#allocation2 + $0x5d8] sm:$0xff]
    %v374 = vld [vmem:[#allocation2 + $0x5e0] sm:$0xff]
    %v375 = vld [vmem:[#allocation2 + $0x5e8] sm:$0xff]
    %v376 = vld [vmem:[#allocation2 + $0x5f0] sm:$0xff]
    %v377 = vld [vmem:[#allocation2 + $0x5f8] sm:$0xff]
    %v378 = vld [vmem:[%s2] sm:$0xf]
    %v380 = vperm.slane %v378, 0
    %v381 = vperm.slane %v378, 1
    %v382 = vperm.slane %v378, 2
    %v383 = vperm.slane %v378, 3
    %v580 = vunpack.c.l.b16 %v186
    %v581 = vunpack.c.h.b16 %v186
    %v582 = vunpack.c.l.b16 %v187
    %v583 = vunpack.c.h.b16 %v187
    %v584 = vunpack.c.l.b16 %v188
    %v585 = vunpack.c.h.b16 %v188
    %v586 = vunpack.c.l.b16 %v189
    %v587 = vunpack.c.h.b16 %v189
    %v588 = vunpack.c.l.b16 %v190
    %v589 = vunpack.c.h.b16 %v190
    %v590 = vunpack.c.l.b16 %v191
    %v591 = vunpack.c.h.b16 %v191
    %v592 = vunpack.c.l.b16 %v192
    %v593 = vunpack.c.h.b16 %v192
    %v594 = vunpack.c.l.b16 %v193
    %v595 = vunpack.c.h.b16 %v193
    %v596 = vunpack.c.l.b16 %v194
    %v597 = vunpack.c.h.b16 %v194
    %v598 = vunpack.c.l.b16 %v195
    %v599 = vunpack.c.h.b16 %v195
    %v600 = vunpack.c.l.b16 %v196
    %v601 = vunpack.c.h.b16 %v196
    %v602 = vunpack.c.l.b16 %v197
    %v603 = vunpack.c.h.b16 %v197
    %v604 = vunpack.c.l.b16 %v198
    %v605 = vunpack.c.h.b16 %v198
    %v606 = vunpack.c.l.b16 %v199
    %v607 = vunpack.c.h.b16 %v199
    %v608 = vunpack.c.l.b16 %v200
    %v609 = vunpack.c.h.b16 %v200
    %v610 = vunpack.c.l.b16 %v201
    %v611 = vunpack.c.h.b16 %v201
    %v612 = vunpack.c.l.b16 %v202
    %v613 = vunpack.c.h.b16 %v202
    %v614 = vunpack.c.l.b16 %v203
    %v615 = vunpack.c.h.b16 %v203
    %v616 = vunpack.c.l.b16 %v204
    %v617 = vunpack.c.h.b16 %v204
    %v618 = vunpack.c.l.b16 %v205
    %v619 = vunpack.c.h.b16 %v205
    %v620 = vunpack.c.l.b16 %v206
    %v621 = vunpack.c.h.b16 %v206
    %v622 = vunpack.c.l.b16 %v207
    %v623 = vunpack.c.h.b16 %v207
    %v624 = vunpack.c.l.b16 %v208
    %v625 = vunpack.c.h.b16 %v208
    %v626 = vunpack.c.l.b16 %v209
    %v627 = vunpack.c.h.b16 %v209
    %v628 = vunpack.c.l.b16 %v210
    %v629 = vunpack.c.h.b16 %v210
    %v630 = vunpack.c.l.b16 %v211
    %v631 = vunpack.c.h.b16 %v211
    %v632 = vunpack.c.l.b16 %v212
    %v633 = vunpack.c.h.b16 %v212
    %v634 = vunpack.c.l.b16 %v213
    %v635 = vunpack.c.h.b16 %v213
    %v636 = vunpack.c.l.b16 %v214
    %v637 = vunpack.c.h.b16 %v214
    %v638 = vunpack.c.l.b16 %v215
    %v639 = vunpack.c.h.b16 %v215
    %v640 = vunpack.c.l.b16 %v216
    %v641 = vunpack.c.h.b16 %v216
    %v642 = vunpack.c.l.b16 %v217
    %v643 = vunpack.c.h.b16 %v217
    %v644 = vunpack.c.l.b16 %v218
    %v645 = vunpack.c.h.b16 %v218
    %v646 = vunpack.c.l.b16 %v219
    %v647 = vunpack.c.h.b16 %v219
    %v648 = vunpack.c.l.b16 %v220
    %v649 = vunpack.c.h.b16 %v220
    %v650 = vunpack.c.l.b16 %v221
    %v651 = vunpack.c.h.b16 %v221
    %v652 = vunpack.c.l.b16 %v222
    %v653 = vunpack.c.h.b16 %v222
    %v654 = vunpack.c.l.b16 %v223
    %v655 = vunpack.c.h.b16 %v223
    %v656 = vunpack.c.l.b16 %v224
    %v657 = vunpack.c.h.b16 %v224
    %v658 = vunpack.c.l.b16 %v225
    %v659 = vunpack.c.h.b16 %v225
    %v660 = vunpack.c.l.b16 %v226
    %v661 = vunpack.c.h.b16 %v226
    %v662 = vunpack.c.l.b16 %v227
    %v663 = vunpack.c.h.b16 %v227
    %v664 = vunpack.c.l.b16 %v228
    %v665 = vunpack.c.h.b16 %v228
    %v666 = vunpack.c.l.b16 %v229
    %v667 = vunpack.c.h.b16 %v229
    %v668 = vunpack.c.l.b16 %v230
    %v669 = vunpack.c.h.b16 %v230
    %v670 = vunpack.c.l.b16 %v231
    %v671 = vunpack.c.h.b16 %v231
    %v672 = vunpack.c.l.b16 %v232
    %v673 = vunpack.c.h.b16 %v232
    %v674 = vunpack.c.l.b16 %v233
    %v675 = vunpack.c.h.b16 %v233
    %v676 = vunpack.c.l.b16 %v234
    %v677 = vunpack.c.h.b16 %v234
    %v678 = vunpack.c.l.b16 %v235
    %v679 = vunpack.c.h.b16 %v235
    %v680 = vunpack.c.l.b16 %v236
    %v681 = vunpack.c.h.b16 %v236
    %v682 = vunpack.c.l.b16 %v237
    %v683 = vunpack.c.h.b16 %v237
    %v684 = vunpack.c.l.b16 %v238
    %v685 = vunpack.c.h.b16 %v238
    %v686 = vunpack.c.l.b16 %v239
    %v687 = vunpack.c.h.b16 %v239
    %v688 = vunpack.c.l.b16 %v240
    %v689 = vunpack.c.h.b16 %v240
    %v690 = vunpack.c.l.b16 %v241
    %v691 = vunpack.c.h.b16 %v241
    %v692 = vunpack.c.l.b16 %v242
    %v693 = vunpack.c.h.b16 %v242
    %v694 = vunpack.c.l.b16 %v243
    %v695 = vunpack.c.h.b16 %v243
    %v696 = vunpack.c.l.b16 %v244
    %v697 = vunpack.c.h.b16 %v244
    %v698 = vunpack.c.l.b16 %v245
    %v699 = vunpack.c.h.b16 %v245
    %v700 = vunpack.c.l.b16 %v246
    %v701 = vunpack.c.h.b16 %v246
    %v702 = vunpack.c.l.b16 %v247
    %v703 = vunpack.c.h.b16 %v247
    %v704 = vunpack.c.l.b16 %v248
    %v705 = vunpack.c.h.b16 %v248
    %v706 = vunpack.c.l.b16 %v249
    %v707 = vunpack.c.h.b16 %v249
    %v708 = vunpack.c.l.b16 %v250
    %v709 = vunpack.c.h.b16 %v250
    %v710 = vunpack.c.l.b16 %v251
    %v711 = vunpack.c.h.b16 %v251
    %v712 = vunpack.c.l.b16 %v252
    %v713 = vunpack.c.h.b16 %v252
    %v714 = vunpack.c.l.b16 %v253
    %v715 = vunpack.c.h.b16 %v253
    %v716 = vunpack.c.l.b16 %v254
    %v717 = vunpack.c.h.b16 %v254
    %v718 = vunpack.c.l.b16 %v255
    %v719 = vunpack.c.h.b16 %v255
    %v720 = vunpack.c.l.b16 %v256
    %v721 = vunpack.c.h.b16 %v256
    %v722 = vunpack.c.l.b16 %v257
    %v723 = vunpack.c.h.b16 %v257
    %v724 = vunpack.c.l.b16 %v258
    %v725 = vunpack.c.h.b16 %v258
    %v726 = vunpack.c.l.b16 %v259
    %v727 = vunpack.c.h.b16 %v259
    %v728 = vunpack.c.l.b16 %v260
    %v729 = vunpack.c.h.b16 %v260
    %v730 = vunpack.c.l.b16 %v261
    %v731 = vunpack.c.h.b16 %v261
    %v732 = vunpack.c.l.b16 %v262
    %v733 = vunpack.c.h.b16 %v262
    %v734 = vunpack.c.l.b16 %v263
    %v735 = vunpack.c.h.b16 %v263
    %v736 = vunpack.c.l.b16 %v264
    %v737 = vunpack.c.h.b16 %v264
    %v738 = vunpack.c.l.b16 %v265
    %v739 = vunpack.c.h.b16 %v265
    %v740 = vunpack.c.l.b16 %v266
    %v741 = vunpack.c.h.b16 %v266
    %v742 = vunpack.c.l.b16 %v267
    %v743 = vunpack.c.h.b16 %v267
    %v744 = vunpack.c.l.b16 %v268
    %v745 = vunpack.c.h.b16 %v268
    %v746 = vunpack.c.l.b16 %v269
    %v747 = vunpack.c.h.b16 %v269
    %v748 = vunpack.c.l.b16 %v270
    %v749 = vunpack.c.h.b16 %v270
    %v750 = vunpack.c.l.b16 %v271
    %v751 = vunpack.c.h.b16 %v271
    %v752 = vunpack.c.l.b16 %v272
    %v753 = vunpack.c.h.b16 %v272
    %v754 = vunpack.c.l.b16 %v273
    %v755 = vunpack.c.h.b16 %v273
    %v756 = vunpack.c.l.b16 %v274
    %v757 = vunpack.c.h.b16 %v274
    %v758 = vunpack.c.l.b16 %v275
    %v759 = vunpack.c.h.b16 %v275
    %v760 = vunpack.c.l.b16 %v276
    %v761 = vunpack.c.h.b16 %v276
    %v762 = vunpack.c.l.b16 %v277
    %v763 = vunpack.c.h.b16 %v277
    %v764 = vunpack.c.l.b16 %v278
    %v765 = vunpack.c.h.b16 %v278
    %v766 = vunpack.c.l.b16 %v279
    %v767 = vunpack.c.h.b16 %v279
    %v768 = vunpack.c.l.b16 %v280
    %v769 = vunpack.c.h.b16 %v280
    %v770 = vunpack.c.l.b16 %v281
    %v771 = vunpack.c.h.b16 %v281
    %v772 = vunpack.c.l.b16 %v282
    %v773 = vunpack.c.h.b16 %v282
    %v774 = vunpack.c.l.b16 %v283
    %v775 = vunpack.c.h.b16 %v283
    %v776 = vunpack.c.l.b16 %v284
    %v777 = vunpack.c.h.b16 %v284
    %v778 = vunpack.c.l.b16 %v285
    %v779 = vunpack.c.h.b16 %v285
    %v780 = vunpack.c.l.b16 %v286
    %v781 = vunpack.c.h.b16 %v286
    %v782 = vunpack.c.l.b16 %v287
    %v783 = vunpack.c.h.b16 %v287
    %v784 = vunpack.c.l.b16 %v288
    %v785 = vunpack.c.h.b16 %v288
    %v786 = vunpack.c.l.b16 %v289
    %v787 = vunpack.c.h.b16 %v289
    %v788 = vunpack.c.l.b16 %v290
    %v789 = vunpack.c.h.b16 %v290
    %v790 = vunpack.c.l.b16 %v291
    %v791 = vunpack.c.h.b16 %v291
    %v792 = vunpack.c.l.b16 %v292
    %v793 = vunpack.c.h.b16 %v292
    %v794 = vunpack.c.l.b16 %v293
    %v795 = vunpack.c.h.b16 %v293
    %v796 = vunpack.c.l.b16 %v294
    %v797 = vunpack.c.h.b16 %v294
    %v798 = vunpack.c.l.b16 %v295
    %v799 = vunpack.c.h.b16 %v295
    %v800 = vunpack.c.l.b16 %v296
    %v801 = vunpack.c.h.b16 %v296
    %v802 = vunpack.c.l.b16 %v297
    %v803 = vunpack.c.h.b16 %v297
    %v804 = vunpack.c.l.b16 %v298
    %v805 = vunpack.c.h.b16 %v298
    %v806 = vunpack.c.l.b16 %v299
    %v807 = vunpack.c.h.b16 %v299
    %v808 = vunpack.c.l.b16 %v300
    %v809 = vunpack.c.h.b16 %v300
    %v810 = vunpack.c.l.b16 %v301
    %v811 = vunpack.c.h.b16 %v301
    %v812 = vunpack.c.l.b16 %v302
    %v813 = vunpack.c.h.b16 %v302
    %v814 = vunpack.c.l.b16 %v303
    %v815 = vunpack.c.h.b16 %v303
    %v816 = vunpack.c.l.b16 %v304
    %v817 = vunpack.c.h.b16 %v304
    %v818 = vunpack.c.l.b16 %v305
    %v819 = vunpack.c.h.b16 %v305
    %v820 = vunpack.c.l.b16 %v306
    %v821 = vunpack.c.h.b16 %v306
    %v822 = vunpack.c.l.b16 %v307
    %v823 = vunpack.c.h.b16 %v307
    %v824 = vunpack.c.l.b16 %v308
    %v825 = vunpack.c.h.b16 %v308
    %v826 = vunpack.c.l.b16 %v309
    %v827 = vunpack.c.h.b16 %v309
    %v828 = vunpack.c.l.b16 %v310
    %v829 = vunpack.c.h.b16 %v310
    %v830 = vunpack.c.l.b16 %v311
    %v831 = vunpack.c.h.b16 %v311
    %v832 = vunpack.c.l.b16 %v312
    %v833 = vunpack.c.h.b16 %v312
    %v834 = vunpack.c.l.b16 %v313
    %v835 = vunpack.c.h.b16 %v313
    %v836 = vunpack.c.l.b16 %v314
    %v837 = vunpack.c.h.b16 %v314
    %v838 = vunpack.c.l.b16 %v315
    %v839 = vunpack.c.h.b16 %v315
    %v840 = vunpack.c.l.b16 %v316
    %v841 = vunpack.c.h.b16 %v316
    %v842 = vunpack.c.l.b16 %v317
    %v843 = vunpack.c.h.b16 %v317
    %v844 = vunpack.c.l.b16 %v318
    %v845 = vunpack.c.h.b16 %v318
    %v846 = vunpack.c.l.b16 %v319
    %v847 = vunpack.c.h.b16 %v319
    %v848 = vunpack.c.l.b16 %v320
    %v849 = vunpack.c.h.b16 %v320
    %v850 = vunpack.c.l.b16 %v321
    %v851 = vunpack.c.h.b16 %v321
    %v852 = vunpack.c.l.b16 %v322
    %v853 = vunpack.c.h.b16 %v322
    %v854 = vunpack.c.l.b16 %v323
    %v855 = vunpack.c.h.b16 %v323
    %v856 = vunpack.c.l.b16 %v324
    %v857 = vunpack.c.h.b16 %v324
    %v858 = vunpack.c.l.b16 %v325
    %v859 = vunpack.c.h.b16 %v325
    %v860 = vunpack.c.l.b16 %v326
    %v861 = vunpack.c.h.b16 %v326
    %v862 = vunpack.c.l.b16 %v327
    %v863 = vunpack.c.h.b16 %v327
    %v864 = vunpack.c.l.b16 %v328
    %v865 = vunpack.c.h.b16 %v328
    %v866 = vunpack.c.l.b16 %v329
    %v867 = vunpack.c.h.b16 %v329
    %v868 = vunpack.c.l.b16 %v330
    %v869 = vunpack.c.h.b16 %v330
    %v870 = vunpack.c.l.b16 %v331
    %v871 = vunpack.c.h.b16 %v331
    %v872 = vunpack.c.l.b16 %v332
    %v873 = vunpack.c.h.b16 %v332
    %v874 = vunpack.c.l.b16 %v333
    %v875 = vunpack.c.h.b16 %v333
    %v876 = vunpack.c.l.b16 %v334
    %v877 = vunpack.c.h.b16 %v334
    %v878 = vunpack.c.l.b16 %v335
    %v879 = vunpack.c.h.b16 %v335
    %v880 = vunpack.c.l.b16 %v336
    %v881 = vunpack.c.h.b16 %v336
    %v882 = vunpack.c.l.b16 %v337
    %v883 = vunpack.c.h.b16 %v337
    %v884 = vunpack.c.l.b16 %v338
    %v885 = vunpack.c.h.b16 %v338
    %v886 = vunpack.c.l.b16 %v339
    %v887 = vunpack.c.h.b16 %v339
    %v888 = vunpack.c.l.b16 %v340
    %v889 = vunpack.c.h.b16 %v340
    %v890 = vunpack.c.l.b16 %v341
    %v891 = vunpack.c.h.b16 %v341
    %v892 = vunpack.c.l.b16 %v342
    %v893 = vunpack.c.h.b16 %v342
    %v894 = vunpack.c.l.b16 %v343
    %v895 = vunpack.c.h.b16 %v343
    %v896 = vunpack.c.l.b16 %v344
    %v897 = vunpack.c.h.b16 %v344
    %v898 = vunpack.c.l.b16 %v345
    %v899 = vunpack.c.h.b16 %v345
    %v900 = vunpack.c.l.b16 %v346
    %v901 = vunpack.c.h.b16 %v346
    %v902 = vunpack.c.l.b16 %v347
    %v903 = vunpack.c.h.b16 %v347
    %v904 = vunpack.c.l.b16 %v348
    %v905 = vunpack.c.h.b16 %v348
    %v906 = vunpack.c.l.b16 %v349
    %v907 = vunpack.c.h.b16 %v349
    %v908 = vunpack.c.l.b16 %v350
    %v909 = vunpack.c.h.b16 %v350
    %v910 = vunpack.c.l.b16 %v351
    %v911 = vunpack.c.h.b16 %v351
    %v912 = vunpack.c.l.b16 %v352
    %v913 = vunpack.c.h.b16 %v352
    %v914 = vunpack.c.l.b16 %v353
    %v915 = vunpack.c.h.b16 %v353
    %v916 = vunpack.c.l.b16 %v354
    %v917 = vunpack.c.h.b16 %v354
    %v918 = vunpack.c.l.b16 %v355
    %v919 = vunpack.c.h.b16 %v355
    %v920 = vunpack.c.l.b16 %v356
    %v921 = vunpack.c.h.b16 %v356
    %v922 = vunpack.c.l.b16 %v357
    %v923 = vunpack.c.h.b16 %v357
    %v924 = vunpack.c.l.b16 %v358
    %v925 = vunpack.c.h.b16 %v358
    %v926 = vunpack.c.l.b16 %v359
    %v927 = vunpack.c.h.b16 %v359
    %v928 = vunpack.c.l.b16 %v360
    %v929 = vunpack.c.h.b16 %v360
    %v930 = vunpack.c.l.b16 %v361
    %v931 = vunpack.c.h.b16 %v361
    %v932 = vunpack.c.l.b16 %v362
    %v933 = vunpack.c.h.b16 %v362
    %v934 = vunpack.c.l.b16 %v363
    %v935 = vunpack.c.h.b16 %v363
    %v936 = vunpack.c.l.b16 %v364
    %v937 = vunpack.c.h.b16 %v364
    %v938 = vunpack.c.l.b16 %v365
    %v939 = vunpack.c.h.b16 %v365
    %v940 = vunpack.c.l.b16 %v366
    %v941 = vunpack.c.h.b16 %v366
    %v942 = vunpack.c.l.b16 %v367
    %v943 = vunpack.c.h.b16 %v367
    %v944 = vunpack.c.l.b16 %v368
    %v945 = vunpack.c.h.b16 %v368
    %v946 = vunpack.c.l.b16 %v369
    %v947 = vunpack.c.h.b16 %v369
    %v948 = vunpack.c.l.b16 %v370
    %v949 = vunpack.c.h.b16 %v370
    %v950 = vunpack.c.l.b16 %v371
    %v951 = vunpack.c.h.b16 %v371
    %v952 = vunpack.c.l.b16 %v372
    %v953 = vunpack.c.h.b16 %v372
    %v954 = vunpack.c.l.b16 %v373
    %v955 = vunpack.c.h.b16 %v373
    %v956 = vunpack.c.l.b16 %v374
    %v957 = vunpack.c.h.b16 %v374
    %v958 = vunpack.c.l.b16 %v375
    %v959 = vunpack.c.h.b16 %v375
    %v960 = vunpack.c.l.b16 %v376
    %v961 = vunpack.c.h.b16 %v376
    %v962 = vunpack.c.l.b16 %v377
    %v963 = vunpack.c.h.b16 %v377
    %v964 = vpack.c.b16 %v584, %v580
    %v965 = vpack.c.b16 %v585, %v581
    %v966 = vpack.c.b16 %v586, %v582
    %v967 = vpack.c.b16 %v587, %v583
    %v968 = vpack.c.b16 %v592, %v588
    %v969 = vpack.c.b16 %v593, %v589
    %v970 = vpack.c.b16 %v594, %v590
    %v971 = vpack.c.b16 %v595, %v591
    %v972 = vpack.c.b16 %v600, %v596
    %v973 = vpack.c.b16 %v601, %v597
    %v974 = vpack.c.b16 %v602, %v598
    %v975 = vpack.c.b16 %v603, %v599
    %v976 = vpack.c.b16 %v608, %v604
    %v977 = vpack.c.b16 %v609, %v605
    %v978 = vpack.c.b16 %v610, %v606
    %v979 = vpack.c.b16 %v611, %v607
    %v980 = vpack.c.b16 %v616, %v612
    %v981 = vpack.c.b16 %v617, %v613
    %v982 = vpack.c.b16 %v618, %v614
    %v983 = vpack.c.b16 %v619, %v615
    %v984 = vpack.c.b16 %v624, %v620
    %v985 = vpack.c.b16 %v625, %v621
    %v986 = vpack.c.b16 %v626, %v622
    %v987 = vpack.c.b16 %v627, %v623
    %v988 = vpack.c.b16 %v632, %v628
    %v989 = vpack.c.b16 %v633, %v629
    %v990 = vpack.c.b16 %v634, %v630
    %v991 = vpack.c.b16 %v635, %v631
    %v992 = vpack.c.b16 %v640, %v636
    %v993 = vpack.c.b16 %v641, %v637
    %v994 = vpack.c.b16 %v642, %v638
    %v995 = vpack.c.b16 %v643, %v639
    %v996 = vpack.c.b16 %v648, %v644
    %v997 = vpack.c.b16 %v649, %v645
    %v998 = vpack.c.b16 %v650, %v646
    %v999 = vpack.c.b16 %v651, %v647
    %v1000 = vpack.c.b16 %v656, %v652
    %v1001 = vpack.c.b16 %v657, %v653
    %v1002 = vpack.c.b16 %v658, %v654
    %v1003 = vpack.c.b16 %v659, %v655
    %v1004 = vpack.c.b16 %v664, %v660
    %v1005 = vpack.c.b16 %v665, %v661
    %v1006 = vpack.c.b16 %v666, %v662
    %v1007 = vpack.c.b16 %v667, %v663
    %v1008 = vpack.c.b16 %v672, %v668
    %v1009 = vpack.c.b16 %v673, %v669
    %v1010 = vpack.c.b16 %v674, %v670
    %v1011 = vpack.c.b16 %v675, %v671
    %v1012 = vpack.c.b16 %v680, %v676
    %v1013 = vpack.c.b16 %v681, %v677
    %v1014 = vpack.c.b16 %v682, %v678
    %v1015 = vpack.c.b16 %v683, %v679
    %v1016 = vpack.c.b16 %v688, %v684
    %v1017 = vpack.c.b16 %v689, %v685
    %v1018 = vpack.c.b16 %v690, %v686
    %v1019 = vpack.c.b16 %v691, %v687
    %v1020 = vpack.c.b16 %v696, %v692
    %v1021 = vpack.c.b16 %v697, %v693
    %v1022 = vpack.c.b16 %v698, %v694
    %v1023 = vpack.c.b16 %v699, %v695
    %v1024 = vpack.c.b16 %v704, %v700
    %v1025 = vpack.c.b16 %v705, %v701
    %v1026 = vpack.c.b16 %v706, %v702
    %v1027 = vpack.c.b16 %v707, %v703
    %v1028 = vpack.c.b16 %v712, %v708
    %v1029 = vpack.c.b16 %v713, %v709
    %v1030 = vpack.c.b16 %v714, %v710
    %v1031 = vpack.c.b16 %v715, %v711
    %v1032 = vpack.c.b16 %v720, %v716
    %v1033 = vpack.c.b16 %v721, %v717
    %v1034 = vpack.c.b16 %v722, %v718
    %v1035 = vpack.c.b16 %v723, %v719
    %v1036 = vpack.c.b16 %v728, %v724
    %v1037 = vpack.c.b16 %v729, %v725
    %v1038 = vpack.c.b16 %v730, %v726
    %v1039 = vpack.c.b16 %v731, %v727
    %v1040 = vpack.c.b16 %v736, %v732
    %v1041 = vpack.c.b16 %v737, %v733
    %v1042 = vpack.c.b16 %v738, %v734
    %v1043 = vpack.c.b16 %v739, %v735
    %v1044 = vpack.c.b16 %v744, %v740
    %v1045 = vpack.c.b16 %v745, %v741
    %v1046 = vpack.c.b16 %v746, %v742
    %v1047 = vpack.c.b16 %v747, %v743
    %v1048 = vpack.c.b16 %v752, %v748
    %v1049 = vpack.c.b16 %v753, %v749
    %v1050 = vpack.c.b16 %v754, %v750
    %v1051 = vpack.c.b16 %v755, %v751
    %v1052 = vpack.c.b16 %v760, %v756
    %v1053 = vpack.c.b16 %v761, %v757
    %v1054 = vpack.c.b16 %v762, %v758
    %v1055 = vpack.c.b16 %v763, %v759
    %v1056 = vpack.c.b16 %v768, %v764
    %v1057 = vpack.c.b16 %v769, %v765
    %v1058 = vpack.c.b16 %v770, %v766
    %v1059 = vpack.c.b16 %v771, %v767
    %v1060 = vpack.c.b16 %v776, %v772
    %v1061 = vpack.c.b16 %v777, %v773
    %v1062 = vpack.c.b16 %v778, %v774
    %v1063 = vpack.c.b16 %v779, %v775
    %v1064 = vpack.c.b16 %v784, %v780
    %v1065 = vpack.c.b16 %v785, %v781
    %v1066 = vpack.c.b16 %v786, %v782
    %v1067 = vpack.c.b16 %v787, %v783
    %v1068 = vpack.c.b16 %v792, %v788
    %v1069 = vpack.c.b16 %v793, %v789
    %v1070 = vpack.c.b16 %v794, %v790
    %v1071 = vpack.c.b16 %v795, %v791
    %v1072 = vpack.c.b16 %v800, %v796
    %v1073 = vpack.c.b16 %v801, %v797
    %v1074 = vpack.c.b16 %v802, %v798
    %v1075 = vpack.c.b16 %v803, %v799
    %v1076 = vpack.c.b16 %v808, %v804
    %v1077 = vpack.c.b16 %v809, %v805
    %v1078 = vpack.c.b16 %v810, %v806
    %v1079 = vpack.c.b16 %v811, %v807
    %v1080 = vpack.c.b16 %v816, %v812
    %v1081 = vpack.c.b16 %v817, %v813
    %v1082 = vpack.c.b16 %v818, %v814
    %v1083 = vpack.c.b16 %v819, %v815
    %v1084 = vpack.c.b16 %v824, %v820
    %v1085 = vpack.c.b16 %v825, %v821
    %v1086 = vpack.c.b16 %v826, %v822
    %v1087 = vpack.c.b16 %v827, %v823
    %v1088 = vpack.c.b16 %v832, %v828
    %v1089 = vpack.c.b16 %v833, %v829
    %v1090 = vpack.c.b16 %v834, %v830
    %v1091 = vpack.c.b16 %v835, %v831
    %v1092 = vpack.c.b16 %v840, %v836
    %v1093 = vpack.c.b16 %v841, %v837
    %v1094 = vpack.c.b16 %v842, %v838
    %v1095 = vpack.c.b16 %v843, %v839
    %v1096 = vpack.c.b16 %v848, %v844
    %v1097 = vpack.c.b16 %v849, %v845
    %v1098 = vpack.c.b16 %v850, %v846
    %v1099 = vpack.c.b16 %v851, %v847
    %v1100 = vpack.c.b16 %v856, %v852
    %v1101 = vpack.c.b16 %v857, %v853
    %v1102 = vpack.c.b16 %v858, %v854
    %v1103 = vpack.c.b16 %v859, %v855
    %v1104 = vpack.c.b16 %v864, %v860
    %v1105 = vpack.c.b16 %v865, %v861
    %v1106 = vpack.c.b16 %v866, %v862
    %v1107 = vpack.c.b16 %v867, %v863
    %v1108 = vpack.c.b16 %v872, %v868
    %v1109 = vpack.c.b16 %v873, %v869
    %v1110 = vpack.c.b16 %v874, %v870
    %v1111 = vpack.c.b16 %v875, %v871
    %v1112 = vpack.c.b16 %v880, %v876
    %v1113 = vpack.c.b16 %v881, %v877
    %v1114 = vpack.c.b16 %v882, %v878
    %v1115 = vpack.c.b16 %v883, %v879
    %v1116 = vpack.c.b16 %v888, %v884
    %v1117 = vpack.c.b16 %v889, %v885
    %v1118 = vpack.c.b16 %v890, %v886
    %v1119 = vpack.c.b16 %v891, %v887
    %v1120 = vpack.c.b16 %v896, %v892
    %v1121 = vpack.c.b16 %v897, %v893
    %v1122 = vpack.c.b16 %v898, %v894
    %v1123 = vpack.c.b16 %v899, %v895
    %v1124 = vpack.c.b16 %v904, %v900
    %v1125 = vpack.c.b16 %v905, %v901
    %v1126 = vpack.c.b16 %v906, %v902
    %v1127 = vpack.c.b16 %v907, %v903
    %v1128 = vpack.c.b16 %v912, %v908
    %v1129 = vpack.c.b16 %v913, %v909
    %v1130 = vpack.c.b16 %v914, %v910
    %v1131 = vpack.c.b16 %v915, %v911
    %v1132 = vpack.c.b16 %v920, %v916
    %v1133 = vpack.c.b16 %v921, %v917
    %v1134 = vpack.c.b16 %v922, %v918
    %v1135 = vpack.c.b16 %v923, %v919
    %v1136 = vpack.c.b16 %v928, %v924
    %v1137 = vpack.c.b16 %v929, %v925
    %v1138 = vpack.c.b16 %v930, %v926
    %v1139 = vpack.c.b16 %v931, %v927
    %v1140 = vpack.c.b16 %v936, %v932
    %v1141 = vpack.c.b16 %v937, %v933
    %v1142 = vpack.c.b16 %v938, %v934
    %v1143 = vpack.c.b16 %v939, %v935
    %v1144 = vpack.c.b16 %v944, %v940
    %v1145 = vpack.c.b16 %v945, %v941
    %v1146 = vpack.c.b16 %v946, %v942
    %v1147 = vpack.c.b16 %v947, %v943
    %v1148 = vpack.c.b16 %v952, %v948
    %v1149 = vpack.c.b16 %v953, %v949
    %v1150 = vpack.c.b16 %v954, %v950
    %v1151 = vpack.c.b16 %v955, %v951
    %v1152 = vpack.c.b16 %v960, %v956
    %v1153 = vpack.c.b16 %v961, %v957
    %v1154 = vpack.c.b16 %v962, %v958
    %v1155 = vpack.c.b16 %v963, %v959
    %1348 = vmatpush.bf16.msra.mxu0 %v992
    %1349 = vmatpush.bf16.msra.mxu0 %v988
    %1350 = vmatpush.bf16.msra.mxu0 %v984
    %1351 = vmatpush.bf16.msra.mxu0 %v980
    %1352 = vmatpush.bf16.msra.mxu0 %v976
    %1353 = vmatpush.bf16.msra.mxu0 %v972
    %1354 = vmatpush.bf16.msra.mxu0 %v968
    %1355 = vmatpush.bf16.msra.mxu0 %v964
    %1356 = vmatmul.bf16.gmra.mxu0 %v138
    %v1357 = vpop.f32.mrf.mxu0
    %v1358 = vadd.f32 %v380, %v1357
    %v1359 = vpop.f32.mrf.mxu0
    %v1360 = vadd.f32 %v380, %v1359
    %1361 = vmatmul.bf16.gmra.mxu0 %v144
    %v1362 = vpop.f32.mrf.mxu0
    %v1363 = vadd.f32 %v380, %v1362
    %v1364 = vpop.f32.mrf.mxu0
    %v1365 = vadd.f32 %v380, %v1364
    %1366 = vmatmul.bf16.gmra.mxu0 %v150
    %v1367 = vpop.f32.mrf.mxu0
    %v1368 = vadd.f32 %v380, %v1367
    %v1369 = vpop.f32.mrf.mxu0
    %v1370 = vadd.f32 %v380, %v1369
    %1371 = vmatmul.bf16.gmra.mxu0 %v156
    %v1372 = vpop.f32.mrf.mxu0
    %v1373 = vadd.f32 %v380, %v1372
    %v1374 = vpop.f32.mrf.mxu0
    %v1375 = vadd.f32 %v380, %v1374
    %1376 = vmatmul.bf16.gmra.mxu0 %v162
    %v1377 = vpop.f32.mrf.mxu0
    %v1378 = vadd.f32 %v380, %v1377
    %v1379 = vpop.f32.mrf.mxu0
    %v1380 = vadd.f32 %v380, %v1379
    %1381 = vmatmul.bf16.gmra.mxu0 %v168
    %v1382 = vpop.f32.mrf.mxu0
    %v1383 = vadd.f32 %v380, %v1382
    %v1384 = vpop.f32.mrf.mxu0
    %v1385 = vadd.f32 %v380, %v1384
    %1386 = vmatmul.bf16.gmra.mxu0 %v174
    %v1387 = vpop.f32.mrf.mxu0
    %v1388 = vadd.f32 %v380, %v1387
    %v1389 = vpop.f32.mrf.mxu0
    %v1390 = vadd.f32 %v380, %v1389
    %1391 = vmatmul.bf16.gmra.mxu0 %v180
    %v1392 = vpop.f32.mrf.mxu0
    %v1393 = vadd.f32 %v380, %v1392
    %v1394 = vpop.f32.mrf.mxu0
    %v1395 = vadd.f32 %v380, %v1394
    %1396 = vdwg.mxu0
    %1397 = vmatpush.bf16.msra.mxu0 %v1024
    %1398 = vmatpush.bf16.msra.mxu0 %v1020
    %1399 = vmatpush.bf16.msra.mxu0 %v1016
    %1400 = vmatpush.bf16.msra.mxu0 %v1012
    %1401 = vmatpush.bf16.msra.mxu0 %v1008
    %1402 = vmatpush.bf16.msra.mxu0 %v1004
    %1403 = vmatpush.bf16.msra.mxu0 %v1000
    %1404 = vmatpush.bf16.msra.mxu0 %v996
    %1405 = vmatmul.bf16.gmra.mxu0 %v139
    %v1406 = vpop.f32.mrf.mxu0
    %v1407 = vadd.f32 %v1358, %v1406
    %v1408 = vpop.f32.mrf.mxu0
    %v1409 = vadd.f32 %v1360, %v1408
    %1410 = vmatmul.bf16.gmra.mxu0 %v145
    %v1411 = vpop.f32.mrf.mxu0
    %v1412 = vadd.f32 %v1363, %v1411
    %v1413 = vpop.f32.mrf.mxu0
    %v1414 = vadd.f32 %v1365, %v1413
    %1415 = vmatmul.bf16.gmra.mxu0 %v151
    %v1416 = vpop.f32.mrf.mxu0
    %v1417 = vadd.f32 %v1368, %v1416
    %v1418 = vpop.f32.mrf.mxu0
    %v1419 = vadd.f32 %v1370, %v1418
    %1420 = vmatmul.bf16.gmra.mxu0 %v157
    %v1421 = vpop.f32.mrf.mxu0
    %v1422 = vadd.f32 %v1373, %v1421
    %v1423 = vpop.f32.mrf.mxu0
    %v1424 = vadd.f32 %v1375, %v1423
    %1425 = vmatmul.bf16.gmra.mxu0 %v163
    %v1426 = vpop.f32.mrf.mxu0
    %v1427 = vadd.f32 %v1378, %v1426
    %v1428 = vpop.f32.mrf.mxu0
    %v1429 = vadd.f32 %v1380, %v1428
    %1430 = vmatmul.bf16.gmra.mxu0 %v169
    %v1431 = vpop.f32.mrf.mxu0
    %v1432 = vadd.f32 %v1383, %v1431
    %v1433 = vpop.f32.mrf.mxu0
    %v1434 = vadd.f32 %v1385, %v1433
    %1435 = vmatmul.bf16.gmra.mxu0 %v175
    %v1436 = vpop.f32.mrf.mxu0
    %v1437 = vadd.f32 %v1388, %v1436
    %v1438 = vpop.f32.mrf.mxu0
    %v1439 = vadd.f32 %v1390, %v1438
    %1440 = vmatmul.bf16.gmra.mxu0 %v181
    %v1441 = vpop.f32.mrf.mxu0
    %v1442 = vadd.f32 %v1393, %v1441
    %v1443 = vpop.f32.mrf.mxu0
    %v1444 = vadd.f32 %v1395, %v1443
    %1445 = vdwg.mxu0
    %1446 = vmatpush.bf16.msra.mxu0 %v1056
    %1447 = vmatpush.bf16.msra.mxu0 %v1052
    %1448 = vmatpush.bf16.msra.mxu0 %v1048
    %1449 = vmatpush.bf16.msra.mxu0 %v1044
    %1450 = vmatpush.bf16.msra.mxu0 %v1040
    %1451 = vmatpush.bf16.msra.mxu0 %v1036
    %1452 = vmatpush.bf16.msra.mxu0 %v1032
    %1453 = vmatpush.bf16.msra.mxu0 %v1028
    %1454 = vmatmul.bf16.gmra.mxu0 %v140
    %v1455 = vpop.f32.mrf.mxu0
    %v1456 = vadd.f32 %v1407, %v1455
    %v1457 = vpop.f32.mrf.mxu0
    %v1458 = vadd.f32 %v1409, %v1457
    %1459 = vmatmul.bf16.gmra.mxu0 %v146
    %v1460 = vpop.f32.mrf.mxu0
    %v1461 = vadd.f32 %v1412, %v1460
    %v1462 = vpop.f32.mrf.mxu0
    %v1463 = vadd.f32 %v1414, %v1462
    %1464 = vmatmul.bf16.gmra.mxu0 %v152
    %v1465 = vpop.f32.mrf.mxu0
    %v1466 = vadd.f32 %v1417, %v1465
    %v1467 = vpop.f32.mrf.mxu0
    %v1468 = vadd.f32 %v1419, %v1467
    %1469 = vmatmul.bf16.gmra.mxu0 %v158
    %v1470 = vpop.f32.mrf.mxu0
    %v1471 = vadd.f32 %v1422, %v1470
    %v1472 = vpop.f32.mrf.mxu0
    %v1473 = vadd.f32 %v1424, %v1472
    %1474 = vmatmul.bf16.gmra.mxu0 %v164
    %v1475 = vpop.f32.mrf.mxu0
    %v1476 = vadd.f32 %v1427, %v1475
    %v1477 = vpop.f32.mrf.mxu0
    %v1478 = vadd.f32 %v1429, %v1477
    %1479 = vmatmul.bf16.gmra.mxu0 %v170
    %v1480 = vpop.f32.mrf.mxu0
    %v1481 = vadd.f32 %v1432, %v1480
    %v1482 = vpop.f32.mrf.mxu0
    %v1483 = vadd.f32 %v1434, %v1482
    %1484 = vmatmul.bf16.gmra.mxu0 %v176
    %v1485 = vpop.f32.mrf.mxu0
    %v1486 = vadd.f32 %v1437, %v1485
    %v1487 = vpop.f32.mrf.mxu0
    %v1488 = vadd.f32 %v1439, %v1487
    %1489 = vmatmul.bf16.gmra.mxu0 %v182
    %v1490 = vpop.f32.mrf.mxu0
    %v1491 = vadd.f32 %v1442, %v1490
    %v1492 = vpop.f32.mrf.mxu0
    %v1493 = vadd.f32 %v1444, %v1492
    %1494 = vdwg.mxu0
    %1495 = vmatpush.bf16.msra.mxu0 %v1088
    %1496 = vmatpush.bf16.msra.mxu0 %v1084
    %1497 = vmatpush.bf16.msra.mxu0 %v1080
    %1498 = vmatpush.bf16.msra.mxu0 %v1076
    %1499 = vmatpush.bf16.msra.mxu0 %v1072
    %1500 = vmatpush.bf16.msra.mxu0 %v1068
    %1501 = vmatpush.bf16.msra.mxu0 %v1064
    %1502 = vmatpush.bf16.msra.mxu0 %v1060
    %1503 = vmatmul.bf16.gmra.mxu0 %v141
    %v1504 = vpop.f32.mrf.mxu0
    %v1505 = vadd.f32 %v1456, %v1504
    %v1506 = vpop.f32.mrf.mxu0
    %v1507 = vadd.f32 %v1458, %v1506
    %1508 = vmatmul.bf16.gmra.mxu0 %v147
    %v1509 = vpop.f32.mrf.mxu0
    %v1510 = vadd.f32 %v1461, %v1509
    %v1511 = vpop.f32.mrf.mxu0
    %v1512 = vadd.f32 %v1463, %v1511
    %1513 = vmatmul.bf16.gmra.mxu0 %v153
    %v1514 = vpop.f32.mrf.mxu0
    %v1515 = vadd.f32 %v1466, %v1514
    %v1516 = vpop.f32.mrf.mxu0
    %v1517 = vadd.f32 %v1468, %v1516
    %1518 = vmatmul.bf16.gmra.mxu0 %v159
    %v1519 = vpop.f32.mrf.mxu0
    %v1520 = vadd.f32 %v1471, %v1519
    %v1521 = vpop.f32.mrf.mxu0
    %v1522 = vadd.f32 %v1473, %v1521
    %1523 = vmatmul.bf16.gmra.mxu0 %v165
    %v1524 = vpop.f32.mrf.mxu0
    %v1525 = vadd.f32 %v1476, %v1524
    %v1526 = vpop.f32.mrf.mxu0
    %v1527 = vadd.f32 %v1478, %v1526
    %1528 = vmatmul.bf16.gmra.mxu0 %v171
    %v1529 = vpop.f32.mrf.mxu0
    %v1530 = vadd.f32 %v1481, %v1529
    %v1531 = vpop.f32.mrf.mxu0
    %v1532 = vadd.f32 %v1483, %v1531
    %1533 = vmatmul.bf16.gmra.mxu0 %v177
    %v1534 = vpop.f32.mrf.mxu0
    %v1535 = vadd.f32 %v1486, %v1534
    %v1536 = vpop.f32.mrf.mxu0
    %v1537 = vadd.f32 %v1488, %v1536
    %1538 = vmatmul.bf16.gmra.mxu0 %v183
    %v1539 = vpop.f32.mrf.mxu0
    %v1540 = vadd.f32 %v1491, %v1539
    %v1541 = vpop.f32.mrf.mxu0
    %v1542 = vadd.f32 %v1493, %v1541
    %1543 = vdwg.mxu0
    %1544 = vmatpush.bf16.msra.mxu0 %v1120
    %1545 = vmatpush.bf16.msra.mxu0 %v1116
    %1546 = vmatpush.bf16.msra.mxu0 %v1112
    %1547 = vmatpush.bf16.msra.mxu0 %v1108
    %1548 = vmatpush.bf16.msra.mxu0 %v1104
    %1549 = vmatpush.bf16.msra.mxu0 %v1100
    %1550 = vmatpush.bf16.msra.mxu0 %v1096
    %1551 = vmatpush.bf16.msra.mxu0 %v1092
    %1552 = vmatmul.bf16.gmra.mxu0 %v142
    %v1553 = vpop.f32.mrf.mxu0
    %v1554 = vadd.f32 %v1505, %v1553
    %v1555 = vpop.f32.mrf.mxu0
    %v1556 = vadd.f32 %v1507, %v1555
    %1557 = vmatmul.bf16.gmra.mxu0 %v148
    %v1558 = vpop.f32.mrf.mxu0
    %v1559 = vadd.f32 %v1510, %v1558
    %v1560 = vpop.f32.mrf.mxu0
    %v1561 = vadd.f32 %v1512, %v1560
    %1562 = vmatmul.bf16.gmra.mxu0 %v154
    %v1563 = vpop.f32.mrf.mxu0
    %v1564 = vadd.f32 %v1515, %v1563
    %v1565 = vpop.f32.mrf.mxu0
    %v1566 = vadd.f32 %v1517, %v1565
    %1567 = vmatmul.bf16.gmra.mxu0 %v160
    %v1568 = vpop.f32.mrf.mxu0
    %v1569 = vadd.f32 %v1520, %v1568
    %v1570 = vpop.f32.mrf.mxu0
    %v1571 = vadd.f32 %v1522, %v1570
    %1572 = vmatmul.bf16.gmra.mxu0 %v166
    %v1573 = vpop.f32.mrf.mxu0
    %v1574 = vadd.f32 %v1525, %v1573
    %v1575 = vpop.f32.mrf.mxu0
    %v1576 = vadd.f32 %v1527, %v1575
    %1577 = vmatmul.bf16.gmra.mxu0 %v172
    %v1578 = vpop.f32.mrf.mxu0
    %v1579 = vadd.f32 %v1530, %v1578
    %v1580 = vpop.f32.mrf.mxu0
    %v1581 = vadd.f32 %v1532, %v1580
    %1582 = vmatmul.bf16.gmra.mxu0 %v178
    %v1583 = vpop.f32.mrf.mxu0
    %v1584 = vadd.f32 %v1535, %v1583
    %v1585 = vpop.f32.mrf.mxu0
    %v1586 = vadd.f32 %v1537, %v1585
    %1587 = vmatmul.bf16.gmra.mxu0 %v184
    %v1588 = vpop.f32.mrf.mxu0
    %v1589 = vadd.f32 %v1540, %v1588
    %v1590 = vpop.f32.mrf.mxu0
    %v1591 = vadd.f32 %v1542, %v1590
    %1592 = vdwg.mxu0
    %1593 = vmatpush.bf16.msra.mxu0 %v1152
    %1594 = vmatpush.bf16.msra.mxu0 %v1148
    %1595 = vmatpush.bf16.msra.mxu0 %v1144
    %1596 = vmatpush.bf16.msra.mxu0 %v1140
    %1597 = vmatpush.bf16.msra.mxu0 %v1136
    %1598 = vmatpush.bf16.msra.mxu0 %v1132
    %1599 = vmatpush.bf16.msra.mxu0 %v1128
    %1600 = vmatpush.bf16.msra.mxu0 %v1124
    %1601 = vmatmul.bf16.gmra.mxu0 %v143
    %v1602 = vpop.f32.mrf.mxu0
    %v1603 = vadd.f32 %v1554, %v1602
    %v1604 = vpop.f32.mrf.mxu0
    %v1605 = vadd.f32 %v1556, %v1604
    %1606 = vmatmul.bf16.gmra.mxu0 %v149
    %v1607 = vpop.f32.mrf.mxu0
    %v1608 = vadd.f32 %v1559, %v1607
    %v1609 = vpop.f32.mrf.mxu0
    %v1610 = vadd.f32 %v1561, %v1609
    %1611 = vmatmul.bf16.gmra.mxu0 %v155
    %v1612 = vpop.f32.mrf.mxu0
    %v1613 = vadd.f32 %v1564, %v1612
    %v1614 = vpop.f32.mrf.mxu0
    %v1615 = vadd.f32 %v1566, %v1614
    %1616 = vmatmul.bf16.gmra.mxu0 %v161
    %v1617 = vpop.f32.mrf.mxu0
    %v1618 = vadd.f32 %v1569, %v1617
    %v1619 = vpop.f32.mrf.mxu0
    %v1620 = vadd.f32 %v1571, %v1619
    %1621 = vmatmul.bf16.gmra.mxu0 %v167
    %v1622 = vpop.f32.mrf.mxu0
    %v1623 = vadd.f32 %v1574, %v1622
    %v1624 = vpop.f32.mrf.mxu0
    %v1625 = vadd.f32 %v1576, %v1624
    %1626 = vmatmul.bf16.gmra.mxu0 %v173
    %v1627 = vpop.f32.mrf.mxu0
    %v1628 = vadd.f32 %v1579, %v1627
    %v1629 = vpop.f32.mrf.mxu0
    %v1630 = vadd.f32 %v1581, %v1629
    %1631 = vmatmul.bf16.gmra.mxu0 %v179
    %v1632 = vpop.f32.mrf.mxu0
    %v1633 = vadd.f32 %v1584, %v1632
    %v1634 = vpop.f32.mrf.mxu0
    %v1635 = vadd.f32 %v1586, %v1634
    %1636 = vmatmul.bf16.gmra.mxu0 %v185
    %v1637 = vpop.f32.mrf.mxu0
    %v1638 = vadd.f32 %v1589, %v1637
    %v1639 = vpop.f32.mrf.mxu0
    %v1640 = vadd.f32 %v1591, %v1639
    %1641 = vdwg.mxu0
    %1642 = vmatpush.bf16.msra.mxu0 %v993
    %1643 = vmatpush.bf16.msra.mxu0 %v989
    %1644 = vmatpush.bf16.msra.mxu0 %v985
    %1645 = vmatpush.bf16.msra.mxu0 %v981
    %1646 = vmatpush.bf16.msra.mxu0 %v977
    %1647 = vmatpush.bf16.msra.mxu0 %v973
    %1648 = vmatpush.bf16.msra.mxu0 %v969
    %1649 = vmatpush.bf16.msra.mxu0 %v965
    %1650 = vmatmul.bf16.gmra.mxu0 %v138
    %v1651 = vpop.f32.mrf.mxu0
    %v1652 = vadd.f32 %v381, %v1651
    %v1653 = vpop.f32.mrf.mxu0
    %v1654 = vadd.f32 %v381, %v1653
    %1655 = vmatmul.bf16.gmra.mxu0 %v144
    %v1656 = vpop.f32.mrf.mxu0
    %v1657 = vadd.f32 %v381, %v1656
    %v1658 = vpop.f32.mrf.mxu0
    %v1659 = vadd.f32 %v381, %v1658
    %1660 = vmatmul.bf16.gmra.mxu0 %v150
    %v1661 = vpop.f32.mrf.mxu0
    %v1662 = vadd.f32 %v381, %v1661
    %v1663 = vpop.f32.mrf.mxu0
    %v1664 = vadd.f32 %v381, %v1663
    %1665 = vmatmul.bf16.gmra.mxu0 %v156
    %v1666 = vpop.f32.mrf.mxu0
    %v1667 = vadd.f32 %v381, %v1666
    %v1668 = vpop.f32.mrf.mxu0
    %v1669 = vadd.f32 %v381, %v1668
    %1670 = vmatmul.bf16.gmra.mxu0 %v162
    %v1671 = vpop.f32.mrf.mxu0
    %v1672 = vadd.f32 %v381, %v1671
    %v1673 = vpop.f32.mrf.mxu0
    %v1674 = vadd.f32 %v381, %v1673
    %1675 = vmatmul.bf16.gmra.mxu0 %v168
    %v1676 = vpop.f32.mrf.mxu0
    %v1677 = vadd.f32 %v381, %v1676
    %v1678 = vpop.f32.mrf.mxu0
    %v1679 = vadd.f32 %v381, %v1678
    %1680 = vmatmul.bf16.gmra.mxu0 %v174
    %v1681 = vpop.f32.mrf.mxu0
    %v1682 = vadd.f32 %v381, %v1681
    %v1683 = vpop.f32.mrf.mxu0
    %v1684 = vadd.f32 %v381, %v1683
    %1685 = vmatmul.bf16.gmra.mxu0 %v180
    %v1686 = vpop.f32.mrf.mxu0
    %v1687 = vadd.f32 %v381, %v1686
    %v1688 = vpop.f32.mrf.mxu0
    %v1689 = vadd.f32 %v381, %v1688
    %1690 = vdwg.mxu0
    %1691 = vmatpush.bf16.msra.mxu0 %v1025
    %1692 = vmatpush.bf16.msra.mxu0 %v1021
    %1693 = vmatpush.bf16.msra.mxu0 %v1017
    %1694 = vmatpush.bf16.msra.mxu0 %v1013
    %1695 = vmatpush.bf16.msra.mxu0 %v1009
    %1696 = vmatpush.bf16.msra.mxu0 %v1005
    %1697 = vmatpush.bf16.msra.mxu0 %v1001
    %1698 = vmatpush.bf16.msra.mxu0 %v997
    %1699 = vmatmul.bf16.gmra.mxu0 %v139
    %v1700 = vpop.f32.mrf.mxu0
    %v1701 = vadd.f32 %v1652, %v1700
    %v1702 = vpop.f32.mrf.mxu0
    %v1703 = vadd.f32 %v1654, %v1702
    %1704 = vmatmul.bf16.gmra.mxu0 %v145
    %v1705 = vpop.f32.mrf.mxu0
    %v1706 = vadd.f32 %v1657, %v1705
    %v1707 = vpop.f32.mrf.mxu0
    %v1708 = vadd.f32 %v1659, %v1707
    %1709 = vmatmul.bf16.gmra.mxu0 %v151
    %v1710 = vpop.f32.mrf.mxu0
    %v1711 = vadd.f32 %v1662, %v1710
    %v1712 = vpop.f32.mrf.mxu0
    %v1713 = vadd.f32 %v1664, %v1712
    %1714 = vmatmul.bf16.gmra.mxu0 %v157
    %v1715 = vpop.f32.mrf.mxu0
    %v1716 = vadd.f32 %v1667, %v1715
    %v1717 = vpop.f32.mrf.mxu0
    %v1718 = vadd.f32 %v1669, %v1717
    %1719 = vmatmul.bf16.gmra.mxu0 %v163
    %v1720 = vpop.f32.mrf.mxu0
    %v1721 = vadd.f32 %v1672, %v1720
    %v1722 = vpop.f32.mrf.mxu0
    %v1723 = vadd.f32 %v1674, %v1722
    %1724 = vmatmul.bf16.gmra.mxu0 %v169
    %v1725 = vpop.f32.mrf.mxu0
    %v1726 = vadd.f32 %v1677, %v1725
    %v1727 = vpop.f32.mrf.mxu0
    %v1728 = vadd.f32 %v1679, %v1727
    %1729 = vmatmul.bf16.gmra.mxu0 %v175
    %v1730 = vpop.f32.mrf.mxu0
    %v1731 = vadd.f32 %v1682, %v1730
    %v1732 = vpop.f32.mrf.mxu0
    %v1733 = vadd.f32 %v1684, %v1732
    %1734 = vmatmul.bf16.gmra.mxu0 %v181
    %v1735 = vpop.f32.mrf.mxu0
    %v1736 = vadd.f32 %v1687, %v1735
    %v1737 = vpop.f32.mrf.mxu0
    %v1738 = vadd.f32 %v1689, %v1737
    %1739 = vdwg.mxu0
    %1740 = vmatpush.bf16.msra.mxu0 %v1057
    %1741 = vmatpush.bf16.msra.mxu0 %v1053
    %1742 = vmatpush.bf16.msra.mxu0 %v1049
    %1743 = vmatpush.bf16.msra.mxu0 %v1045
    %1744 = vmatpush.bf16.msra.mxu0 %v1041
    %1745 = vmatpush.bf16.msra.mxu0 %v1037
    %1746 = vmatpush.bf16.msra.mxu0 %v1033
    %1747 = vmatpush.bf16.msra.mxu0 %v1029
    %1748 = vmatmul.bf16.gmra.mxu0 %v140
    %v1749 = vpop.f32.mrf.mxu0
    %v1750 = vadd.f32 %v1701, %v1749
    %v1751 = vpop.f32.mrf.mxu0
    %v1752 = vadd.f32 %v1703, %v1751
    %1753 = vmatmul.bf16.gmra.mxu0 %v146
    %v1754 = vpop.f32.mrf.mxu0
    %v1755 = vadd.f32 %v1706, %v1754
    %v1756 = vpop.f32.mrf.mxu0
    %v1757 = vadd.f32 %v1708, %v1756
    %1758 = vmatmul.bf16.gmra.mxu0 %v152
    %v1759 = vpop.f32.mrf.mxu0
    %v1760 = vadd.f32 %v1711, %v1759
    %v1761 = vpop.f32.mrf.mxu0
    %v1762 = vadd.f32 %v1713, %v1761
    %1763 = vmatmul.bf16.gmra.mxu0 %v158
    %v1764 = vpop.f32.mrf.mxu0
    %v1765 = vadd.f32 %v1716, %v1764
    %v1766 = vpop.f32.mrf.mxu0
    %v1767 = vadd.f32 %v1718, %v1766
    %1768 = vmatmul.bf16.gmra.mxu0 %v164
    %v1769 = vpop.f32.mrf.mxu0
    %v1770 = vadd.f32 %v1721, %v1769
    %v1771 = vpop.f32.mrf.mxu0
    %v1772 = vadd.f32 %v1723, %v1771
    %1773 = vmatmul.bf16.gmra.mxu0 %v170
    %v1774 = vpop.f32.mrf.mxu0
    %v1775 = vadd.f32 %v1726, %v1774
    %v1776 = vpop.f32.mrf.mxu0
    %v1777 = vadd.f32 %v1728, %v1776
    %1778 = vmatmul.bf16.gmra.mxu0 %v176
    %v1779 = vpop.f32.mrf.mxu0
    %v1780 = vadd.f32 %v1731, %v1779
    %v1781 = vpop.f32.mrf.mxu0
    %v1782 = vadd.f32 %v1733, %v1781
    %1783 = vmatmul.bf16.gmra.mxu0 %v182
    %v1784 = vpop.f32.mrf.mxu0
    %v1785 = vadd.f32 %v1736, %v1784
    %v1786 = vpop.f32.mrf.mxu0
    %v1787 = vadd.f32 %v1738, %v1786
    %1788 = vdwg.mxu0
    %1789 = vmatpush.bf16.msra.mxu0 %v1089
    %1790 = vmatpush.bf16.msra.mxu0 %v1085
    %1791 = vmatpush.bf16.msra.mxu0 %v1081
    %1792 = vmatpush.bf16.msra.mxu0 %v1077
    %1793 = vmatpush.bf16.msra.mxu0 %v1073
    %1794 = vmatpush.bf16.msra.mxu0 %v1069
    %1795 = vmatpush.bf16.msra.mxu0 %v1065
    %1796 = vmatpush.bf16.msra.mxu0 %v1061
    %1797 = vmatmul.bf16.gmra.mxu0 %v141
    %v1798 = vpop.f32.mrf.mxu0
    %v1799 = vadd.f32 %v1750, %v1798
    %v1800 = vpop.f32.mrf.mxu0
    %v1801 = vadd.f32 %v1752, %v1800
    %1802 = vmatmul.bf16.gmra.mxu0 %v147
    %v1803 = vpop.f32.mrf.mxu0
    %v1804 = vadd.f32 %v1755, %v1803
    %v1805 = vpop.f32.mrf.mxu0
    %v1806 = vadd.f32 %v1757, %v1805
    %1807 = vmatmul.bf16.gmra.mxu0 %v153
    %v1808 = vpop.f32.mrf.mxu0
    %v1809 = vadd.f32 %v1760, %v1808
    %v1810 = vpop.f32.mrf.mxu0
    %v1811 = vadd.f32 %v1762, %v1810
    %1812 = vmatmul.bf16.gmra.mxu0 %v159
    %v1813 = vpop.f32.mrf.mxu0
    %v1814 = vadd.f32 %v1765, %v1813
    %v1815 = vpop.f32.mrf.mxu0
    %v1816 = vadd.f32 %v1767, %v1815
    %1817 = vmatmul.bf16.gmra.mxu0 %v165
    %v1818 = vpop.f32.mrf.mxu0
    %v1819 = vadd.f32 %v1770, %v1818
    %v1820 = vpop.f32.mrf.mxu0
    %v1821 = vadd.f32 %v1772, %v1820
    %1822 = vmatmul.bf16.gmra.mxu0 %v171
    %v1823 = vpop.f32.mrf.mxu0
    %v1824 = vadd.f32 %v1775, %v1823
    %v1825 = vpop.f32.mrf.mxu0
    %v1826 = vadd.f32 %v1777, %v1825
    %1827 = vmatmul.bf16.gmra.mxu0 %v177
    %v1828 = vpop.f32.mrf.mxu0
    %v1829 = vadd.f32 %v1780, %v1828
    %v1830 = vpop.f32.mrf.mxu0
    %v1831 = vadd.f32 %v1782, %v1830
    %1832 = vmatmul.bf16.gmra.mxu0 %v183
    %v1833 = vpop.f32.mrf.mxu0
    %v1834 = vadd.f32 %v1785, %v1833
    %v1835 = vpop.f32.mrf.mxu0
    %v1836 = vadd.f32 %v1787, %v1835
    %1837 = vdwg.mxu0
    %1838 = vmatpush.bf16.msra.mxu0 %v1121
    %1839 = vmatpush.bf16.msra.mxu0 %v1117
    %1840 = vmatpush.bf16.msra.mxu0 %v1113
    %1841 = vmatpush.bf16.msra.mxu0 %v1109
    %1842 = vmatpush.bf16.msra.mxu0 %v1105
    %1843 = vmatpush.bf16.msra.mxu0 %v1101
    %1844 = vmatpush.bf16.msra.mxu0 %v1097
    %1845 = vmatpush.bf16.msra.mxu0 %v1093
    %1846 = vmatmul.bf16.gmra.mxu0 %v142
    %v1847 = vpop.f32.mrf.mxu0
    %v1848 = vadd.f32 %v1799, %v1847
    %v1849 = vpop.f32.mrf.mxu0
    %v1850 = vadd.f32 %v1801, %v1849
    %1851 = vmatmul.bf16.gmra.mxu0 %v148
    %v1852 = vpop.f32.mrf.mxu0
    %v1853 = vadd.f32 %v1804, %v1852
    %v1854 = vpop.f32.mrf.mxu0
    %v1855 = vadd.f32 %v1806, %v1854
    %1856 = vmatmul.bf16.gmra.mxu0 %v154
    %v1857 = vpop.f32.mrf.mxu0
    %v1858 = vadd.f32 %v1809, %v1857
    %v1859 = vpop.f32.mrf.mxu0
    %v1860 = vadd.f32 %v1811, %v1859
    %1861 = vmatmul.bf16.gmra.mxu0 %v160
    %v1862 = vpop.f32.mrf.mxu0
    %v1863 = vadd.f32 %v1814, %v1862
    %v1864 = vpop.f32.mrf.mxu0
    %v1865 = vadd.f32 %v1816, %v1864
    %1866 = vmatmul.bf16.gmra.mxu0 %v166
    %v1867 = vpop.f32.mrf.mxu0
    %v1868 = vadd.f32 %v1819, %v1867
    %v1869 = vpop.f32.mrf.mxu0
    %v1870 = vadd.f32 %v1821, %v1869
    %1871 = vmatmul.bf16.gmra.mxu0 %v172
    %v1872 = vpop.f32.mrf.mxu0
    %v1873 = vadd.f32 %v1824, %v1872
    %v1874 = vpop.f32.mrf.mxu0
    %v1875 = vadd.f32 %v1826, %v1874
    %1876 = vmatmul.bf16.gmra.mxu0 %v178
    %v1877 = vpop.f32.mrf.mxu0
    %v1878 = vadd.f32 %v1829, %v1877
    %v1879 = vpop.f32.mrf.mxu0
    %v1880 = vadd.f32 %v1831, %v1879
    %1881 = vmatmul.bf16.gmra.mxu0 %v184
    %v1882 = vpop.f32.mrf.mxu0
    %v1883 = vadd.f32 %v1834, %v1882
    %v1884 = vpop.f32.mrf.mxu0
    %v1885 = vadd.f32 %v1836, %v1884
    %1886 = vdwg.mxu0
    %1887 = vmatpush.bf16.msra.mxu0 %v1153
    %1888 = vmatpush.bf16.msra.mxu0 %v1149
    %1889 = vmatpush.bf16.msra.mxu0 %v1145
    %1890 = vmatpush.bf16.msra.mxu0 %v1141
    %1891 = vmatpush.bf16.msra.mxu0 %v1137
    %1892 = vmatpush.bf16.msra.mxu0 %v1133
    %1893 = vmatpush.bf16.msra.mxu0 %v1129
    %1894 = vmatpush.bf16.msra.mxu0 %v1125
    %1895 = vmatmul.bf16.gmra.mxu0 %v143
    %v1896 = vpop.f32.mrf.mxu0
    %v1897 = vadd.f32 %v1848, %v1896
    %v1898 = vpop.f32.mrf.mxu0
    %v1899 = vadd.f32 %v1850, %v1898
    %1900 = vmatmul.bf16.gmra.mxu0 %v149
    %v1901 = vpop.f32.mrf.mxu0
    %v1902 = vadd.f32 %v1853, %v1901
    %v1903 = vpop.f32.mrf.mxu0
    %v1904 = vadd.f32 %v1855, %v1903
    %1905 = vmatmul.bf16.gmra.mxu0 %v155
    %v1906 = vpop.f32.mrf.mxu0
    %v1907 = vadd.f32 %v1858, %v1906
    %v1908 = vpop.f32.mrf.mxu0
    %v1909 = vadd.f32 %v1860, %v1908
    %1910 = vmatmul.bf16.gmra.mxu0 %v161
    %v1911 = vpop.f32.mrf.mxu0
    %v1912 = vadd.f32 %v1863, %v1911
    %v1913 = vpop.f32.mrf.mxu0
    %v1914 = vadd.f32 %v1865, %v1913
    %1915 = vmatmul.bf16.gmra.mxu0 %v167
    %v1916 = vpop.f32.mrf.mxu0
    %v1917 = vadd.f32 %v1868, %v1916
    %v1918 = vpop.f32.mrf.mxu0
    %v1919 = vadd.f32 %v1870, %v1918
    %1920 = vmatmul.bf16.gmra.mxu0 %v173
    %v1921 = vpop.f32.mrf.mxu0
    %v1922 = vadd.f32 %v1873, %v1921
    %v1923 = vpop.f32.mrf.mxu0
    %v1924 = vadd.f32 %v1875, %v1923
    %1925 = vmatmul.bf16.gmra.mxu0 %v179
    %v1926 = vpop.f32.mrf.mxu0
    %v1927 = vadd.f32 %v1878, %v1926
    %v1928 = vpop.f32.mrf.mxu0
    %v1929 = vadd.f32 %v1880, %v1928
    %1930 = vmatmul.bf16.gmra.mxu0 %v185
    %v1931 = vpop.f32.mrf.mxu0
    %v1932 = vadd.f32 %v1883, %v1931
    %v1933 = vpop.f32.mrf.mxu0
    %v1934 = vadd.f32 %v1885, %v1933
    %1935 = vdwg.mxu0
    %1936 = vmatpush.bf16.msra.mxu0 %v994
    %1937 = vmatpush.bf16.msra.mxu0 %v990
    %1938 = vmatpush.bf16.msra.mxu0 %v986
    %1939 = vmatpush.bf16.msra.mxu0 %v982
    %1940 = vmatpush.bf16.msra.mxu0 %v978
    %1941 = vmatpush.bf16.msra.mxu0 %v974
    %1942 = vmatpush.bf16.msra.mxu0 %v970
    %1943 = vmatpush.bf16.msra.mxu0 %v966
    %1944 = vmatmul.bf16.gmra.mxu0 %v138
    %v1945 = vpop.f32.mrf.mxu0
    %v1946 = vadd.f32 %v382, %v1945
    %v1947 = vpop.f32.mrf.mxu0
    %v1948 = vadd.f32 %v382, %v1947
    %1949 = vmatmul.bf16.gmra.mxu0 %v144
    %v1950 = vpop.f32.mrf.mxu0
    %v1951 = vadd.f32 %v382, %v1950
    %v1952 = vpop.f32.mrf.mxu0
    %v1953 = vadd.f32 %v382, %v1952
    %1954 = vmatmul.bf16.gmra.mxu0 %v150
    %v1955 = vpop.f32.mrf.mxu0
    %v1956 = vadd.f32 %v382, %v1955
    %v1957 = vpop.f32.mrf.mxu0
    %v1958 = vadd.f32 %v382, %v1957
    %1959 = vmatmul.bf16.gmra.mxu0 %v156
    %v1960 = vpop.f32.mrf.mxu0
    %v1961 = vadd.f32 %v382, %v1960
    %v1962 = vpop.f32.mrf.mxu0
    %v1963 = vadd.f32 %v382, %v1962
    %1964 = vmatmul.bf16.gmra.mxu0 %v162
    %v1965 = vpop.f32.mrf.mxu0
    %v1966 = vadd.f32 %v382, %v1965
    %v1967 = vpop.f32.mrf.mxu0
    %v1968 = vadd.f32 %v382, %v1967
    %1969 = vmatmul.bf16.gmra.mxu0 %v168
    %v1970 = vpop.f32.mrf.mxu0
    %v1971 = vadd.f32 %v382, %v1970
    %v1972 = vpop.f32.mrf.mxu0
    %v1973 = vadd.f32 %v382, %v1972
    %1974 = vmatmul.bf16.gmra.mxu0 %v174
    %v1975 = vpop.f32.mrf.mxu0
    %v1976 = vadd.f32 %v382, %v1975
    %v1977 = vpop.f32.mrf.mxu0
    %v1978 = vadd.f32 %v382, %v1977
    %1979 = vmatmul.bf16.gmra.mxu0 %v180
    %v1980 = vpop.f32.mrf.mxu0
    %v1981 = vadd.f32 %v382, %v1980
    %v1982 = vpop.f32.mrf.mxu0
    %v1983 = vadd.f32 %v382, %v1982
    %1984 = vdwg.mxu0
    %1985 = vmatpush.bf16.msra.mxu0 %v1026
    %1986 = vmatpush.bf16.msra.mxu0 %v1022
    %1987 = vmatpush.bf16.msra.mxu0 %v1018
    %1988 = vmatpush.bf16.msra.mxu0 %v1014
    %1989 = vmatpush.bf16.msra.mxu0 %v1010
    %1990 = vmatpush.bf16.msra.mxu0 %v1006
    %1991 = vmatpush.bf16.msra.mxu0 %v1002
    %1992 = vmatpush.bf16.msra.mxu0 %v998
    %1993 = vmatmul.bf16.gmra.mxu0 %v139
    %v1994 = vpop.f32.mrf.mxu0
    %v1995 = vadd.f32 %v1946, %v1994
    %v1996 = vpop.f32.mrf.mxu0
    %v1997 = vadd.f32 %v1948, %v1996
    %1998 = vmatmul.bf16.gmra.mxu0 %v145
    %v1999 = vpop.f32.mrf.mxu0
    %v2000 = vadd.f32 %v1951, %v1999
    %v2001 = vpop.f32.mrf.mxu0
    %v2002 = vadd.f32 %v1953, %v2001
    %2003 = vmatmul.bf16.gmra.mxu0 %v151
    %v2004 = vpop.f32.mrf.mxu0
    %v2005 = vadd.f32 %v1956, %v2004
    %v2006 = vpop.f32.mrf.mxu0
    %v2007 = vadd.f32 %v1958, %v2006
    %2008 = vmatmul.bf16.gmra.mxu0 %v157
    %v2009 = vpop.f32.mrf.mxu0
    %v2010 = vadd.f32 %v1961, %v2009
    %v2011 = vpop.f32.mrf.mxu0
    %v2012 = vadd.f32 %v1963, %v2011
    %2013 = vmatmul.bf16.gmra.mxu0 %v163
    %v2014 = vpop.f32.mrf.mxu0
    %v2015 = vadd.f32 %v1966, %v2014
    %v2016 = vpop.f32.mrf.mxu0
    %v2017 = vadd.f32 %v1968, %v2016
    %2018 = vmatmul.bf16.gmra.mxu0 %v169
    %v2019 = vpop.f32.mrf.mxu0
    %v2020 = vadd.f32 %v1971, %v2019
    %v2021 = vpop.f32.mrf.mxu0
    %v2022 = vadd.f32 %v1973, %v2021
    %2023 = vmatmul.bf16.gmra.mxu0 %v175
    %v2024 = vpop.f32.mrf.mxu0
    %v2025 = vadd.f32 %v1976, %v2024
    %v2026 = vpop.f32.mrf.mxu0
    %v2027 = vadd.f32 %v1978, %v2026
    %2028 = vmatmul.bf16.gmra.mxu0 %v181
    %v2029 = vpop.f32.mrf.mxu0
    %v2030 = vadd.f32 %v1981, %v2029
    %v2031 = vpop.f32.mrf.mxu0
    %v2032 = vadd.f32 %v1983, %v2031
    %2033 = vdwg.mxu0
    %2034 = vmatpush.bf16.msra.mxu0 %v1058
    %2035 = vmatpush.bf16.msra.mxu0 %v1054
    %2036 = vmatpush.bf16.msra.mxu0 %v1050
    %2037 = vmatpush.bf16.msra.mxu0 %v1046
    %2038 = vmatpush.bf16.msra.mxu0 %v1042
    %2039 = vmatpush.bf16.msra.mxu0 %v1038
    %2040 = vmatpush.bf16.msra.mxu0 %v1034
    %2041 = vmatpush.bf16.msra.mxu0 %v1030
    %2042 = vmatmul.bf16.gmra.mxu0 %v140
    %v2043 = vpop.f32.mrf.mxu0
    %v2044 = vadd.f32 %v1995, %v2043
    %v2045 = vpop.f32.mrf.mxu0
    %v2046 = vadd.f32 %v1997, %v2045
    %2047 = vmatmul.bf16.gmra.mxu0 %v146
    %v2048 = vpop.f32.mrf.mxu0
    %v2049 = vadd.f32 %v2000, %v2048
    %v2050 = vpop.f32.mrf.mxu0
    %v2051 = vadd.f32 %v2002, %v2050
    %2052 = vmatmul.bf16.gmra.mxu0 %v152
    %v2053 = vpop.f32.mrf.mxu0
    %v2054 = vadd.f32 %v2005, %v2053
    %v2055 = vpop.f32.mrf.mxu0
    %v2056 = vadd.f32 %v2007, %v2055
    %2057 = vmatmul.bf16.gmra.mxu0 %v158
    %v2058 = vpop.f32.mrf.mxu0
    %v2059 = vadd.f32 %v2010, %v2058
    %v2060 = vpop.f32.mrf.mxu0
    %v2061 = vadd.f32 %v2012, %v2060
    %2062 = vmatmul.bf16.gmra.mxu0 %v164
    %v2063 = vpop.f32.mrf.mxu0
    %v2064 = vadd.f32 %v2015, %v2063
    %v2065 = vpop.f32.mrf.mxu0
    %v2066 = vadd.f32 %v2017, %v2065
    %2067 = vmatmul.bf16.gmra.mxu0 %v170
    %v2068 = vpop.f32.mrf.mxu0
    %v2069 = vadd.f32 %v2020, %v2068
    %v2070 = vpop.f32.mrf.mxu0
    %v2071 = vadd.f32 %v2022, %v2070
    %2072 = vmatmul.bf16.gmra.mxu0 %v176
    %v2073 = vpop.f32.mrf.mxu0
    %v2074 = vadd.f32 %v2025, %v2073
    %v2075 = vpop.f32.mrf.mxu0
    %v2076 = vadd.f32 %v2027, %v2075
    %2077 = vmatmul.bf16.gmra.mxu0 %v182
    %v2078 = vpop.f32.mrf.mxu0
    %v2079 = vadd.f32 %v2030, %v2078
    %v2080 = vpop.f32.mrf.mxu0
    %v2081 = vadd.f32 %v2032, %v2080
    %2082 = vdwg.mxu0
    %2083 = vmatpush.bf16.msra.mxu0 %v1090
    %2084 = vmatpush.bf16.msra.mxu0 %v1086
    %2085 = vmatpush.bf16.msra.mxu0 %v1082
    %2086 = vmatpush.bf16.msra.mxu0 %v1078
    %2087 = vmatpush.bf16.msra.mxu0 %v1074
    %2088 = vmatpush.bf16.msra.mxu0 %v1070
    %2089 = vmatpush.bf16.msra.mxu0 %v1066
    %2090 = vmatpush.bf16.msra.mxu0 %v1062
    %2091 = vmatmul.bf16.gmra.mxu0 %v141
    %v2092 = vpop.f32.mrf.mxu0
    %v2093 = vadd.f32 %v2044, %v2092
    %v2094 = vpop.f32.mrf.mxu0
    %v2095 = vadd.f32 %v2046, %v2094
    %2096 = vmatmul.bf16.gmra.mxu0 %v147
    %v2097 = vpop.f32.mrf.mxu0
    %v2098 = vadd.f32 %v2049, %v2097
    %v2099 = vpop.f32.mrf.mxu0
    %v2100 = vadd.f32 %v2051, %v2099
    %2101 = vmatmul.bf16.gmra.mxu0 %v153
    %v2102 = vpop.f32.mrf.mxu0
    %v2103 = vadd.f32 %v2054, %v2102
    %v2104 = vpop.f32.mrf.mxu0
    %v2105 = vadd.f32 %v2056, %v2104
    %2106 = vmatmul.bf16.gmra.mxu0 %v159
    %v2107 = vpop.f32.mrf.mxu0
    %v2108 = vadd.f32 %v2059, %v2107
    %v2109 = vpop.f32.mrf.mxu0
    %v2110 = vadd.f32 %v2061, %v2109
    %2111 = vmatmul.bf16.gmra.mxu0 %v165
    %v2112 = vpop.f32.mrf.mxu0
    %v2113 = vadd.f32 %v2064, %v2112
    %v2114 = vpop.f32.mrf.mxu0
    %v2115 = vadd.f32 %v2066, %v2114
    %2116 = vmatmul.bf16.gmra.mxu0 %v171
    %v2117 = vpop.f32.mrf.mxu0
    %v2118 = vadd.f32 %v2069, %v2117
    %v2119 = vpop.f32.mrf.mxu0
    %v2120 = vadd.f32 %v2071, %v2119
    %2121 = vmatmul.bf16.gmra.mxu0 %v177
    %v2122 = vpop.f32.mrf.mxu0
    %v2123 = vadd.f32 %v2074, %v2122
    %v2124 = vpop.f32.mrf.mxu0
    %v2125 = vadd.f32 %v2076, %v2124
    %2126 = vmatmul.bf16.gmra.mxu0 %v183
    %v2127 = vpop.f32.mrf.mxu0
    %v2128 = vadd.f32 %v2079, %v2127
    %v2129 = vpop.f32.mrf.mxu0
    %v2130 = vadd.f32 %v2081, %v2129
    %2131 = vdwg.mxu0
    %2132 = vmatpush.bf16.msra.mxu0 %v1122
    %2133 = vmatpush.bf16.msra.mxu0 %v1118
    %2134 = vmatpush.bf16.msra.mxu0 %v1114
    %2135 = vmatpush.bf16.msra.mxu0 %v1110
    %2136 = vmatpush.bf16.msra.mxu0 %v1106
    %2137 = vmatpush.bf16.msra.mxu0 %v1102
    %2138 = vmatpush.bf16.msra.mxu0 %v1098
    %2139 = vmatpush.bf16.msra.mxu0 %v1094
    %2140 = vmatmul.bf16.gmra.mxu0 %v142
    %v2141 = vpop.f32.mrf.mxu0
    %v2142 = vadd.f32 %v2093, %v2141
    %v2143 = vpop.f32.mrf.mxu0
    %v2144 = vadd.f32 %v2095, %v2143
    %2145 = vmatmul.bf16.gmra.mxu0 %v148
    %v2146 = vpop.f32.mrf.mxu0
    %v2147 = vadd.f32 %v2098, %v2146
    %v2148 = vpop.f32.mrf.mxu0
    %v2149 = vadd.f32 %v2100, %v2148
    %2150 = vmatmul.bf16.gmra.mxu0 %v154
    %v2151 = vpop.f32.mrf.mxu0
    %v2152 = vadd.f32 %v2103, %v2151
    %v2153 = vpop.f32.mrf.mxu0
    %v2154 = vadd.f32 %v2105, %v2153
    %2155 = vmatmul.bf16.gmra.mxu0 %v160
    %v2156 = vpop.f32.mrf.mxu0
    %v2157 = vadd.f32 %v2108, %v2156
    %v2158 = vpop.f32.mrf.mxu0
    %v2159 = vadd.f32 %v2110, %v2158
    %2160 = vmatmul.bf16.gmra.mxu0 %v166
    %v2161 = vpop.f32.mrf.mxu0
    %v2162 = vadd.f32 %v2113, %v2161
    %v2163 = vpop.f32.mrf.mxu0
    %v2164 = vadd.f32 %v2115, %v2163
    %2165 = vmatmul.bf16.gmra.mxu0 %v172
    %v2166 = vpop.f32.mrf.mxu0
    %v2167 = vadd.f32 %v2118, %v2166
    %v2168 = vpop.f32.mrf.mxu0
    %v2169 = vadd.f32 %v2120, %v2168
    %2170 = vmatmul.bf16.gmra.mxu0 %v178
    %v2171 = vpop.f32.mrf.mxu0
    %v2172 = vadd.f32 %v2123, %v2171
    %v2173 = vpop.f32.mrf.mxu0
    %v2174 = vadd.f32 %v2125, %v2173
    %2175 = vmatmul.bf16.gmra.mxu0 %v184
    %v2176 = vpop.f32.mrf.mxu0
    %v2177 = vadd.f32 %v2128, %v2176
    %v2178 = vpop.f32.mrf.mxu0
    %v2179 = vadd.f32 %v2130, %v2178
    %2180 = vdwg.mxu0
    %2181 = vmatpush.bf16.msra.mxu0 %v1154
    %2182 = vmatpush.bf16.msra.mxu0 %v1150
    %2183 = vmatpush.bf16.msra.mxu0 %v1146
    %2184 = vmatpush.bf16.msra.mxu0 %v1142
    %2185 = vmatpush.bf16.msra.mxu0 %v1138
    %2186 = vmatpush.bf16.msra.mxu0 %v1134
    %2187 = vmatpush.bf16.msra.mxu0 %v1130
    %2188 = vmatpush.bf16.msra.mxu0 %v1126
    %2189 = vmatmul.bf16.gmra.mxu0 %v143
    %v2190 = vpop.f32.mrf.mxu0
    %v2191 = vadd.f32 %v2142, %v2190
    %v2192 = vpop.f32.mrf.mxu0
    %v2193 = vadd.f32 %v2144, %v2192
    %2194 = vmatmul.bf16.gmra.mxu0 %v149
    %v2195 = vpop.f32.mrf.mxu0
    %v2196 = vadd.f32 %v2147, %v2195
    %v2197 = vpop.f32.mrf.mxu0
    %v2198 = vadd.f32 %v2149, %v2197
    %2199 = vmatmul.bf16.gmra.mxu0 %v155
    %v2200 = vpop.f32.mrf.mxu0
    %v2201 = vadd.f32 %v2152, %v2200
    %v2202 = vpop.f32.mrf.mxu0
    %v2203 = vadd.f32 %v2154, %v2202
    %2204 = vmatmul.bf16.gmra.mxu0 %v161
    %v2205 = vpop.f32.mrf.mxu0
    %v2206 = vadd.f32 %v2157, %v2205
    %v2207 = vpop.f32.mrf.mxu0
    %v2208 = vadd.f32 %v2159, %v2207
    %2209 = vmatmul.bf16.gmra.mxu0 %v167
    %v2210 = vpop.f32.mrf.mxu0
    %v2211 = vadd.f32 %v2162, %v2210
    %v2212 = vpop.f32.mrf.mxu0
    %v2213 = vadd.f32 %v2164, %v2212
    %2214 = vmatmul.bf16.gmra.mxu0 %v173
    %v2215 = vpop.f32.mrf.mxu0
    %v2216 = vadd.f32 %v2167, %v2215
    %v2217 = vpop.f32.mrf.mxu0
    %v2218 = vadd.f32 %v2169, %v2217
    %2219 = vmatmul.bf16.gmra.mxu0 %v179
    %v2220 = vpop.f32.mrf.mxu0
    %v2221 = vadd.f32 %v2172, %v2220
    %v2222 = vpop.f32.mrf.mxu0
    %v2223 = vadd.f32 %v2174, %v2222
    %2224 = vmatmul.bf16.gmra.mxu0 %v185
    %v2225 = vpop.f32.mrf.mxu0
    %v2226 = vadd.f32 %v2177, %v2225
    %v2227 = vpop.f32.mrf.mxu0
    %v2228 = vadd.f32 %v2179, %v2227
    %2229 = vdwg.mxu0
    %2230 = vmatpush.bf16.msra.mxu0 %v995
    %2231 = vmatpush.bf16.msra.mxu0 %v991
    %2232 = vmatpush.bf16.msra.mxu0 %v987
    %2233 = vmatpush.bf16.msra.mxu0 %v983
    %2234 = vmatpush.bf16.msra.mxu0 %v979
    %2235 = vmatpush.bf16.msra.mxu0 %v975
    %2236 = vmatpush.bf16.msra.mxu0 %v971
    %2237 = vmatpush.bf16.msra.mxu0 %v967
    %2238 = vmatmul.bf16.gmra.mxu0 %v138
    %v2239 = vpop.f32.mrf.mxu0
    %v2240 = vadd.f32 %v383, %v2239
    %v2241 = vpop.f32.mrf.mxu0
    %v2242 = vadd.f32 %v383, %v2241
    %2243 = vmatmul.bf16.gmra.mxu0 %v144
    %v2244 = vpop.f32.mrf.mxu0
    %v2245 = vadd.f32 %v383, %v2244
    %v2246 = vpop.f32.mrf.mxu0
    %v2247 = vadd.f32 %v383, %v2246
    %2248 = vmatmul.bf16.gmra.mxu0 %v150
    %v2249 = vpop.f32.mrf.mxu0
    %v2250 = vadd.f32 %v383, %v2249
    %v2251 = vpop.f32.mrf.mxu0
    %v2252 = vadd.f32 %v383, %v2251
    %2253 = vmatmul.bf16.gmra.mxu0 %v156
    %v2254 = vpop.f32.mrf.mxu0
    %v2255 = vadd.f32 %v383, %v2254
    %v2256 = vpop.f32.mrf.mxu0
    %v2257 = vadd.f32 %v383, %v2256
    %2258 = vmatmul.bf16.gmra.mxu0 %v162
    %v2259 = vpop.f32.mrf.mxu0
    %v2260 = vadd.f32 %v383, %v2259
    %v2261 = vpop.f32.mrf.mxu0
    %v2262 = vadd.f32 %v383, %v2261
    %2263 = vmatmul.bf16.gmra.mxu0 %v168
    %v2264 = vpop.f32.mrf.mxu0
    %v2265 = vadd.f32 %v383, %v2264
    %v2266 = vpop.f32.mrf.mxu0
    %v2267 = vadd.f32 %v383, %v2266
    %2268 = vmatmul.bf16.gmra.mxu0 %v174
    %v2269 = vpop.f32.mrf.mxu0
    %v2270 = vadd.f32 %v383, %v2269
    %v2271 = vpop.f32.mrf.mxu0
    %v2272 = vadd.f32 %v383, %v2271
    %2273 = vmatmul.bf16.gmra.mxu0 %v180
    %v2274 = vpop.f32.mrf.mxu0
    %v2275 = vadd.f32 %v383, %v2274
    %v2276 = vpop.f32.mrf.mxu0
    %v2277 = vadd.f32 %v383, %v2276
    %2278 = vdwg.mxu0
    %2279 = vmatpush.bf16.msra.mxu0 %v1027
    %2280 = vmatpush.bf16.msra.mxu0 %v1023
    %2281 = vmatpush.bf16.msra.mxu0 %v1019
    %2282 = vmatpush.bf16.msra.mxu0 %v1015
    %2283 = vmatpush.bf16.msra.mxu0 %v1011
    %2284 = vmatpush.bf16.msra.mxu0 %v1007
    %2285 = vmatpush.bf16.msra.mxu0 %v1003
    %2286 = vmatpush.bf16.msra.mxu0 %v999
    %2287 = vmatmul.bf16.gmra.mxu0 %v139
    %v2288 = vpop.f32.mrf.mxu0
    %v2289 = vadd.f32 %v2240, %v2288
    %v2290 = vpop.f32.mrf.mxu0
    %v2291 = vadd.f32 %v2242, %v2290
    %2292 = vmatmul.bf16.gmra.mxu0 %v145
    %v2293 = vpop.f32.mrf.mxu0
    %v2294 = vadd.f32 %v2245, %v2293
    %v2295 = vpop.f32.mrf.mxu0
    %v2296 = vadd.f32 %v2247, %v2295
    %2297 = vmatmul.bf16.gmra.mxu0 %v151
    %v2298 = vpop.f32.mrf.mxu0
    %v2299 = vadd.f32 %v2250, %v2298
    %v2300 = vpop.f32.mrf.mxu0
    %v2301 = vadd.f32 %v2252, %v2300
    %2302 = vmatmul.bf16.gmra.mxu0 %v157
    %v2303 = vpop.f32.mrf.mxu0
    %v2304 = vadd.f32 %v2255, %v2303
    %v2305 = vpop.f32.mrf.mxu0
    %v2306 = vadd.f32 %v2257, %v2305
    %2307 = vmatmul.bf16.gmra.mxu0 %v163
    %v2308 = vpop.f32.mrf.mxu0
    %v2309 = vadd.f32 %v2260, %v2308
    %v2310 = vpop.f32.mrf.mxu0
    %v2311 = vadd.f32 %v2262, %v2310
    %2312 = vmatmul.bf16.gmra.mxu0 %v169
    %v2313 = vpop.f32.mrf.mxu0
    %v2314 = vadd.f32 %v2265, %v2313
    %v2315 = vpop.f32.mrf.mxu0
    %v2316 = vadd.f32 %v2267, %v2315
    %2317 = vmatmul.bf16.gmra.mxu0 %v175
    %v2318 = vpop.f32.mrf.mxu0
    %v2319 = vadd.f32 %v2270, %v2318
    %v2320 = vpop.f32.mrf.mxu0
    %v2321 = vadd.f32 %v2272, %v2320
    %2322 = vmatmul.bf16.gmra.mxu0 %v181
    %v2323 = vpop.f32.mrf.mxu0
    %v2324 = vadd.f32 %v2275, %v2323
    %v2325 = vpop.f32.mrf.mxu0
    %v2326 = vadd.f32 %v2277, %v2325
    %2327 = vdwg.mxu0
    %2328 = vmatpush.bf16.msra.mxu0 %v1059
    %2329 = vmatpush.bf16.msra.mxu0 %v1055
    %2330 = vmatpush.bf16.msra.mxu0 %v1051
    %2331 = vmatpush.bf16.msra.mxu0 %v1047
    %2332 = vmatpush.bf16.msra.mxu0 %v1043
    %2333 = vmatpush.bf16.msra.mxu0 %v1039
    %2334 = vmatpush.bf16.msra.mxu0 %v1035
    %2335 = vmatpush.bf16.msra.mxu0 %v1031
    %2336 = vmatmul.bf16.gmra.mxu0 %v140
    %v2337 = vpop.f32.mrf.mxu0
    %v2338 = vadd.f32 %v2289, %v2337
    %v2339 = vpop.f32.mrf.mxu0
    %v2340 = vadd.f32 %v2291, %v2339
    %2341 = vmatmul.bf16.gmra.mxu0 %v146
    %v2342 = vpop.f32.mrf.mxu0
    %v2343 = vadd.f32 %v2294, %v2342
    %v2344 = vpop.f32.mrf.mxu0
    %v2345 = vadd.f32 %v2296, %v2344
    %2346 = vmatmul.bf16.gmra.mxu0 %v152
    %v2347 = vpop.f32.mrf.mxu0
    %v2348 = vadd.f32 %v2299, %v2347
    %v2349 = vpop.f32.mrf.mxu0
    %v2350 = vadd.f32 %v2301, %v2349
    %2351 = vmatmul.bf16.gmra.mxu0 %v158
    %v2352 = vpop.f32.mrf.mxu0
    %v2353 = vadd.f32 %v2304, %v2352
    %v2354 = vpop.f32.mrf.mxu0
    %v2355 = vadd.f32 %v2306, %v2354
    %2356 = vmatmul.bf16.gmra.mxu0 %v164
    %v2357 = vpop.f32.mrf.mxu0
    %v2358 = vadd.f32 %v2309, %v2357
    %v2359 = vpop.f32.mrf.mxu0
    %v2360 = vadd.f32 %v2311, %v2359
    %2361 = vmatmul.bf16.gmra.mxu0 %v170
    %v2362 = vpop.f32.mrf.mxu0
    %v2363 = vadd.f32 %v2314, %v2362
    %v2364 = vpop.f32.mrf.mxu0
    %v2365 = vadd.f32 %v2316, %v2364
    %2366 = vmatmul.bf16.gmra.mxu0 %v176
    %v2367 = vpop.f32.mrf.mxu0
    %v2368 = vadd.f32 %v2319, %v2367
    %v2369 = vpop.f32.mrf.mxu0
    %v2370 = vadd.f32 %v2321, %v2369
    %2371 = vmatmul.bf16.gmra.mxu0 %v182
    %v2372 = vpop.f32.mrf.mxu0
    %v2373 = vadd.f32 %v2324, %v2372
    %v2374 = vpop.f32.mrf.mxu0
    %v2375 = vadd.f32 %v2326, %v2374
    %2376 = vdwg.mxu0
    %2377 = vmatpush.bf16.msra.mxu0 %v1091
    %2378 = vmatpush.bf16.msra.mxu0 %v1087
    %2379 = vmatpush.bf16.msra.mxu0 %v1083
    %2380 = vmatpush.bf16.msra.mxu0 %v1079
    %2381 = vmatpush.bf16.msra.mxu0 %v1075
    %2382 = vmatpush.bf16.msra.mxu0 %v1071
    %2383 = vmatpush.bf16.msra.mxu0 %v1067
    %2384 = vmatpush.bf16.msra.mxu0 %v1063
    %2385 = vmatmul.bf16.gmra.mxu0 %v141
    %v2386 = vpop.f32.mrf.mxu0
    %v2387 = vadd.f32 %v2338, %v2386
    %v2388 = vpop.f32.mrf.mxu0
    %v2389 = vadd.f32 %v2340, %v2388
    %2390 = vmatmul.bf16.gmra.mxu0 %v147
    %v2391 = vpop.f32.mrf.mxu0
    %v2392 = vadd.f32 %v2343, %v2391
    %v2393 = vpop.f32.mrf.mxu0
    %v2394 = vadd.f32 %v2345, %v2393
    %2395 = vmatmul.bf16.gmra.mxu0 %v153
    %v2396 = vpop.f32.mrf.mxu0
    %v2397 = vadd.f32 %v2348, %v2396
    %v2398 = vpop.f32.mrf.mxu0
    %v2399 = vadd.f32 %v2350, %v2398
    %2400 = vmatmul.bf16.gmra.mxu0 %v159
    %v2401 = vpop.f32.mrf.mxu0
    %v2402 = vadd.f32 %v2353, %v2401
    %v2403 = vpop.f32.mrf.mxu0
    %v2404 = vadd.f32 %v2355, %v2403
    %2405 = vmatmul.bf16.gmra.mxu0 %v165
    %v2406 = vpop.f32.mrf.mxu0
    %v2407 = vadd.f32 %v2358, %v2406
    %v2408 = vpop.f32.mrf.mxu0
    %v2409 = vadd.f32 %v2360, %v2408
    %2410 = vmatmul.bf16.gmra.mxu0 %v171
    %v2411 = vpop.f32.mrf.mxu0
    %v2412 = vadd.f32 %v2363, %v2411
    %v2413 = vpop.f32.mrf.mxu0
    %v2414 = vadd.f32 %v2365, %v2413
    %2415 = vmatmul.bf16.gmra.mxu0 %v177
    %v2416 = vpop.f32.mrf.mxu0
    %v2417 = vadd.f32 %v2368, %v2416
    %v2418 = vpop.f32.mrf.mxu0
    %v2419 = vadd.f32 %v2370, %v2418
    %2420 = vmatmul.bf16.gmra.mxu0 %v183
    %v2421 = vpop.f32.mrf.mxu0
    %v2422 = vadd.f32 %v2373, %v2421
    %v2423 = vpop.f32.mrf.mxu0
    %v2424 = vadd.f32 %v2375, %v2423
    %2425 = vdwg.mxu0
    %2426 = vmatpush.bf16.msra.mxu0 %v1123
    %2427 = vmatpush.bf16.msra.mxu0 %v1119
    %2428 = vmatpush.bf16.msra.mxu0 %v1115
    %2429 = vmatpush.bf16.msra.mxu0 %v1111
    %2430 = vmatpush.bf16.msra.mxu0 %v1107
    %2431 = vmatpush.bf16.msra.mxu0 %v1103
    %2432 = vmatpush.bf16.msra.mxu0 %v1099
    %2433 = vmatpush.bf16.msra.mxu0 %v1095
    %2434 = vmatmul.bf16.gmra.mxu0 %v142
    %v2435 = vpop.f32.mrf.mxu0
    %v2436 = vadd.f32 %v2387, %v2435
    %v2437 = vpop.f32.mrf.mxu0
    %v2438 = vadd.f32 %v2389, %v2437
    %2439 = vmatmul.bf16.gmra.mxu0 %v148
    %v2440 = vpop.f32.mrf.mxu0
    %v2441 = vadd.f32 %v2392, %v2440
    %v2442 = vpop.f32.mrf.mxu0
    %v2443 = vadd.f32 %v2394, %v2442
    %2444 = vmatmul.bf16.gmra.mxu0 %v154
    %v2445 = vpop.f32.mrf.mxu0
    %v2446 = vadd.f32 %v2397, %v2445
    %v2447 = vpop.f32.mrf.mxu0
    %v2448 = vadd.f32 %v2399, %v2447
    %2449 = vmatmul.bf16.gmra.mxu0 %v160
    %v2450 = vpop.f32.mrf.mxu0
    %v2451 = vadd.f32 %v2402, %v2450
    %v2452 = vpop.f32.mrf.mxu0
    %v2453 = vadd.f32 %v2404, %v2452
    %2454 = vmatmul.bf16.gmra.mxu0 %v166
    %v2455 = vpop.f32.mrf.mxu0
    %v2456 = vadd.f32 %v2407, %v2455
    %v2457 = vpop.f32.mrf.mxu0
    %v2458 = vadd.f32 %v2409, %v2457
    %2459 = vmatmul.bf16.gmra.mxu0 %v172
    %v2460 = vpop.f32.mrf.mxu0
    %v2461 = vadd.f32 %v2412, %v2460
    %v2462 = vpop.f32.mrf.mxu0
    %v2463 = vadd.f32 %v2414, %v2462
    %2464 = vmatmul.bf16.gmra.mxu0 %v178
    %v2465 = vpop.f32.mrf.mxu0
    %v2466 = vadd.f32 %v2417, %v2465
    %v2467 = vpop.f32.mrf.mxu0
    %v2468 = vadd.f32 %v2419, %v2467
    %2469 = vmatmul.bf16.gmra.mxu0 %v184
    %v2470 = vpop.f32.mrf.mxu0
    %v2471 = vadd.f32 %v2422, %v2470
    %v2472 = vpop.f32.mrf.mxu0
    %v2473 = vadd.f32 %v2424, %v2472
    %2474 = vdwg.mxu0
    %2475 = vmatpush.bf16.msra.mxu0 %v1155
    %2476 = vmatpush.bf16.msra.mxu0 %v1151
    %2477 = vmatpush.bf16.msra.mxu0 %v1147
    %2478 = vmatpush.bf16.msra.mxu0 %v1143
    %2479 = vmatpush.bf16.msra.mxu0 %v1139
    %2480 = vmatpush.bf16.msra.mxu0 %v1135
    %2481 = vmatpush.bf16.msra.mxu0 %v1131
    %2482 = vmatpush.bf16.msra.mxu0 %v1127
    %2483 = vmatmul.bf16.gmra.mxu0 %v143
    %v2484 = vpop.f32.mrf.mxu0
    %v2485 = vadd.f32 %v2436, %v2484
    %v2486 = vpop.f32.mrf.mxu0
    %v2487 = vadd.f32 %v2438, %v2486
    %2488 = vmatmul.bf16.gmra.mxu0 %v149
    %v2489 = vpop.f32.mrf.mxu0
    %v2490 = vadd.f32 %v2441, %v2489
    %v2491 = vpop.f32.mrf.mxu0
    %v2492 = vadd.f32 %v2443, %v2491
    %2493 = vmatmul.bf16.gmra.mxu0 %v155
    %v2494 = vpop.f32.mrf.mxu0
    %v2495 = vadd.f32 %v2446, %v2494
    %v2496 = vpop.f32.mrf.mxu0
    %v2497 = vadd.f32 %v2448, %v2496
    %2498 = vmatmul.bf16.gmra.mxu0 %v161
    %v2499 = vpop.f32.mrf.mxu0
    %v2500 = vadd.f32 %v2451, %v2499
    %v2501 = vpop.f32.mrf.mxu0
    %v2502 = vadd.f32 %v2453, %v2501
    %2503 = vmatmul.bf16.gmra.mxu0 %v167
    %v2504 = vpop.f32.mrf.mxu0
    %v2505 = vadd.f32 %v2456, %v2504
    %v2506 = vpop.f32.mrf.mxu0
    %v2507 = vadd.f32 %v2458, %v2506
    %2508 = vmatmul.bf16.gmra.mxu0 %v173
    %v2509 = vpop.f32.mrf.mxu0
    %v2510 = vadd.f32 %v2461, %v2509
    %v2511 = vpop.f32.mrf.mxu0
    %v2512 = vadd.f32 %v2463, %v2511
    %2513 = vmatmul.bf16.gmra.mxu0 %v179
    %v2514 = vpop.f32.mrf.mxu0
    %v2515 = vadd.f32 %v2466, %v2514
    %v2516 = vpop.f32.mrf.mxu0
    %v2517 = vadd.f32 %v2468, %v2516
    %2518 = vmatmul.bf16.gmra.mxu0 %v185
    %v2519 = vpop.f32.mrf.mxu0
    %v2520 = vadd.f32 %v2471, %v2519
    %v2521 = vpop.f32.mrf.mxu0
    %v2522 = vadd.f32 %v2473, %v2521
    %2523 = vdwg.mxu0
    %v2524 = vmax.f32 %v1603, 0.0
    %v2525 = vmax.f32 %v1897, 0.0
    %v2526 = vmax.f32 %v2191, 0.0
    %v2527 = vmax.f32 %v2485, 0.0
    %v2528 = vmax.f32 %v1605, 0.0
    %v2529 = vmax.f32 %v1899, 0.0
    %v2530 = vmax.f32 %v2193, 0.0
    %v2531 = vmax.f32 %v2487, 0.0
    %v2532 = vmax.f32 %v1608, 0.0
    %v2533 = vmax.f32 %v1902, 0.0
    %v2534 = vmax.f32 %v2196, 0.0
    %v2535 = vmax.f32 %v2490, 0.0
    %v2536 = vmax.f32 %v1610, 0.0
    %v2537 = vmax.f32 %v1904, 0.0
    %v2538 = vmax.f32 %v2198, 0.0
    %v2539 = vmax.f32 %v2492, 0.0
    %v2540 = vmax.f32 %v1613, 0.0
    %v2541 = vmax.f32 %v1907, 0.0
    %v2542 = vmax.f32 %v2201, 0.0
    %v2543 = vmax.f32 %v2495, 0.0
    %v2544 = vmax.f32 %v1615, 0.0
    %v2545 = vmax.f32 %v1909, 0.0
    %v2546 = vmax.f32 %v2203, 0.0
    %v2547 = vmax.f32 %v2497, 0.0
    %v2548 = vmax.f32 %v1618, 0.0
    %v2549 = vmax.f32 %v1912, 0.0
    %v2550 = vmax.f32 %v2206, 0.0
    %v2551 = vmax.f32 %v2500, 0.0
    %v2552 = vmax.f32 %v1620, 0.0
    %v2553 = vmax.f32 %v1914, 0.0
    %v2554 = vmax.f32 %v2208, 0.0
    %v2555 = vmax.f32 %v2502, 0.0
    %v2556 = vmax.f32 %v1623, 0.0
    %v2557 = vmax.f32 %v1917, 0.0
    %v2558 = vmax.f32 %v2211, 0.0
    %v2559 = vmax.f32 %v2505, 0.0
    %v2560 = vmax.f32 %v1625, 0.0
    %v2561 = vmax.f32 %v1919, 0.0
    %v2562 = vmax.f32 %v2213, 0.0
    %v2563 = vmax.f32 %v2507, 0.0
    %v2564 = vmax.f32 %v1628, 0.0
    %v2565 = vmax.f32 %v1922, 0.0
    %v2566 = vmax.f32 %v2216, 0.0
    %v2567 = vmax.f32 %v2510, 0.0
    %v2568 = vmax.f32 %v1630, 0.0
    %v2569 = vmax.f32 %v1924, 0.0
    %v2570 = vmax.f32 %v2218, 0.0
    %v2571 = vmax.f32 %v2512, 0.0
    %v2572 = vmax.f32 %v1633, 0.0
    %v2573 = vmax.f32 %v1927, 0.0
    %v2574 = vmax.f32 %v2221, 0.0
    %v2575 = vmax.f32 %v2515, 0.0
    %v2576 = vmax.f32 %v1635, 0.0
    %v2577 = vmax.f32 %v1929, 0.0
    %v2578 = vmax.f32 %v2223, 0.0
    %v2579 = vmax.f32 %v2517, 0.0
    %v2580 = vmax.f32 %v1638, 0.0
    %v2581 = vmax.f32 %v1932, 0.0
    %v2582 = vmax.f32 %v2226, 0.0
    %v2583 = vmax.f32 %v2520, 0.0
    %v2584 = vmax.f32 %v1640, 0.0
    %v2585 = vmax.f32 %v1934, 0.0
    %v2586 = vmax.f32 %v2228, 0.0
    %v2587 = vmax.f32 %v2522, 0.0
    %v2588 = vpack.c.bf16 %v2528, %v2524
    %v2589 = vpack.c.bf16 %v2529, %v2525
    %v2590 = vpack.c.bf16 %v2530, %v2526
    %v2591 = vpack.c.bf16 %v2531, %v2527
    %v2592 = vpack.c.bf16 %v2536, %v2532
    %v2593 = vpack.c.bf16 %v2537, %v2533
    %v2594 = vpack.c.bf16 %v2538, %v2534
    %v2595 = vpack.c.bf16 %v2539, %v2535
    %v2596 = vpack.c.bf16 %v2544, %v2540
    %v2597 = vpack.c.bf16 %v2545, %v2541
    %v2598 = vpack.c.bf16 %v2546, %v2542
    %v2599 = vpack.c.bf16 %v2547, %v2543
    %v2600 = vpack.c.bf16 %v2552, %v2548
    %v2601 = vpack.c.bf16 %v2553, %v2549
    %v2602 = vpack.c.bf16 %v2554, %v2550
    %v2603 = vpack.c.bf16 %v2555, %v2551
    %v2604 = vpack.c.bf16 %v2560, %v2556
    %v2605 = vpack.c.bf16 %v2561, %v2557
    %v2606 = vpack.c.bf16 %v2562, %v2558
    %v2607 = vpack.c.bf16 %v2563, %v2559
    %v2608 = vpack.c.bf16 %v2568, %v2564
    %v2609 = vpack.c.bf16 %v2569, %v2565
    %v2610 = vpack.c.bf16 %v2570, %v2566
    %v2611 = vpack.c.bf16 %v2571, %v2567
    %v2612 = vpack.c.bf16 %v2576, %v2572
    %v2613 = vpack.c.bf16 %v2577, %v2573
    %v2614 = vpack.c.bf16 %v2578, %v2574
    %v2615 = vpack.c.bf16 %v2579, %v2575
    %v2616 = vpack.c.bf16 %v2584, %v2580
    %v2617 = vpack.c.bf16 %v2585, %v2581
    %v2618 = vpack.c.bf16 %v2586, %v2582
    %v2619 = vpack.c.bf16 %v2587, %v2583
    %v2620 = vld [vmem:[%s3] sm:$0xff]
    %v2621 = vld [vmem:[%s3 + $0x8] sm:$0xff]
    %v2622 = vld [vmem:[%s3 + $0x10] sm:$0xff]
    %v2623 = vld [vmem:[%s3 + $0x18] sm:$0xff]
    %v2624 = vld [vmem:[%s3 + $0x20] sm:$0xff]
    %v2625 = vld [vmem:[%s3 + $0x28] sm:$0xff]
    %v2626 = vld [vmem:[%s3 + $0x30] sm:$0xff]
    %v2627 = vld [vmem:[%s3 + $0x38] sm:$0xff]
    %v2628 = vld [vmem:[%s3 + $0x40] sm:$0xff]
    %v2629 = vld [vmem:[%s3 + $0x48] sm:$0xff]
    %v2630 = vld [vmem:[%s3 + $0x50] sm:$0xff]
    %v2631 = vld [vmem:[%s3 + $0x58] sm:$0xff]
    %v2632 = vld [vmem:[%s3 + $0x60] sm:$0xff]
    %v2633 = vld [vmem:[%s3 + $0x68] sm:$0xff]
    %v2634 = vld [vmem:[%s3 + $0x70] sm:$0xff]
    %v2635 = vld [vmem:[%s3 + $0x78] sm:$0xff]
    %v2636 = vld [vmem:[%s3 + $0x80] sm:$0xff]
    %v2637 = vld [vmem:[%s3 + $0x88] sm:$0xff]
    %v2638 = vld [vmem:[%s3 + $0x90] sm:$0xff]
    %v2639 = vld [vmem:[%s3 + $0x98] sm:$0xff]
    %v2640 = vld [vmem:[%s3 + $0xa0] sm:$0xff]
    %v2641 = vld [vmem:[%s3 + $0xa8] sm:$0xff]
    %v2642 = vld [vmem:[%s3 + $0xb0] sm:$0xff]
    %v2643 = vld [vmem:[%s3 + $0xb8] sm:$0xff]
    %v2644 = vld [vmem:[%s3 + $0xc0] sm:$0xff]
    %v2645 = vld [vmem:[%s3 + $0xc8] sm:$0xff]
    %v2646 = vld [vmem:[%s3 + $0xd0] sm:$0xff]
    %v2647 = vld [vmem:[%s3 + $0xd8] sm:$0xff]
    %v2648 = vld [vmem:[%s3 + $0xe0] sm:$0xff]
    %v2649 = vld [vmem:[%s3 + $0xe8] sm:$0xff]
    %v2650 = vld [vmem:[%s3 + $0xf0] sm:$0xff]
    %v2651 = vld [vmem:[%s3 + $0xf8] sm:$0xff]
    %v2652 = vld [vmem:[%s3 + $0x100] sm:$0xff]
    %v2653 = vld [vmem:[%s3 + $0x108] sm:$0xff]
    %v2654 = vld [vmem:[%s3 + $0x110] sm:$0xff]
    %v2655 = vld [vmem:[%s3 + $0x118] sm:$0xff]
    %v2656 = vld [vmem:[%s3 + $0x120] sm:$0xff]
    %v2657 = vld [vmem:[%s3 + $0x128] sm:$0xff]
    %v2658 = vld [vmem:[%s3 + $0x130] sm:$0xff]
    %v2659 = vld [vmem:[%s3 + $0x138] sm:$0xff]
    %v2660 = vld [vmem:[%s3 + $0x140] sm:$0xff]
    %v2661 = vld [vmem:[%s3 + $0x148] sm:$0xff]
    %v2662 = vld [vmem:[%s3 + $0x150] sm:$0xff]
    %v2663 = vld [vmem:[%s3 + $0x158] sm:$0xff]
    %v2664 = vld [vmem:[%s3 + $0x160] sm:$0xff]
    %v2665 = vld [vmem:[%s3 + $0x168] sm:$0xff]
    %v2666 = vld [vmem:[%s3 + $0x170] sm:$0xff]
    %v2667 = vld [vmem:[%s3 + $0x178] sm:$0xff]
    %v2668 = vld [vmem:[%s3 + $0x180] sm:$0xff]
    %v2669 = vld [vmem:[%s3 + $0x188] sm:$0xff]
    %v2670 = vld [vmem:[%s3 + $0x190] sm:$0xff]
    %v2671 = vld [vmem:[%s3 + $0x198] sm:$0xff]
    %v2672 = vld [vmem:[%s3 + $0x1a0] sm:$0xff]
    %v2673 = vld [vmem:[%s3 + $0x1a8] sm:$0xff]
    %v2674 = vld [vmem:[%s3 + $0x1b0] sm:$0xff]
    %v2675 = vld [vmem:[%s3 + $0x1b8] sm:$0xff]
    %v2676 = vld [vmem:[%s3 + $0x1c0] sm:$0xff]
    %v2677 = vld [vmem:[%s3 + $0x1c8] sm:$0xff]
    %v2678 = vld [vmem:[%s3 + $0x1d0] sm:$0xff]
    %v2679 = vld [vmem:[%s3 + $0x1d8] sm:$0xff]
    %v2680 = vld [vmem:[%s3 + $0x1e0] sm:$0xff]
    %v2681 = vld [vmem:[%s3 + $0x1e8] sm:$0xff]
    %v2682 = vld [vmem:[%s3 + $0x1f0] sm:$0xff]
    %v2683 = vld [vmem:[%s3 + $0x1f8] sm:$0xff]
    %v2684 = vld [vmem:[%s4] sm:$0x3]
    %v2686 = vperm.slane %v2684, 0
    %v2687 = vperm.slane %v2684, 1
    %v2754 = vunpack.c.l.b16 %v2620
    %v2755 = vunpack.c.h.b16 %v2620
    %v2756 = vunpack.c.l.b16 %v2621
    %v2757 = vunpack.c.h.b16 %v2621
    %v2758 = vunpack.c.l.b16 %v2622
    %v2759 = vunpack.c.h.b16 %v2622
    %v2760 = vunpack.c.l.b16 %v2623
    %v2761 = vunpack.c.h.b16 %v2623
    %v2762 = vunpack.c.l.b16 %v2624
    %v2763 = vunpack.c.h.b16 %v2624
    %v2764 = vunpack.c.l.b16 %v2625
    %v2765 = vunpack.c.h.b16 %v2625
    %v2766 = vunpack.c.l.b16 %v2626
    %v2767 = vunpack.c.h.b16 %v2626
    %v2768 = vunpack.c.l.b16 %v2627
    %v2769 = vunpack.c.h.b16 %v2627
    %v2770 = vunpack.c.l.b16 %v2628
    %v2771 = vunpack.c.h.b16 %v2628
    %v2772 = vunpack.c.l.b16 %v2629
    %v2773 = vunpack.c.h.b16 %v2629
    %v2774 = vunpack.c.l.b16 %v2630
    %v2775 = vunpack.c.h.b16 %v2630
    %v2776 = vunpack.c.l.b16 %v2631
    %v2777 = vunpack.c.h.b16 %v2631
    %v2778 = vunpack.c.l.b16 %v2632
    %v2779 = vunpack.c.h.b16 %v2632
    %v2780 = vunpack.c.l.b16 %v2633
    %v2781 = vunpack.c.h.b16 %v2633
    %v2782 = vunpack.c.l.b16 %v2634
    %v2783 = vunpack.c.h.b16 %v2634
    %v2784 = vunpack.c.l.b16 %v2635
    %v2785 = vunpack.c.h.b16 %v2635
    %v2786 = vunpack.c.l.b16 %v2636
    %v2787 = vunpack.c.h.b16 %v2636
    %v2788 = vunpack.c.l.b16 %v2637
    %v2789 = vunpack.c.h.b16 %v2637
    %v2790 = vunpack.c.l.b16 %v2638
    %v2791 = vunpack.c.h.b16 %v2638
    %v2792 = vunpack.c.l.b16 %v2639
    %v2793 = vunpack.c.h.b16 %v2639
    %v2794 = vunpack.c.l.b16 %v2640
    %v2795 = vunpack.c.h.b16 %v2640
    %v2796 = vunpack.c.l.b16 %v2641
    %v2797 = vunpack.c.h.b16 %v2641
    %v2798 = vunpack.c.l.b16 %v2642
    %v2799 = vunpack.c.h.b16 %v2642
    %v2800 = vunpack.c.l.b16 %v2643
    %v2801 = vunpack.c.h.b16 %v2643
    %v2802 = vunpack.c.l.b16 %v2644
    %v2803 = vunpack.c.h.b16 %v2644
    %v2804 = vunpack.c.l.b16 %v2645
    %v2805 = vunpack.c.h.b16 %v2645
    %v2806 = vunpack.c.l.b16 %v2646
    %v2807 = vunpack.c.h.b16 %v2646
    %v2808 = vunpack.c.l.b16 %v2647
    %v2809 = vunpack.c.h.b16 %v2647
    %v2810 = vunpack.c.l.b16 %v2648
    %v2811 = vunpack.c.h.b16 %v2648
    %v2812 = vunpack.c.l.b16 %v2649
    %v2813 = vunpack.c.h.b16 %v2649
    %v2814 = vunpack.c.l.b16 %v2650
    %v2815 = vunpack.c.h.b16 %v2650
    %v2816 = vunpack.c.l.b16 %v2651
    %v2817 = vunpack.c.h.b16 %v2651
    %v2818 = vunpack.c.l.b16 %v2652
    %v2819 = vunpack.c.h.b16 %v2652
    %v2820 = vunpack.c.l.b16 %v2653
    %v2821 = vunpack.c.h.b16 %v2653
    %v2822 = vunpack.c.l.b16 %v2654
    %v2823 = vunpack.c.h.b16 %v2654
    %v2824 = vunpack.c.l.b16 %v2655
    %v2825 = vunpack.c.h.b16 %v2655
    %v2826 = vunpack.c.l.b16 %v2656
    %v2827 = vunpack.c.h.b16 %v2656
    %v2828 = vunpack.c.l.b16 %v2657
    %v2829 = vunpack.c.h.b16 %v2657
    %v2830 = vunpack.c.l.b16 %v2658
    %v2831 = vunpack.c.h.b16 %v2658
    %v2832 = vunpack.c.l.b16 %v2659
    %v2833 = vunpack.c.h.b16 %v2659
    %v2834 = vunpack.c.l.b16 %v2660
    %v2835 = vunpack.c.h.b16 %v2660
    %v2836 = vunpack.c.l.b16 %v2661
    %v2837 = vunpack.c.h.b16 %v2661
    %v2838 = vunpack.c.l.b16 %v2662
    %v2839 = vunpack.c.h.b16 %v2662
    %v2840 = vunpack.c.l.b16 %v2663
    %v2841 = vunpack.c.h.b16 %v2663
    %v2842 = vunpack.c.l.b16 %v2664
    %v2843 = vunpack.c.h.b16 %v2664
    %v2844 = vunpack.c.l.b16 %v2665
    %v2845 = vunpack.c.h.b16 %v2665
    %v2846 = vunpack.c.l.b16 %v2666
    %v2847 = vunpack.c.h.b16 %v2666
    %v2848 = vunpack.c.l.b16 %v2667
    %v2849 = vunpack.c.h.b16 %v2667
    %v2850 = vunpack.c.l.b16 %v2668
    %v2851 = vunpack.c.h.b16 %v2668
    %v2852 = vunpack.c.l.b16 %v2669
    %v2853 = vunpack.c.h.b16 %v2669
    %v2854 = vunpack.c.l.b16 %v2670
    %v2855 = vunpack.c.h.b16 %v2670
    %v2856 = vunpack.c.l.b16 %v2671
    %v2857 = vunpack.c.h.b16 %v2671
    %v2858 = vunpack.c.l.b16 %v2672
    %v2859 = vunpack.c.h.b16 %v2672
    %v2860 = vunpack.c.l.b16 %v2673
    %v2861 = vunpack.c.h.b16 %v2673
    %v2862 = vunpack.c.l.b16 %v2674
    %v2863 = vunpack.c.h.b16 %v2674
    %v2864 = vunpack.c.l.b16 %v2675
    %v2865 = vunpack.c.h.b16 %v2675
    %v2866 = vunpack.c.l.b16 %v2676
    %v2867 = vunpack.c.h.b16 %v2676
    %v2868 = vunpack.c.l.b16 %v2677
    %v2869 = vunpack.c.h.b16 %v2677
    %v2870 = vunpack.c.l.b16 %v2678
    %v2871 = vunpack.c.h.b16 %v2678
    %v2872 = vunpack.c.l.b16 %v2679
    %v2873 = vunpack.c.h.b16 %v2679
    %v2874 = vunpack.c.l.b16 %v2680
    %v2875 = vunpack.c.h.b16 %v2680
    %v2876 = vunpack.c.l.b16 %v2681
    %v2877 = vunpack.c.h.b16 %v2681
    %v2878 = vunpack.c.l.b16 %v2682
    %v2879 = vunpack.c.h.b16 %v2682
    %v2880 = vunpack.c.l.b16 %v2683
    %v2881 = vunpack.c.h.b16 %v2683
    %v2882 = vpack.c.b16 %v2756, %v2754
    %v2883 = vpack.c.b16 %v2757, %v2755
    %v2884 = vpack.c.b16 %v2760, %v2758
    %v2885 = vpack.c.b16 %v2761, %v2759
    %v2886 = vpack.c.b16 %v2764, %v2762
    %v2887 = vpack.c.b16 %v2765, %v2763
    %v2888 = vpack.c.b16 %v2768, %v2766
    %v2889 = vpack.c.b16 %v2769, %v2767
    %v2890 = vpack.c.b16 %v2772, %v2770
    %v2891 = vpack.c.b16 %v2773, %v2771
    %v2892 = vpack.c.b16 %v2776, %v2774
    %v2893 = vpack.c.b16 %v2777, %v2775
    %v2894 = vpack.c.b16 %v2780, %v2778
    %v2895 = vpack.c.b16 %v2781, %v2779
    %v2896 = vpack.c.b16 %v2784, %v2782
    %v2897 = vpack.c.b16 %v2785, %v2783
    %v2898 = vpack.c.b16 %v2788, %v2786
    %v2899 = vpack.c.b16 %v2789, %v2787
    %v2900 = vpack.c.b16 %v2792, %v2790
    %v2901 = vpack.c.b16 %v2793, %v2791
    %v2902 = vpack.c.b16 %v2796, %v2794
    %v2903 = vpack.c.b16 %v2797, %v2795
    %v2904 = vpack.c.b16 %v2800, %v2798
    %v2905 = vpack.c.b16 %v2801, %v2799
    %v2906 = vpack.c.b16 %v2804, %v2802
    %v2907 = vpack.c.b16 %v2805, %v2803
    %v2908 = vpack.c.b16 %v2808, %v2806
    %v2909 = vpack.c.b16 %v2809, %v2807
    %v2910 = vpack.c.b16 %v2812, %v2810
    %v2911 = vpack.c.b16 %v2813, %v2811
    %v2912 = vpack.c.b16 %v2816, %v2814
    %v2913 = vpack.c.b16 %v2817, %v2815
    %v2914 = vpack.c.b16 %v2820, %v2818
    %v2915 = vpack.c.b16 %v2821, %v2819
    %v2916 = vpack.c.b16 %v2824, %v2822
    %v2917 = vpack.c.b16 %v2825, %v2823
    %v2918 = vpack.c.b16 %v2828, %v2826
    %v2919 = vpack.c.b16 %v2829, %v2827
    %v2920 = vpack.c.b16 %v2832, %v2830
    %v2921 = vpack.c.b16 %v2833, %v2831
    %v2922 = vpack.c.b16 %v2836, %v2834
    %v2923 = vpack.c.b16 %v2837, %v2835
    %v2924 = vpack.c.b16 %v2840, %v2838
    %v2925 = vpack.c.b16 %v2841, %v2839
    %v2926 = vpack.c.b16 %v2844, %v2842
    %v2927 = vpack.c.b16 %v2845, %v2843
    %v2928 = vpack.c.b16 %v2848, %v2846
    %v2929 = vpack.c.b16 %v2849, %v2847
    %v2930 = vpack.c.b16 %v2852, %v2850
    %v2931 = vpack.c.b16 %v2853, %v2851
    %v2932 = vpack.c.b16 %v2856, %v2854
    %v2933 = vpack.c.b16 %v2857, %v2855
    %v2934 = vpack.c.b16 %v2860, %v2858
    %v2935 = vpack.c.b16 %v2861, %v2859
    %v2936 = vpack.c.b16 %v2864, %v2862
    %v2937 = vpack.c.b16 %v2865, %v2863
    %v2938 = vpack.c.b16 %v2868, %v2866
    %v2939 = vpack.c.b16 %v2869, %v2867
    %v2940 = vpack.c.b16 %v2872, %v2870
    %v2941 = vpack.c.b16 %v2873, %v2871
    %v2942 = vpack.c.b16 %v2876, %v2874
    %v2943 = vpack.c.b16 %v2877, %v2875
    %v2944 = vpack.c.b16 %v2880, %v2878
    %v2945 = vpack.c.b16 %v2881, %v2879
    %3010 = vmatpush.bf16.msra.mxu0 %v2896
    %3011 = vmatpush.bf16.msra.mxu0 %v2894
    %3012 = vmatpush.bf16.msra.mxu0 %v2892
    %3013 = vmatpush.bf16.msra.mxu0 %v2890
    %3014 = vmatpush.bf16.msra.mxu0 %v2888
    %3015 = vmatpush.bf16.msra.mxu0 %v2886
    %3016 = vmatpush.bf16.msra.mxu0 %v2884
    %3017 = vmatpush.bf16.msra.mxu0 %v2882
    %3018 = vmatmul.bf16.gmra.mxu0 %v2588
    %v3019 = vpop.f32.mrf.mxu0
    %v3020 = vadd.f32 %v2686, %v3019
    %v3021 = vpop.f32.mrf.mxu0
    %v3022 = vadd.f32 %v2686, %v3021
    %3023 = vmatmul.bf16.gmra.mxu0 %v2592
    %v3024 = vpop.f32.mrf.mxu0
    %v3025 = vadd.f32 %v2686, %v3024
    %v3026 = vpop.f32.mrf.mxu0
    %v3027 = vadd.f32 %v2686, %v3026
    %3028 = vmatmul.bf16.gmra.mxu0 %v2596
    %v3029 = vpop.f32.mrf.mxu0
    %v3030 = vadd.f32 %v2686, %v3029
    %v3031 = vpop.f32.mrf.mxu0
    %v3032 = vadd.f32 %v2686, %v3031
    %3033 = vmatmul.bf16.gmra.mxu0 %v2600
    %v3034 = vpop.f32.mrf.mxu0
    %v3035 = vadd.f32 %v2686, %v3034
    %v3036 = vpop.f32.mrf.mxu0
    %v3037 = vadd.f32 %v2686, %v3036
    %3038 = vmatmul.bf16.gmra.mxu0 %v2604
    %v3039 = vpop.f32.mrf.mxu0
    %v3040 = vadd.f32 %v2686, %v3039
    %v3041 = vpop.f32.mrf.mxu0
    %v3042 = vadd.f32 %v2686, %v3041
    %3043 = vmatmul.bf16.gmra.mxu0 %v2608
    %v3044 = vpop.f32.mrf.mxu0
    %v3045 = vadd.f32 %v2686, %v3044
    %v3046 = vpop.f32.mrf.mxu0
    %v3047 = vadd.f32 %v2686, %v3046
    %3048 = vmatmul.bf16.gmra.mxu0 %v2612
    %v3049 = vpop.f32.mrf.mxu0
    %v3050 = vadd.f32 %v2686, %v3049
    %v3051 = vpop.f32.mrf.mxu0
    %v3052 = vadd.f32 %v2686, %v3051
    %3053 = vmatmul.bf16.gmra.mxu0 %v2616
    %v3054 = vpop.f32.mrf.mxu0
    %v3055 = vadd.f32 %v2686, %v3054
    %v3056 = vpop.f32.mrf.mxu0
    %v3057 = vadd.f32 %v2686, %v3056
    %3058 = vdwg.mxu0
    %3059 = vmatpush.bf16.msra.mxu0 %v2912
    %3060 = vmatpush.bf16.msra.mxu0 %v2910
    %3061 = vmatpush.bf16.msra.mxu0 %v2908
    %3062 = vmatpush.bf16.msra.mxu0 %v2906
    %3063 = vmatpush.bf16.msra.mxu0 %v2904
    %3064 = vmatpush.bf16.msra.mxu0 %v2902
    %3065 = vmatpush.bf16.msra.mxu0 %v2900
    %3066 = vmatpush.bf16.msra.mxu0 %v2898
    %3067 = vmatmul.bf16.gmra.mxu0 %v2589
    %v3068 = vpop.f32.mrf.mxu0
    %v3069 = vadd.f32 %v3020, %v3068
    %v3070 = vpop.f32.mrf.mxu0
    %v3071 = vadd.f32 %v3022, %v3070
    %3072 = vmatmul.bf16.gmra.mxu0 %v2593
    %v3073 = vpop.f32.mrf.mxu0
    %v3074 = vadd.f32 %v3025, %v3073
    %v3075 = vpop.f32.mrf.mxu0
    %v3076 = vadd.f32 %v3027, %v3075
    %3077 = vmatmul.bf16.gmra.mxu0 %v2597
    %v3078 = vpop.f32.mrf.mxu0
    %v3079 = vadd.f32 %v3030, %v3078
    %v3080 = vpop.f32.mrf.mxu0
    %v3081 = vadd.f32 %v3032, %v3080
    %3082 = vmatmul.bf16.gmra.mxu0 %v2601
    %v3083 = vpop.f32.mrf.mxu0
    %v3084 = vadd.f32 %v3035, %v3083
    %v3085 = vpop.f32.mrf.mxu0
    %v3086 = vadd.f32 %v3037, %v3085
    %3087 = vmatmul.bf16.gmra.mxu0 %v2605
    %v3088 = vpop.f32.mrf.mxu0
    %v3089 = vadd.f32 %v3040, %v3088
    %v3090 = vpop.f32.mrf.mxu0
    %v3091 = vadd.f32 %v3042, %v3090
    %3092 = vmatmul.bf16.gmra.mxu0 %v2609
    %v3093 = vpop.f32.mrf.mxu0
    %v3094 = vadd.f32 %v3045, %v3093
    %v3095 = vpop.f32.mrf.mxu0
    %v3096 = vadd.f32 %v3047, %v3095
    %3097 = vmatmul.bf16.gmra.mxu0 %v2613
    %v3098 = vpop.f32.mrf.mxu0
    %v3099 = vadd.f32 %v3050, %v3098
    %v3100 = vpop.f32.mrf.mxu0
    %v3101 = vadd.f32 %v3052, %v3100
    %3102 = vmatmul.bf16.gmra.mxu0 %v2617
    %v3103 = vpop.f32.mrf.mxu0
    %v3104 = vadd.f32 %v3055, %v3103
    %v3105 = vpop.f32.mrf.mxu0
    %v3106 = vadd.f32 %v3057, %v3105
    %3107 = vdwg.mxu0
    %3108 = vmatpush.bf16.msra.mxu0 %v2928
    %3109 = vmatpush.bf16.msra.mxu0 %v2926
    %3110 = vmatpush.bf16.msra.mxu0 %v2924
    %3111 = vmatpush.bf16.msra.mxu0 %v2922
    %3112 = vmatpush.bf16.msra.mxu0 %v2920
    %3113 = vmatpush.bf16.msra.mxu0 %v2918
    %3114 = vmatpush.bf16.msra.mxu0 %v2916
    %3115 = vmatpush.bf16.msra.mxu0 %v2914
    %3116 = vmatmul.bf16.gmra.mxu0 %v2590
    %v3117 = vpop.f32.mrf.mxu0
    %v3118 = vadd.f32 %v3069, %v3117
    %v3119 = vpop.f32.mrf.mxu0
    %v3120 = vadd.f32 %v3071, %v3119
    %3121 = vmatmul.bf16.gmra.mxu0 %v2594
    %v3122 = vpop.f32.mrf.mxu0
    %v3123 = vadd.f32 %v3074, %v3122
    %v3124 = vpop.f32.mrf.mxu0
    %v3125 = vadd.f32 %v3076, %v3124
    %3126 = vmatmul.bf16.gmra.mxu0 %v2598
    %v3127 = vpop.f32.mrf.mxu0
    %v3128 = vadd.f32 %v3079, %v3127
    %v3129 = vpop.f32.mrf.mxu0
    %v3130 = vadd.f32 %v3081, %v3129
    %3131 = vmatmul.bf16.gmra.mxu0 %v2602
    %v3132 = vpop.f32.mrf.mxu0
    %v3133 = vadd.f32 %v3084, %v3132
    %v3134 = vpop.f32.mrf.mxu0
    %v3135 = vadd.f32 %v3086, %v3134
    %3136 = vmatmul.bf16.gmra.mxu0 %v2606
    %v3137 = vpop.f32.mrf.mxu0
    %v3138 = vadd.f32 %v3089, %v3137
    %v3139 = vpop.f32.mrf.mxu0
    %v3140 = vadd.f32 %v3091, %v3139
    %3141 = vmatmul.bf16.gmra.mxu0 %v2610
    %v3142 = vpop.f32.mrf.mxu0
    %v3143 = vadd.f32 %v3094, %v3142
    %v3144 = vpop.f32.mrf.mxu0
    %v3145 = vadd.f32 %v3096, %v3144
    %3146 = vmatmul.bf16.gmra.mxu0 %v2614
    %v3147 = vpop.f32.mrf.mxu0
    %v3148 = vadd.f32 %v3099, %v3147
    %v3149 = vpop.f32.mrf.mxu0
    %v3150 = vadd.f32 %v3101, %v3149
    %3151 = vmatmul.bf16.gmra.mxu0 %v2618
    %v3152 = vpop.f32.mrf.mxu0
    %v3153 = vadd.f32 %v3104, %v3152
    %v3154 = vpop.f32.mrf.mxu0
    %v3155 = vadd.f32 %v3106, %v3154
    %3156 = vdwg.mxu0
    %3157 = vmatpush.bf16.msra.mxu0 %v2944
    %3158 = vmatpush.bf16.msra.mxu0 %v2942
    %3159 = vmatpush.bf16.msra.mxu0 %v2940
    %3160 = vmatpush.bf16.msra.mxu0 %v2938
    %3161 = vmatpush.bf16.msra.mxu0 %v2936
    %3162 = vmatpush.bf16.msra.mxu0 %v2934
    %3163 = vmatpush.bf16.msra.mxu0 %v2932
    %3164 = vmatpush.bf16.msra.mxu0 %v2930
    %3165 = vmatmul.bf16.gmra.mxu0 %v2591
    %v3166 = vpop.f32.mrf.mxu0
    %v3167 = vadd.f32 %v3118, %v3166
    %v3168 = vpop.f32.mrf.mxu0
    %v3169 = vadd.f32 %v3120, %v3168
    %3170 = vmatmul.bf16.gmra.mxu0 %v2595
    %v3171 = vpop.f32.mrf.mxu0
    %v3172 = vadd.f32 %v3123, %v3171
    %v3173 = vpop.f32.mrf.mxu0
    %v3174 = vadd.f32 %v3125, %v3173
    %3175 = vmatmul.bf16.gmra.mxu0 %v2599
    %v3176 = vpop.f32.mrf.mxu0
    %v3177 = vadd.f32 %v3128, %v3176
    %v3178 = vpop.f32.mrf.mxu0
    %v3179 = vadd.f32 %v3130, %v3178
    %3180 = vmatmul.bf16.gmra.mxu0 %v2603
    %v3181 = vpop.f32.mrf.mxu0
    %v3182 = vadd.f32 %v3133, %v3181
    %v3183 = vpop.f32.mrf.mxu0
    %v3184 = vadd.f32 %v3135, %v3183
    %3185 = vmatmul.bf16.gmra.mxu0 %v2607
    %v3186 = vpop.f32.mrf.mxu0
    %v3187 = vadd.f32 %v3138, %v3186
    %v3188 = vpop.f32.mrf.mxu0
    %v3189 = vadd.f32 %v3140, %v3188
    %3190 = vmatmul.bf16.gmra.mxu0 %v2611
    %v3191 = vpop.f32.mrf.mxu0
    %v3192 = vadd.f32 %v3143, %v3191
    %v3193 = vpop.f32.mrf.mxu0
    %v3194 = vadd.f32 %v3145, %v3193
    %3195 = vmatmul.bf16.gmra.mxu0 %v2615
    %v3196 = vpop.f32.mrf.mxu0
    %v3197 = vadd.f32 %v3148, %v3196
    %v3198 = vpop.f32.mrf.mxu0
    %v3199 = vadd.f32 %v3150, %v3198
    %3200 = vmatmul.bf16.gmra.mxu0 %v2619
    %v3201 = vpop.f32.mrf.mxu0
    %v3202 = vadd.f32 %v3153, %v3201
    %v3203 = vpop.f32.mrf.mxu0
    %v3204 = vadd.f32 %v3155, %v3203
    %3205 = vdwg.mxu0
    %3206 = vmatpush.bf16.msra.mxu0 %v2897
    %3207 = vmatpush.bf16.msra.mxu0 %v2895
    %3208 = vmatpush.bf16.msra.mxu0 %v2893
    %3209 = vmatpush.bf16.msra.mxu0 %v2891
    %3210 = vmatpush.bf16.msra.mxu0 %v2889
    %3211 = vmatpush.bf16.msra.mxu0 %v2887
    %3212 = vmatpush.bf16.msra.mxu0 %v2885
    %3213 = vmatpush.bf16.msra.mxu0 %v2883
    %3214 = vmatmul.bf16.gmra.mxu0 %v2588
    %v3215 = vpop.f32.mrf.mxu0
    %v3216 = vadd.f32 %v2687, %v3215
    %v3217 = vpop.f32.mrf.mxu0
    %v3218 = vadd.f32 %v2687, %v3217
    %3219 = vmatmul.bf16.gmra.mxu0 %v2592
    %v3220 = vpop.f32.mrf.mxu0
    %v3221 = vadd.f32 %v2687, %v3220
    %v3222 = vpop.f32.mrf.mxu0
    %v3223 = vadd.f32 %v2687, %v3222
    %3224 = vmatmul.bf16.gmra.mxu0 %v2596
    %v3225 = vpop.f32.mrf.mxu0
    %v3226 = vadd.f32 %v2687, %v3225
    %v3227 = vpop.f32.mrf.mxu0
    %v3228 = vadd.f32 %v2687, %v3227
    %3229 = vmatmul.bf16.gmra.mxu0 %v2600
    %v3230 = vpop.f32.mrf.mxu0
    %v3231 = vadd.f32 %v2687, %v3230
    %v3232 = vpop.f32.mrf.mxu0
    %v3233 = vadd.f32 %v2687, %v3232
    %3234 = vmatmul.bf16.gmra.mxu0 %v2604
    %v3235 = vpop.f32.mrf.mxu0
    %v3236 = vadd.f32 %v2687, %v3235
    %v3237 = vpop.f32.mrf.mxu0
    %v3238 = vadd.f32 %v2687, %v3237
    %3239 = vmatmul.bf16.gmra.mxu0 %v2608
    %v3240 = vpop.f32.mrf.mxu0
    %v3241 = vadd.f32 %v2687, %v3240
    %v3242 = vpop.f32.mrf.mxu0
    %v3243 = vadd.f32 %v2687, %v3242
    %3244 = vmatmul.bf16.gmra.mxu0 %v2612
    %v3245 = vpop.f32.mrf.mxu0
    %v3246 = vadd.f32 %v2687, %v3245
    %v3247 = vpop.f32.mrf.mxu0
    %v3248 = vadd.f32 %v2687, %v3247
    %3249 = vmatmul.bf16.gmra.mxu0 %v2616
    %v3250 = vpop.f32.mrf.mxu0
    %v3251 = vadd.f32 %v2687, %v3250
    %v3252 = vpop.f32.mrf.mxu0
    %v3253 = vadd.f32 %v2687, %v3252
    %3254 = vdwg.mxu0
    %3255 = vmatpush.bf16.msra.mxu0 %v2913
    %3256 = vmatpush.bf16.msra.mxu0 %v2911
    %3257 = vmatpush.bf16.msra.mxu0 %v2909
    %3258 = vmatpush.bf16.msra.mxu0 %v2907
    %3259 = vmatpush.bf16.msra.mxu0 %v2905
    %3260 = vmatpush.bf16.msra.mxu0 %v2903
    %3261 = vmatpush.bf16.msra.mxu0 %v2901
    %3262 = vmatpush.bf16.msra.mxu0 %v2899
    %3263 = vmatmul.bf16.gmra.mxu0 %v2589
    %v3264 = vpop.f32.mrf.mxu0
    %v3265 = vadd.f32 %v3216, %v3264
    %v3266 = vpop.f32.mrf.mxu0
    %v3267 = vadd.f32 %v3218, %v3266
    %3268 = vmatmul.bf16.gmra.mxu0 %v2593
    %v3269 = vpop.f32.mrf.mxu0
    %v3270 = vadd.f32 %v3221, %v3269
    %v3271 = vpop.f32.mrf.mxu0
    %v3272 = vadd.f32 %v3223, %v3271
    %3273 = vmatmul.bf16.gmra.mxu0 %v2597
    %v3274 = vpop.f32.mrf.mxu0
    %v3275 = vadd.f32 %v3226, %v3274
    %v3276 = vpop.f32.mrf.mxu0
    %v3277 = vadd.f32 %v3228, %v3276
    %3278 = vmatmul.bf16.gmra.mxu0 %v2601
    %v3279 = vpop.f32.mrf.mxu0
    %v3280 = vadd.f32 %v3231, %v3279
    %v3281 = vpop.f32.mrf.mxu0
    %v3282 = vadd.f32 %v3233, %v3281
    %3283 = vmatmul.bf16.gmra.mxu0 %v2605
    %v3284 = vpop.f32.mrf.mxu0
    %v3285 = vadd.f32 %v3236, %v3284
    %v3286 = vpop.f32.mrf.mxu0
    %v3287 = vadd.f32 %v3238, %v3286
    %3288 = vmatmul.bf16.gmra.mxu0 %v2609
    %v3289 = vpop.f32.mrf.mxu0
    %v3290 = vadd.f32 %v3241, %v3289
    %v3291 = vpop.f32.mrf.mxu0
    %v3292 = vadd.f32 %v3243, %v3291
    %3293 = vmatmul.bf16.gmra.mxu0 %v2613
    %v3294 = vpop.f32.mrf.mxu0
    %v3295 = vadd.f32 %v3246, %v3294
    %v3296 = vpop.f32.mrf.mxu0
    %v3297 = vadd.f32 %v3248, %v3296
    %3298 = vmatmul.bf16.gmra.mxu0 %v2617
    %v3299 = vpop.f32.mrf.mxu0
    %v3300 = vadd.f32 %v3251, %v3299
    %v3301 = vpop.f32.mrf.mxu0
    %v3302 = vadd.f32 %v3253, %v3301
    %3303 = vdwg.mxu0
    %3304 = vmatpush.bf16.msra.mxu0 %v2929
    %3305 = vmatpush.bf16.msra.mxu0 %v2927
    %3306 = vmatpush.bf16.msra.mxu0 %v2925
    %3307 = vmatpush.bf16.msra.mxu0 %v2923
    %3308 = vmatpush.bf16.msra.mxu0 %v2921
    %3309 = vmatpush.bf16.msra.mxu0 %v2919
    %3310 = vmatpush.bf16.msra.mxu0 %v2917
    %3311 = vmatpush.bf16.msra.mxu0 %v2915
    %3312 = vmatmul.bf16.gmra.mxu0 %v2590
    %v3313 = vpop.f32.mrf.mxu0
    %v3314 = vadd.f32 %v3265, %v3313
    %v3315 = vpop.f32.mrf.mxu0
    %v3316 = vadd.f32 %v3267, %v3315
    %3317 = vmatmul.bf16.gmra.mxu0 %v2594
    %v3318 = vpop.f32.mrf.mxu0
    %v3319 = vadd.f32 %v3270, %v3318
    %v3320 = vpop.f32.mrf.mxu0
    %v3321 = vadd.f32 %v3272, %v3320
    %3322 = vmatmul.bf16.gmra.mxu0 %v2598
    %v3323 = vpop.f32.mrf.mxu0
    %v3324 = vadd.f32 %v3275, %v3323
    %v3325 = vpop.f32.mrf.mxu0
    %v3326 = vadd.f32 %v3277, %v3325
    %3327 = vmatmul.bf16.gmra.mxu0 %v2602
    %v3328 = vpop.f32.mrf.mxu0
    %v3329 = vadd.f32 %v3280, %v3328
    %v3330 = vpop.f32.mrf.mxu0
    %v3331 = vadd.f32 %v3282, %v3330
    %3332 = vmatmul.bf16.gmra.mxu0 %v2606
    %v3333 = vpop.f32.mrf.mxu0
    %v3334 = vadd.f32 %v3285, %v3333
    %v3335 = vpop.f32.mrf.mxu0
    %v3336 = vadd.f32 %v3287, %v3335
    %3337 = vmatmul.bf16.gmra.mxu0 %v2610
    %v3338 = vpop.f32.mrf.mxu0
    %v3339 = vadd.f32 %v3290, %v3338
    %v3340 = vpop.f32.mrf.mxu0
    %v3341 = vadd.f32 %v3292, %v3340
    %3342 = vmatmul.bf16.gmra.mxu0 %v2614
    %v3343 = vpop.f32.mrf.mxu0
    %v3344 = vadd.f32 %v3295, %v3343
    %v3345 = vpop.f32.mrf.mxu0
    %v3346 = vadd.f32 %v3297, %v3345
    %3347 = vmatmul.bf16.gmra.mxu0 %v2618
    %v3348 = vpop.f32.mrf.mxu0
    %v3349 = vadd.f32 %v3300, %v3348
    %v3350 = vpop.f32.mrf.mxu0
    %v3351 = vadd.f32 %v3302, %v3350
    %3352 = vdwg.mxu0
    %3353 = vmatpush.bf16.msra.mxu0 %v2945
    %3354 = vmatpush.bf16.msra.mxu0 %v2943
    %3355 = vmatpush.bf16.msra.mxu0 %v2941
    %3356 = vmatpush.bf16.msra.mxu0 %v2939
    %3357 = vmatpush.bf16.msra.mxu0 %v2937
    %3358 = vmatpush.bf16.msra.mxu0 %v2935
    %3359 = vmatpush.bf16.msra.mxu0 %v2933
    %3360 = vmatpush.bf16.msra.mxu0 %v2931
    %3361 = vmatmul.bf16.gmra.mxu0 %v2591
    %v3362 = vpop.f32.mrf.mxu0
    %v3363 = vadd.f32 %v3314, %v3362
    %v3364 = vpop.f32.mrf.mxu0
    %v3365 = vadd.f32 %v3316, %v3364
    %3366 = vmatmul.bf16.gmra.mxu0 %v2595
    %v3367 = vpop.f32.mrf.mxu0
    %v3368 = vadd.f32 %v3319, %v3367
    %v3369 = vpop.f32.mrf.mxu0
    %v3370 = vadd.f32 %v3321, %v3369
    %3371 = vmatmul.bf16.gmra.mxu0 %v2599
    %v3372 = vpop.f32.mrf.mxu0
    %v3373 = vadd.f32 %v3324, %v3372
    %v3374 = vpop.f32.mrf.mxu0
    %v3375 = vadd.f32 %v3326, %v3374
    %3376 = vmatmul.bf16.gmra.mxu0 %v2603
    %v3377 = vpop.f32.mrf.mxu0
    %v3378 = vadd.f32 %v3329, %v3377
    %v3379 = vpop.f32.mrf.mxu0
    %v3380 = vadd.f32 %v3331, %v3379
    %3381 = vmatmul.bf16.gmra.mxu0 %v2607
    %v3382 = vpop.f32.mrf.mxu0
    %v3383 = vadd.f32 %v3334, %v3382
    %v3384 = vpop.f32.mrf.mxu0
    %v3385 = vadd.f32 %v3336, %v3384
    %3386 = vmatmul.bf16.gmra.mxu0 %v2611
    %v3387 = vpop.f32.mrf.mxu0
    %v3388 = vadd.f32 %v3339, %v3387
    %v3389 = vpop.f32.mrf.mxu0
    %v3390 = vadd.f32 %v3341, %v3389
    %3391 = vmatmul.bf16.gmra.mxu0 %v2615
    %v3392 = vpop.f32.mrf.mxu0
    %v3393 = vadd.f32 %v3344, %v3392
    %v3394 = vpop.f32.mrf.mxu0
    %v3395 = vadd.f32 %v3346, %v3394
    %3396 = vmatmul.bf16.gmra.mxu0 %v2619
    %v3397 = vpop.f32.mrf.mxu0
    %v3398 = vadd.f32 %v3349, %v3397
    %v3399 = vpop.f32.mrf.mxu0
    %v3400 = vadd.f32 %v3351, %v3399
    %3401 = vdwg.mxu0
    %v3402 = vmax.f32 %v3167, 0.0
    %v3403 = vmax.f32 %v3363, 0.0
    %v3404 = vmax.f32 %v3169, 0.0
    %v3405 = vmax.f32 %v3365, 0.0
    %v3406 = vmax.f32 %v3172, 0.0
    %v3407 = vmax.f32 %v3368, 0.0
    %v3408 = vmax.f32 %v3174, 0.0
    %v3409 = vmax.f32 %v3370, 0.0
    %v3410 = vmax.f32 %v3177, 0.0
    %v3411 = vmax.f32 %v3373, 0.0
    %v3412 = vmax.f32 %v3179, 0.0
    %v3413 = vmax.f32 %v3375, 0.0
    %v3414 = vmax.f32 %v3182, 0.0
    %v3415 = vmax.f32 %v3378, 0.0
    %v3416 = vmax.f32 %v3184, 0.0
    %v3417 = vmax.f32 %v3380, 0.0
    %v3418 = vmax.f32 %v3187, 0.0
    %v3419 = vmax.f32 %v3383, 0.0
    %v3420 = vmax.f32 %v3189, 0.0
    %v3421 = vmax.f32 %v3385, 0.0
    %v3422 = vmax.f32 %v3192, 0.0
    %v3423 = vmax.f32 %v3388, 0.0
    %v3424 = vmax.f32 %v3194, 0.0
    %v3425 = vmax.f32 %v3390, 0.0
    %v3426 = vmax.f32 %v3197, 0.0
    %v3427 = vmax.f32 %v3393, 0.0
    %v3428 = vmax.f32 %v3199, 0.0
    %v3429 = vmax.f32 %v3395, 0.0
    %v3430 = vmax.f32 %v3202, 0.0
    %v3431 = vmax.f32 %v3398, 0.0
    %v3432 = vmax.f32 %v3204, 0.0
    %v3433 = vmax.f32 %v3400, 0.0
    %v3434 = vpack.c.bf16 %v3404, %v3402
    %v3435 = vpack.c.bf16 %v3405, %v3403
    %v3436 = vpack.c.bf16 %v3408, %v3406
    %v3437 = vpack.c.bf16 %v3409, %v3407
    %v3438 = vpack.c.bf16 %v3412, %v3410
    %v3439 = vpack.c.bf16 %v3413, %v3411
    %v3440 = vpack.c.bf16 %v3416, %v3414
    %v3441 = vpack.c.bf16 %v3417, %v3415
    %v3442 = vpack.c.bf16 %v3420, %v3418
    %v3443 = vpack.c.bf16 %v3421, %v3419
    %v3444 = vpack.c.bf16 %v3424, %v3422
    %v3445 = vpack.c.bf16 %v3425, %v3423
    %v3446 = vpack.c.bf16 %v3428, %v3426
    %v3447 = vpack.c.bf16 %v3429, %v3427
    %v3448 = vpack.c.bf16 %v3432, %v3430
    %v3449 = vpack.c.bf16 %v3433, %v3431
    %v3450 = vld [vmem:[%s5] sm:$0xf]
    %v3451 = vld [vmem:[%s5 + $0x4] sm:$0xf]
    %v3452 = vld [vmem:[%s5 + $0x8] sm:$0xf]
    %v3453 = vld [vmem:[%s5 + $0xc] sm:$0xf]
    %v3454 = vld [vmem:[%s5 + $0x10] sm:$0xf]
    %v3455 = vld [vmem:[%s5 + $0x14] sm:$0xf]
    %v3456 = vld [vmem:[%s5 + $0x18] sm:$0xf]
    %v3457 = vld [vmem:[%s5 + $0x1c] sm:$0xf]
    %v3458 = vld [vmem:[%s5 + $0x20] sm:$0xf]
    %v3459 = vld [vmem:[%s5 + $0x24] sm:$0xf]
    %v3460 = vld [vmem:[%s5 + $0x28] sm:$0xf]
    %v3461 = vld [vmem:[%s5 + $0x2c] sm:$0xf]
    %v3462 = vld [vmem:[%s5 + $0x30] sm:$0xf]
    %v3463 = vld [vmem:[%s5 + $0x34] sm:$0xf]
    %v3464 = vld [vmem:[%s5 + $0x38] sm:$0xf]
    %v3465 = vld [vmem:[%s5 + $0x3c] sm:$0xf]
    %v3466 = vld [vmem:[%s5 + $0x40] sm:$0xf]
    %v3467 = vld [vmem:[%s5 + $0x44] sm:$0xf]
    %v3468 = vld [vmem:[%s5 + $0x48] sm:$0xf]
    %v3469 = vld [vmem:[%s5 + $0x4c] sm:$0xf]
    %v3470 = vld [vmem:[%s5 + $0x50] sm:$0xf]
    %v3471 = vld [vmem:[%s5 + $0x54] sm:$0xf]
    %v3472 = vld [vmem:[%s5 + $0x58] sm:$0xf]
    %v3473 = vld [vmem:[%s5 + $0x5c] sm:$0xf]
    %v3474 = vld [vmem:[%s5 + $0x60] sm:$0xf]
    %v3475 = vld [vmem:[%s5 + $0x64] sm:$0xf]
    %v3476 = vld [vmem:[%s5 + $0x68] sm:$0xf]
    %v3477 = vld [vmem:[%s5 + $0x6c] sm:$0xf]
    %v3478 = vld [vmem:[%s5 + $0x70] sm:$0xf]
    %v3479 = vld [vmem:[%s5 + $0x74] sm:$0xf]
    %v3480 = vld [vmem:[%s5 + $0x78] sm:$0xf]
    %v3481 = vld [vmem:[%s5 + $0x7c] sm:$0xf]
    %v3482 = vld [vmem:[%s6] sm:$0x1]
    %v3484 = vperm.slane %v3482, 0
    %v3518 = vunpack.c.l.b16 %v3450
    %v3519 = vunpack.c.l.b16 %v3451
    %v3520 = vunpack.c.l.b16 %v3452
    %v3521 = vunpack.c.l.b16 %v3453
    %v3522 = vunpack.c.l.b16 %v3454
    %v3523 = vunpack.c.l.b16 %v3455
    %v3524 = vunpack.c.l.b16 %v3456
    %v3525 = vunpack.c.l.b16 %v3457
    %v3526 = vunpack.c.l.b16 %v3458
    %v3527 = vunpack.c.l.b16 %v3459
    %v3528 = vunpack.c.l.b16 %v3460
    %v3529 = vunpack.c.l.b16 %v3461
    %v3530 = vunpack.c.l.b16 %v3462
    %v3531 = vunpack.c.l.b16 %v3463
    %v3532 = vunpack.c.l.b16 %v3464
    %v3533 = vunpack.c.l.b16 %v3465
    %v3534 = vunpack.c.l.b16 %v3466
    %v3535 = vunpack.c.l.b16 %v3467
    %v3536 = vunpack.c.l.b16 %v3468
    %v3537 = vunpack.c.l.b16 %v3469
    %v3538 = vunpack.c.l.b16 %v3470
    %v3539 = vunpack.c.l.b16 %v3471
    %v3540 = vunpack.c.l.b16 %v3472
    %v3541 = vunpack.c.l.b16 %v3473
    %v3542 = vunpack.c.l.b16 %v3474
    %v3543 = vunpack.c.l.b16 %v3475
    %v3544 = vunpack.c.l.b16 %v3476
    %v3545 = vunpack.c.l.b16 %v3477
    %v3546 = vunpack.c.l.b16 %v3478
    %v3547 = vunpack.c.l.b16 %v3479
    %v3548 = vunpack.c.l.b16 %v3480
    %v3549 = vunpack.c.l.b16 %v3481
    %v3550 = vpack.c.b16 %v3519, %v3518
    %v3551 = vpack.c.b16 %v3521, %v3520
    %v3552 = vpack.c.b16 %v3523, %v3522
    %v3553 = vpack.c.b16 %v3525, %v3524
    %v3554 = vpack.c.b16 %v3527, %v3526
    %v3555 = vpack.c.b16 %v3529, %v3528
    %v3556 = vpack.c.b16 %v3531, %v3530
    %v3557 = vpack.c.b16 %v3533, %v3532
    %v3558 = vpack.c.b16 %v3535, %v3534
    %v3559 = vpack.c.b16 %v3537, %v3536
    %v3560 = vpack.c.b16 %v3539, %v3538
    %v3561 = vpack.c.b16 %v3541, %v3540
    %v3562 = vpack.c.b16 %v3543, %v3542
    %v3563 = vpack.c.b16 %v3545, %v3544
    %v3564 = vpack.c.b16 %v3547, %v3546
    %v3565 = vpack.c.b16 %v3549, %v3548
    %3582 = vmatpush.bf16.msra.mxu0 %v3557
    %3583 = vmatpush.bf16.msra.mxu0 %v3556
    %3584 = vmatpush.bf16.msra.mxu0 %v3555
    %3585 = vmatpush.bf16.msra.mxu0 %v3554
    %3586 = vmatpush.bf16.msra.mxu0 %v3553
    %3587 = vmatpush.bf16.msra.mxu0 %v3552
    %3588 = vmatpush.bf16.msra.mxu0 %v3551
    %3589 = vmatpush.bf16.msra.mxu0 %v3550
    %3590 = vmatmul.bf16.gmra.mxu0 %v3434
    %v3591 = vpop.f32.mrf.mxu0
    %v3592 = vadd.f32 %v3484, %v3591
    %v3593 = vpop.f32.mrf.mxu0
    %v3594 = vadd.f32 %v3484, %v3593
    %3595 = vmatmul.bf16.gmra.mxu0 %v3436
    %v3596 = vpop.f32.mrf.mxu0
    %v3597 = vadd.f32 %v3484, %v3596
    %v3598 = vpop.f32.mrf.mxu0
    %v3599 = vadd.f32 %v3484, %v3598
    %3600 = vmatmul.bf16.gmra.mxu0 %v3438
    %v3601 = vpop.f32.mrf.mxu0
    %v3602 = vadd.f32 %v3484, %v3601
    %v3603 = vpop.f32.mrf.mxu0
    %v3604 = vadd.f32 %v3484, %v3603
    %3605 = vmatmul.bf16.gmra.mxu0 %v3440
    %v3606 = vpop.f32.mrf.mxu0
    %v3607 = vadd.f32 %v3484, %v3606
    %v3608 = vpop.f32.mrf.mxu0
    %v3609 = vadd.f32 %v3484, %v3608
    %3610 = vmatmul.bf16.gmra.mxu0 %v3442
    %v3611 = vpop.f32.mrf.mxu0
    %v3612 = vadd.f32 %v3484, %v3611
    %v3613 = vpop.f32.mrf.mxu0
    %v3614 = vadd.f32 %v3484, %v3613
    %3615 = vmatmul.bf16.gmra.mxu0 %v3444
    %v3616 = vpop.f32.mrf.mxu0
    %v3617 = vadd.f32 %v3484, %v3616
    %v3618 = vpop.f32.mrf.mxu0
    %v3619 = vadd.f32 %v3484, %v3618
    %3620 = vmatmul.bf16.gmra.mxu0 %v3446
    %v3621 = vpop.f32.mrf.mxu0
    %v3622 = vadd.f32 %v3484, %v3621
    %v3623 = vpop.f32.mrf.mxu0
    %v3624 = vadd.f32 %v3484, %v3623
    %3625 = vmatmul.bf16.gmra.mxu0 %v3448
    %v3626 = vpop.f32.mrf.mxu0
    %v3627 = vadd.f32 %v3484, %v3626
    %v3628 = vpop.f32.mrf.mxu0
    %v3629 = vadd.f32 %v3484, %v3628
    %3630 = vdwg.mxu0
    %3631 = vmatpush.bf16.msra.mxu0 %v3565
    %3632 = vmatpush.bf16.msra.mxu0 %v3564
    %3633 = vmatpush.bf16.msra.mxu0 %v3563
    %3634 = vmatpush.bf16.msra.mxu0 %v3562
    %3635 = vmatpush.bf16.msra.mxu0 %v3561
    %3636 = vmatpush.bf16.msra.mxu0 %v3560
    %3637 = vmatpush.bf16.msra.mxu0 %v3559
    %3638 = vmatpush.bf16.msra.mxu0 %v3558
    %3639 = vmatmul.bf16.gmra.mxu0 %v3435
    %v3640 = vpop.f32.mrf.mxu0
    %v3641 = vadd.f32 %v3592, %v3640
    %v3642 = vpop.f32.mrf.mxu0
    %v3643 = vadd.f32 %v3594, %v3642
    %3644 = vmatmul.bf16.gmra.mxu0 %v3437
    %v3645 = vpop.f32.mrf.mxu0
    %v3646 = vadd.f32 %v3597, %v3645
    %v3647 = vpop.f32.mrf.mxu0
    %v3648 = vadd.f32 %v3599, %v3647
    %3649 = vmatmul.bf16.gmra.mxu0 %v3439
    %v3650 = vpop.f32.mrf.mxu0
    %v3651 = vadd.f32 %v3602, %v3650
    %v3652 = vpop.f32.mrf.mxu0
    %v3653 = vadd.f32 %v3604, %v3652
    %3654 = vmatmul.bf16.gmra.mxu0 %v3441
    %v3655 = vpop.f32.mrf.mxu0
    %v3656 = vadd.f32 %v3607, %v3655
    %v3657 = vpop.f32.mrf.mxu0
    %v3658 = vadd.f32 %v3609, %v3657
    %3659 = vmatmul.bf16.gmra.mxu0 %v3443
    %v3660 = vpop.f32.mrf.mxu0
    %v3661 = vadd.f32 %v3612, %v3660
    %v3662 = vpop.f32.mrf.mxu0
    %v3663 = vadd.f32 %v3614, %v3662
    %3664 = vmatmul.bf16.gmra.mxu0 %v3445
    %v3665 = vpop.f32.mrf.mxu0
    %v3666 = vadd.f32 %v3617, %v3665
    %v3667 = vpop.f32.mrf.mxu0
    %v3668 = vadd.f32 %v3619, %v3667
    %3669 = vmatmul.bf16.gmra.mxu0 %v3447
    %v3670 = vpop.f32.mrf.mxu0
    %v3671 = vadd.f32 %v3622, %v3670
    %v3672 = vpop.f32.mrf.mxu0
    %v3673 = vadd.f32 %v3624, %v3672
    %3674 = vmatmul.bf16.gmra.mxu0 %v3449
    %v3675 = vpop.f32.mrf.mxu0
    %v3676 = vadd.f32 %v3627, %v3675
    %v3677 = vpop.f32.mrf.mxu0
    %v3678 = vadd.f32 %v3629, %v3677
    %3679 = vdwg.mxu0
    %3680 = vxpose.xlu0.b32.start [1/16] %v3641, 128
    %3681 = vxpose.xlu0.b32.cont [2/16] %v3643, 128
    %3682 = vxpose.xlu0.b32.cont [3/16] %v3646, 128
    %3683 = vxpose.xlu0.b32.cont [4/16] %v3648, 128
    %3684 = vxpose.xlu0.b32.cont [5/16] %v3651, 128
    %3685 = vxpose.xlu0.b32.cont [6/16] %v3653, 128
    %3686 = vxpose.xlu0.b32.cont [7/16] %v3656, 128
    %3687 = vxpose.xlu0.b32.cont [8/16] %v3658, 128
    %3688 = vxpose.xlu0.b32.cont [9/16] %v3661, 128
    %3689 = vxpose.xlu0.b32.cont [10/16] %v3663, 128
    %3690 = vxpose.xlu0.b32.cont [11/16] %v3666, 128
    %3691 = vxpose.xlu0.b32.cont [12/16] %v3668, 128
    %3692 = vxpose.xlu0.b32.cont [13/16] %v3671, 128
    %3693 = vxpose.xlu0.b32.cont [14/16] %v3673, 128
    %3694 = vxpose.xlu0.b32.cont [15/16] %v3676, 128
    %3695 = vxpose.xlu0.b32.end [16/16] %v3678, 128
    %v3696 = vpop.trf.xlu0
    %v3697 = vpop.trf.xlu0
    %v3698 = vpop.trf.xlu0
    %v3699 = vpop.trf.xlu0
    %v3700 = vpop.trf.xlu0
    %v3701 = vpop.trf.xlu0
    %v3702 = vpop.trf.xlu0
    %v3703 = vpop.trf.xlu0
    %v3704 = vpop.trf.xlu0
    %v3705 = vpop.trf.xlu0
    %v3706 = vpop.trf.xlu0
    %v3707 = vpop.trf.xlu0
    %v3708 = vpop.trf.xlu0
    %v3709 = vpop.trf.xlu0
    %v3710 = vpop.trf.xlu0
    %v3711 = vpop.trf.xlu0
    %3712 = vst [vmem:[%s7] sm:$0x1] %v3696
    // Predicated region
    $region34: #{regression_model_forward.1} parent=1 // pred_check
      _
    $region35: #{regression_model_forward.1} parent=1 // pred_check_branch
      %3714 = sbr.rel (0) target = $region37
    $region36: #{regression_model_forward.1} parent=1 // pred_region
      _
    $region37: #{regression_model_forward.1} parent=1 // pred_fallthru
      _
    // Predicated region
    $region38: #{regression_model_forward.1} parent=1 // pred_check
      _
    $region39: #{regression_model_forward.1} parent=1 // pred_check_branch
      %3716 = sbr.rel (0) target = $region41
    $region40: #{regression_model_forward.1} parent=1 // pred_region
      _
    $region41: #{regression_model_forward.1} parent=1 // pred_fallthru
      _
    %3717 = vsyncpa [#allocation3], 1

</llo_original>
